<compile_context>
chip_gen: v7x
topology: tpu7x:2x2x1
jax: 0.10.0
libtpu: 0.0.40
codegen_flags: <defaults>
</compile_context>

<pallas_src>
import jax
import jax.numpy as jnp
from jax.experimental import pallas as pl
from jax.experimental.pallas import tpu as pltpu


# ---------------------------------------------------------------------------
# Fused forward kernel (one batch tile per grid step); activations are (features x batch)
# ---------------------------------------------------------------------------
def _lenet_kernel(x_ref, w1p_ref, b1p_ref, s1a_ref, s1b_ref,
                  w2p_ref, b2p_ref, s2a_ref, s2b_ref,
                  fw1_ref, fb1_ref, fw2_ref, fb2_ref, fw3_ref, fb3_ref,
                  o_ref, z1_ref, z2_ref):
    f32 = jnp.float32
    bf16 = jnp.bfloat16

    w1p = w1p_ref[...]          # (288, 168) bf16  conv1 band matrix (two conv rows/step)
    b1p = b1p_ref[...]          # (288, 1)   f32
    s1a = s1a_ref[...]          # (72, 144)  bf16  pool1 even-column selector (one-hot rows)
    s1b = s1b_ref[...]          # (72, 144)  bf16  pool1 odd-column selector

    # ---- conv1 (1->6, 5x5) + ReLU + 2x2 maxpool: one pooled output row per iteration ----
    def conv1_step(ip, carry):
        r0 = pl.multiple_of(ip * 56, 8)                      # image rows 2ip .. 2ip+5
        xs = x_ref[pl.ds(r0, 168), :].astype(bf16)           # (168, tb)
        pair = jnp.dot(w1p, xs, preferred_element_type=f32) + b1p
        pair = jnp.maximum(pair, 0.0)                        # rows (di, oc, j)
        # row-pool first (elementwise max of the two conv rows), then 2 selector matmuls
        m = jnp.maximum(pair[:144, :], pair[144:, :]).astype(bf16)
        blk = jnp.maximum(jnp.dot(s1a, m, preferred_element_type=f32),
                          jnp.dot(s1b, m, preferred_element_type=f32))
        z1_ref[pl.ds(pl.multiple_of(ip * 72, 8), 72), :] = blk   # rows (i2=ip, ic, j2)
        return carry

    jax.lax.fori_loop(0, 12, conv1_step, 0)

    w2p = w2p_ref[...]          # (256, 432) bf16  conv2 band matrix (two conv rows/step)
    b2p = b2p_ref[...]          # (256, 1)   f32
    s2a = s2a_ref[...]          # (64, 128)  bf16
    s2b = s2b_ref[...]          # (64, 128)  bf16

    # ---- conv2 (6->16, 5x5) + ReLU + 2x2 maxpool: one pooled row per step (unrolled x4) ----
    for ip in range(4):                                      # short fixed loop: keep unrolled
        zin = z1_ref[144 * ip: 144 * ip + 432, :].astype(bf16)   # pooled rows 2ip..2ip+5
        pair = jnp.dot(w2p, zin, preferred_element_type=f32) + b2p
        pair = jnp.maximum(pair, 0.0)                        # rows (di, oc, j)
        m = jnp.maximum(pair[:128, :], pair[128:, :]).astype(bf16)
        blk = jnp.maximum(jnp.dot(s2a, m, preferred_element_type=f32),
                          jnp.dot(s2b, m, preferred_element_type=f32))
        z2_ref[64 * ip: 64 * ip + 64, :] = blk               # rows (i2=ip, oc, j2)

    # ---- fc1 + ReLU, fc2 + ReLU, fc3 (weights VMEM resident, bf16 MXU operands) ----
    z2 = z2_ref[...].astype(bf16)                            # (256, tb)
    h = jnp.dot(fw1_ref[...], z2, preferred_element_type=f32) + fb1_ref[...]
    h = jnp.maximum(h, 0.0).astype(bf16)
    h = jnp.dot(fw2_ref[...], h, preferred_element_type=f32) + fb2_ref[...]
    h = jnp.maximum(h, 0.0).astype(bf16)
    h = jnp.dot(fw3_ref[...], h, preferred_element_type=f32) + fb3_ref[...]
    o_ref[...] = h.astype(o_ref.dtype)                       # (10, tb): lane-dense store


# ---------------------------------------------------------------------------
# Weight repacking (pure JAX, done once per forward; preserves PyTorch semantics)
# ---------------------------------------------------------------------------
def _prep_params(params):
    (w1, b1, w2, b2, fw1, fb1, fw2, fb2, fw3, fb3) = params
    f32 = jnp.float32
    bf16 = jnp.bfloat16

    # conv1 band matrix: produces two consecutive conv-output rows (di = 0, 1) at once.
    # rows: di*144 + oc*24 + j ; cols: (di + ki)*28 + (j + kj)   (168 = 6 image rows * 28)
    w1s = w1.reshape(6, 5, 5).astype(f32)
    di = jnp.arange(2)[:, None, None, None]
    ki = jnp.arange(5)[None, :, None, None]
    jj = jnp.arange(24)[None, None, :, None]
    kj = jnp.arange(5)[None, None, None, :]
    col1 = (di + ki) * 28 + jj + kj                                  # (2, 5, 24, 5)
    onehot1 = (jnp.arange(168) == col1[..., None]).astype(f32)       # (2, 5, 24, 5, 168)
    w1pair = jnp.einsum('okl,dkjlc->dojc', w1s, onehot1).reshape(288, 168).astype(bf16)
    b1pair = jnp.tile(jnp.repeat(b1.astype(f32), 24), 2).reshape(288, 1)

    # conv2 band matrix: produces two consecutive conv-output rows (16 ch x 8 cols each).
    # rows: di*128 + oc*8 + j ; cols: (di + ki)*72 + ic*12 + (j + kj)  (432 = 6 pool1 rows * 72)
    di2 = jnp.arange(2)[:, None, None, None, None]
    ki2 = jnp.arange(5)[None, :, None, None, None]
    ic2 = jnp.arange(6)[None, None, :, None, None]
    jj2 = jnp.arange(8)[None, None, None, :, None]
    kj2 = jnp.arange(5)[None, None, None, None, :]
    col2 = (di2 + ki2) * 72 + ic2 * 12 + jj2 + kj2                   # (2, 5, 6, 8, 5)
    onehot2 = (jnp.arange(432) == col2[..., None]).astype(f32)       # (2, 5, 6, 8, 5, 432)
    w2pair = jnp.einsum('oikl,dkijlc->dojc', w2.astype(f32), onehot2)
    w2pair = w2pair.reshape(256, 432).astype(bf16)
    b2pair = jnp.tile(jnp.repeat(b2.astype(f32), 8), 2).reshape(256, 1)

    # 2x2 max-pool column selectors (0/1 one-hot rows — exact in bf16).  Row pooling is
    # done by the elementwise max of the two conv rows computed in the same step.
    r1 = jnp.arange(72)
    s1a = (jnp.arange(144) == ((r1 // 12) * 24 + 2 * (r1 % 12))[:, None]).astype(bf16)
    s1b = (jnp.arange(144) == ((r1 // 12) * 24 + 2 * (r1 % 12) + 1)[:, None]).astype(bf16)
    r2 = jnp.arange(64)
    s2a = (jnp.arange(128) == ((r2 // 4) * 8 + 2 * (r2 % 4))[:, None]).astype(bf16)
    s2b = (jnp.arange(128) == ((r2 // 4) * 8 + 2 * (r2 % 4) + 1)[:, None]).astype(bf16)

    # fc1: permute columns from torch flatten order (c, i2, j2) to the kernel's
    # activation row order (i2, c, j2).
    fw1p = (fw1.astype(f32).reshape(120, 16, 4, 4).transpose(0, 2, 1, 3)
            .reshape(120, 256).astype(bf16))

    return (w1pair, b1pair, s1a, s1b, w2pair, b2pair, s2a, s2b,
            fw1p, fb1.astype(f32).reshape(120, 1),
            fw2.astype(bf16), fb2.astype(f32).reshape(84, 1),
            fw3.astype(bf16), fb3.astype(f32).reshape(10, 1))


# ---------------------------------------------------------------------------
# Forward wrapper
# ---------------------------------------------------------------------------
def lenet_forward(x, params):
    """x: (B, 1, 28, 28) float32 (PyTorch NCHW). Returns (B, 10) logits."""
    B = x.shape[0]
    # Pre-transpose: pixels on sublanes, batch on lanes (no in-kernel transpose).
    xt = x.reshape(B, 28 * 28).astype(jnp.float32).T            # (784, B)
    weights = _prep_params(params)

    if B <= 256:
        tb = B                                # single tile: block == full array
        bp = B
    else:
        tb = 256                              # multiple of 128 -> lane-aligned tiling
        pad = (-B) % tb
        if pad:
            xt = jnp.concatenate([xt, jnp.zeros((784, pad), jnp.float32)], axis=1)
        bp = B + pad
    grid = (bp // tb,)

    in_specs = [pl.BlockSpec((784, tb), lambda t: (0, t))]
    in_specs += [pl.BlockSpec(w.shape, lambda t: (0, 0)) for w in weights]

    out_t = pl.pallas_call(
        _lenet_kernel,
        grid=grid,
        in_specs=in_specs,
        out_specs=pl.BlockSpec((10, tb), lambda t: (0, t)),     # lane-dense output slab
        out_shape=jax.ShapeDtypeStruct((10, bp), jnp.float32),
        scratch_shapes=[pltpu.VMEM((864, tb), jnp.float32),     # pool1 output (i2, ic, j2)
                        pltpu.VMEM((256, tb), jnp.float32)],    # pool2 output (i2, oc, j2)
        compiler_params=pltpu.CompilerParams(
            dimension_semantics=("parallel",)),
    )(xt, *weights)
    return out_t.T[:B]


# ---------------------------------------------------------------------------
# Parameter init (mirrors PyTorch default U(-1/sqrt(fan_in), +1/sqrt(fan_in)))
# ---------------------------------------------------------------------------
def init_params(key):
    def u(k, shape, fan_in):
        bound = 1.0 / float(fan_in) ** 0.5
        return jax.random.uniform(k, shape, jnp.float32, -bound, bound)

    ks = jax.random.split(key, 10)
    w1 = u(ks[0], (6, 1, 5, 5), 25);    b1 = u(ks[1], (6,), 25)
    w2 = u(ks[2], (16, 6, 5, 5), 150);  b2 = u(ks[3], (16,), 150)
    fw1 = u(ks[4], (120, 256), 256);    fb1 = u(ks[5], (120,), 256)
    fw2 = u(ks[6], (84, 120), 120);     fb2 = u(ks[7], (84,), 120)
    fw3 = u(ks[8], (10, 84), 84);       fb3 = u(ks[9], (10,), 84)
    return (w1, b1, w2, b2, fw1, fb1, fw2, fb2, fw3, fb3)


if __name__ == "__main__":
    key = jax.random.PRNGKey(0)
    k_x, k_p = jax.random.split(key)
    params = init_params(k_p)
    # Spatial size must be 28x28 so fc1's 16*4*4 input dim works out.
    x = jax.random.normal(k_x, (2, 1, 28, 28), dtype=jnp.float32)

    out = jax.jit(lenet_forward)(x, params)
    out = jax.block_until_ready(out)
    assert out.shape == (2, 10) and out.dtype == jnp.float32
    assert bool(jnp.all(jnp.isfinite(out)))
    print("KERNEL_OK")
</pallas_src>

<mosaic_0001>
module attributes {stable_mosaic.version = 11 : i64} {
  func.func @_lenet_kernel(%arg0: i32, %arg1: memref<784x2xf32, #tpu.memory_space<vmem>>, %arg2: memref<288x168xbf16, #tpu.memory_space<vmem>>, %arg3: memref<288x1xf32, #tpu.memory_space<vmem>>, %arg4: memref<72x144xbf16, #tpu.memory_space<vmem>>, %arg5: memref<72x144xbf16, #tpu.memory_space<vmem>>, %arg6: memref<256x432xbf16, #tpu.memory_space<vmem>>, %arg7: memref<256x1xf32, #tpu.memory_space<vmem>>, %arg8: memref<64x128xbf16, #tpu.memory_space<vmem>>, %arg9: memref<64x128xbf16, #tpu.memory_space<vmem>>, %arg10: memref<120x256xbf16, #tpu.memory_space<vmem>>, %arg11: memref<120x1xf32, #tpu.memory_space<vmem>>, %arg12: memref<84x120xbf16, #tpu.memory_space<vmem>>, %arg13: memref<84x1xf32, #tpu.memory_space<vmem>>, %arg14: memref<10x84xbf16, #tpu.memory_space<vmem>>, %arg15: memref<10x1xf32, #tpu.memory_space<vmem>>, %arg16: memref<10x2xf32, #tpu.memory_space<vmem>>, %arg17: memref<864x2xf32, #tpu.memory_space<vmem>>, %arg18: memref<256x2xf32, #tpu.memory_space<vmem>>) attributes {dimension_semantics = [#tpu.dimension_semantics<parallel>], iteration_bounds = array<i64: 1>, scalar_prefetch = 0 : i64, scratch_operands = 2 : i64, tpu.core_type = #tpu.core_type<tc>, window_params = [{transform_indices = @transform_0, window_bounds = array<i64: 784, 2>}, {pipeline_mode = #tpu.pipeline_mode<synchronous>, transform_indices = @transform_1, window_bounds = array<i64: 288, 168>}, {pipeline_mode = #tpu.pipeline_mode<synchronous>, transform_indices = @transform_2, window_bounds = array<i64: 288, 1>}, {pipeline_mode = #tpu.pipeline_mode<synchronous>, transform_indices = @transform_3, window_bounds = array<i64: 72, 144>}, {pipeline_mode = #tpu.pipeline_mode<synchronous>, transform_indices = @transform_4, window_bounds = array<i64: 72, 144>}, {pipeline_mode = #tpu.pipeline_mode<synchronous>, transform_indices = @transform_5, window_bounds = array<i64: 256, 432>}, {pipeline_mode = #tpu.pipeline_mode<synchronous>, transform_indices = @transform_6, window_bounds = array<i64: 256, 1>}, {pipeline_mode = #tpu.pipeline_mode<synchronous>, transform_indices = @transform_7, window_bounds = array<i64: 64, 128>}, {pipeline_mode = #tpu.pipeline_mode<synchronous>, transform_indices = @transform_8, window_bounds = array<i64: 64, 128>}, {pipeline_mode = #tpu.pipeline_mode<synchronous>, transform_indices = @transform_9, window_bounds = array<i64: 120, 256>}, {pipeline_mode = #tpu.pipeline_mode<synchronous>, transform_indices = @transform_10, window_bounds = array<i64: 120, 1>}, {pipeline_mode = #tpu.pipeline_mode<synchronous>, transform_indices = @transform_11, window_bounds = array<i64: 84, 120>}, {pipeline_mode = #tpu.pipeline_mode<synchronous>, transform_indices = @transform_12, window_bounds = array<i64: 84, 1>}, {pipeline_mode = #tpu.pipeline_mode<synchronous>, transform_indices = @transform_13, window_bounds = array<i64: 10, 84>}, {pipeline_mode = #tpu.pipeline_mode<synchronous>, transform_indices = @transform_14, window_bounds = array<i64: 10, 1>}, {transform_indices = @transform_15, window_bounds = array<i64: 10, 2>}]} {
    %c0 = arith.constant 0 : index
    %c0_0 = arith.constant 0 : index
    %0 = vector.load %arg2[%c0, %c0_0] : memref<288x168xbf16, #tpu.memory_space<vmem>>, vector<288x168xbf16>
    %c0_1 = arith.constant 0 : index
    %c0_2 = arith.constant 0 : index
    %1 = vector.load %arg3[%c0_1, %c0_2] : memref<288x1xf32, #tpu.memory_space<vmem>>, vector<288x1xf32>
    %c0_3 = arith.constant 0 : index
    %c0_4 = arith.constant 0 : index
    %2 = vector.load %arg4[%c0_3, %c0_4] : memref<72x144xbf16, #tpu.memory_space<vmem>>, vector<72x144xbf16>
    %c0_5 = arith.constant 0 : index
    %c0_6 = arith.constant 0 : index
    %3 = vector.load %arg5[%c0_5, %c0_6] : memref<72x144xbf16, #tpu.memory_space<vmem>>, vector<72x144xbf16>
    %c0_i32 = arith.constant 0 : i32
    %c12_i32 = arith.constant 12 : i32
    %4 = arith.addi %c0_i32, %c12_i32 : i32
    %c1_i32 = arith.constant 1 : i32
    scf.for %arg19 = %c0_i32 to %4 step %c1_i32  : i32 {
      %c56_i32 = arith.constant 56 : i32
      %93 = arith.muli %arg19, %c56_i32 : i32
      %94 = tpu.assume_multiple %93, 8 : i32
      %95 = arith.index_cast %94 : i32 to index
      %c0_62 = arith.constant 0 : index
      %96 = vector.load %arg1[%95, %c0_62] : memref<784x2xf32, #tpu.memory_space<vmem>>, vector<168x2xf32>
      %97 = arith.truncf %96 : vector<168x2xf32> to vector<168x2xbf16>
      %cst_63 = arith.constant dense<0.000000e+00> : vector<288x2xf32>
      %98 = tpu.matmul %0, %97, %cst_63 {dimension_numbers = #tpu.dot_dimension_numbers<[1], [0], [0], [1], [0, 0, 1, 1], [], []>} : vector<288x168xbf16>, vector<168x2xbf16>, vector<288x2xf32> -> vector<288x2xf32>
      %99 = vector.broadcast %1 : vector<288x1xf32> to vector<288x2xf32>
      %100 = arith.addf %98, %99 : vector<288x2xf32>
      %cst_64 = arith.constant 0.000000e+00 : f32
      %101 = vector.broadcast %cst_64 : f32 to vector<288x2xf32>
      %102 = arith.maximumf %100, %101 : vector<288x2xf32>
      %103 = vector.extract_strided_slice %102 {offsets = [0, 0], sizes = [144, 2], strides = [1, 1]} : vector<288x2xf32> to vector<144x2xf32>
      %104 = vector.extract_strided_slice %102 {offsets = [144, 0], sizes = [144, 2], strides = [1, 1]} : vector<288x2xf32> to vector<144x2xf32>
      %105 = arith.maximumf %103, %104 : vector<144x2xf32>
      %106 = arith.truncf %105 : vector<144x2xf32> to vector<144x2xbf16>
      %cst_65 = arith.constant dense<0.000000e+00> : vector<72x2xf32>
      %107 = tpu.matmul %2, %106, %cst_65 {dimension_numbers = #tpu.dot_dimension_numbers<[1], [0], [0], [1], [0, 0, 1, 1], [], []>} : vector<72x144xbf16>, vector<144x2xbf16>, vector<72x2xf32> -> vector<72x2xf32>
      %cst_66 = arith.constant dense<0.000000e+00> : vector<72x2xf32>
      %108 = tpu.matmul %3, %106, %cst_66 {dimension_numbers = #tpu.dot_dimension_numbers<[1], [0], [0], [1], [0, 0, 1, 1], [], []>} : vector<72x144xbf16>, vector<144x2xbf16>, vector<72x2xf32> -> vector<72x2xf32>
      %109 = arith.maximumf %107, %108 : vector<72x2xf32>
      %c72_i32 = arith.constant 72 : i32
      %110 = arith.muli %arg19, %c72_i32 : i32
      %111 = tpu.assume_multiple %110, 8 : i32
      %112 = arith.index_cast %111 : i32 to index
      %c0_67 = arith.constant 0 : index
      %113 = vector.load %arg17[%112, %c0_67] : memref<864x2xf32, #tpu.memory_space<vmem>>, vector<72x2xf32>
      tpu.vector_store %arg17[%112, %c0_67], %109 {strides = array<i32>} : memref<864x2xf32, #tpu.memory_space<vmem>>, vector<72x2xf32>,
    }
    %c12_i32_7 = arith.constant 12 : i32
    %c0_8 = arith.constant 0 : index
    %c0_9 = arith.constant 0 : index
    %5 = vector.load %arg6[%c0_8, %c0_9] : memref<256x432xbf16, #tpu.memory_space<vmem>>, vector<256x432xbf16>
    %c0_10 = arith.constant 0 : index
    %c0_11 = arith.constant 0 : index
    %6 = vector.load %arg7[%c0_10, %c0_11] : memref<256x1xf32, #tpu.memory_space<vmem>>, vector<256x1xf32>
    %c0_12 = arith.constant 0 : index
    %c0_13 = arith.constant 0 : index
    %7 = vector.load %arg8[%c0_12, %c0_13] : memref<64x128xbf16, #tpu.memory_space<vmem>>, vector<64x128xbf16>
    %c0_14 = arith.constant 0 : index
    %c0_15 = arith.constant 0 : index
    %8 = vector.load %arg9[%c0_14, %c0_15] : memref<64x128xbf16, #tpu.memory_space<vmem>>, vector<64x128xbf16>
    %c0_16 = arith.constant 0 : index
    %c0_17 = arith.constant 0 : index
    %9 = vector.load %arg17[%c0_16, %c0_17] : memref<864x2xf32, #tpu.memory_space<vmem>>, vector<432x2xf32>
    %10 = arith.truncf %9 : vector<432x2xf32> to vector<432x2xbf16>
    %cst = arith.constant dense<0.000000e+00> : vector<256x2xf32>
    %11 = tpu.matmul %5, %10, %cst {dimension_numbers = #tpu.dot_dimension_numbers<[1], [0], [0], [1], [0, 0, 1, 1], [], []>} : vector<256x432xbf16>, vector<432x2xbf16>, vector<256x2xf32> -> vector<256x2xf32>
    %12 = vector.broadcast %6 : vector<256x1xf32> to vector<256x2xf32>
    %13 = arith.addf %11, %12 : vector<256x2xf32>
    %cst_18 = arith.constant 0.000000e+00 : f32
    %14 = vector.broadcast %cst_18 : f32 to vector<256x2xf32>
    %15 = arith.maximumf %13, %14 : vector<256x2xf32>
    %16 = vector.extract_strided_slice %15 {offsets = [0, 0], sizes = [128, 2], strides = [1, 1]} : vector<256x2xf32> to vector<128x2xf32>
    %17 = vector.extract_strided_slice %15 {offsets = [128, 0], sizes = [128, 2], strides = [1, 1]} : vector<256x2xf32> to vector<128x2xf32>
    %18 = arith.maximumf %16, %17 : vector<128x2xf32>
    %19 = arith.truncf %18 : vector<128x2xf32> to vector<128x2xbf16>
    %cst_19 = arith.constant dense<0.000000e+00> : vector<64x2xf32>
    %20 = tpu.matmul %7, %19, %cst_19 {dimension_numbers = #tpu.dot_dimension_numbers<[1], [0], [0], [1], [0, 0, 1, 1], [], []>} : vector<64x128xbf16>, vector<128x2xbf16>, vector<64x2xf32> -> vector<64x2xf32>
    %cst_20 = arith.constant dense<0.000000e+00> : vector<64x2xf32>
    %21 = tpu.matmul %8, %19, %cst_20 {dimension_numbers = #tpu.dot_dimension_numbers<[1], [0], [0], [1], [0, 0, 1, 1], [], []>} : vector<64x128xbf16>, vector<128x2xbf16>, vector<64x2xf32> -> vector<64x2xf32>
    %22 = arith.maximumf %20, %21 : vector<64x2xf32>
    %c0_21 = arith.constant 0 : index
    %c0_22 = arith.constant 0 : index
    %23 = vector.load %arg18[%c0_21, %c0_22] : memref<256x2xf32, #tpu.memory_space<vmem>>, vector<64x2xf32>
    tpu.vector_store %arg18[%c0_21, %c0_22], %22 {strides = array<i32>} : memref<256x2xf32, #tpu.memory_space<vmem>>, vector<64x2xf32>,
    %c144 = arith.constant 144 : index
    %c0_23 = arith.constant 0 : index
    %24 = vector.load %arg17[%c144, %c0_23] : memref<864x2xf32, #tpu.memory_space<vmem>>, vector<432x2xf32>
    %25 = arith.truncf %24 : vector<432x2xf32> to vector<432x2xbf16>
    %cst_24 = arith.constant dense<0.000000e+00> : vector<256x2xf32>
    %26 = tpu.matmul %5, %25, %cst_24 {dimension_numbers = #tpu.dot_dimension_numbers<[1], [0], [0], [1], [0, 0, 1, 1], [], []>} : vector<256x432xbf16>, vector<432x2xbf16>, vector<256x2xf32> -> vector<256x2xf32>
    %27 = vector.broadcast %6 : vector<256x1xf32> to vector<256x2xf32>
    %28 = arith.addf %26, %27 : vector<256x2xf32>
    %cst_25 = arith.constant 0.000000e+00 : f32
    %29 = vector.broadcast %cst_25 : f32 to vector<256x2xf32>
    %30 = arith.maximumf %28, %29 : vector<256x2xf32>
    %31 = vector.extract_strided_slice %30 {offsets = [0, 0], sizes = [128, 2], strides = [1, 1]} : vector<256x2xf32> to vector<128x2xf32>
    %32 = vector.extract_strided_slice %30 {offsets = [128, 0], sizes = [128, 2], strides = [1, 1]} : vector<256x2xf32> to vector<128x2xf32>
    %33 = arith.maximumf %31, %32 : vector<128x2xf32>
    %34 = arith.truncf %33 : vector<128x2xf32> to vector<128x2xbf16>
    %cst_26 = arith.constant dense<0.000000e+00> : vector<64x2xf32>
    %35 = tpu.matmul %7, %34, %cst_26 {dimension_numbers = #tpu.dot_dimension_numbers<[1], [0], [0], [1], [0, 0, 1, 1], [], []>} : vector<64x128xbf16>, vector<128x2xbf16>, vector<64x2xf32> -> vector<64x2xf32>
    %cst_27 = arith.constant dense<0.000000e+00> : vector<64x2xf32>
    %36 = tpu.matmul %8, %34, %cst_27 {dimension_numbers = #tpu.dot_dimension_numbers<[1], [0], [0], [1], [0, 0, 1, 1], [], []>} : vector<64x128xbf16>, vector<128x2xbf16>, vector<64x2xf32> -> vector<64x2xf32>
    %37 = arith.maximumf %35, %36 : vector<64x2xf32>
    %c64 = arith.constant 64 : index
    %c0_28 = arith.constant 0 : index
    %38 = vector.load %arg18[%c64, %c0_28] : memref<256x2xf32, #tpu.memory_space<vmem>>, vector<64x2xf32>
    tpu.vector_store %arg18[%c64, %c0_28], %37 {strides = array<i32>} : memref<256x2xf32, #tpu.memory_space<vmem>>, vector<64x2xf32>,
    %c288 = arith.constant 288 : index
    %c0_29 = arith.constant 0 : index
    %39 = vector.load %arg17[%c288, %c0_29] : memref<864x2xf32, #tpu.memory_space<vmem>>, vector<432x2xf32>
    %40 = arith.truncf %39 : vector<432x2xf32> to vector<432x2xbf16>
    %cst_30 = arith.constant dense<0.000000e+00> : vector<256x2xf32>
    %41 = tpu.matmul %5, %40, %cst_30 {dimension_numbers = #tpu.dot_dimension_numbers<[1], [0], [0], [1], [0, 0, 1, 1], [], []>} : vector<256x432xbf16>, vector<432x2xbf16>, vector<256x2xf32> -> vector<256x2xf32>
    %42 = vector.broadcast %6 : vector<256x1xf32> to vector<256x2xf32>
    %43 = arith.addf %41, %42 : vector<256x2xf32>
    %cst_31 = arith.constant 0.000000e+00 : f32
    %44 = vector.broadcast %cst_31 : f32 to vector<256x2xf32>
    %45 = arith.maximumf %43, %44 : vector<256x2xf32>
    %46 = vector.extract_strided_slice %45 {offsets = [0, 0], sizes = [128, 2], strides = [1, 1]} : vector<256x2xf32> to vector<128x2xf32>
    %47 = vector.extract_strided_slice %45 {offsets = [128, 0], sizes = [128, 2], strides = [1, 1]} : vector<256x2xf32> to vector<128x2xf32>
    %48 = arith.maximumf %46, %47 : vector<128x2xf32>
    %49 = arith.truncf %48 : vector<128x2xf32> to vector<128x2xbf16>
    %cst_32 = arith.constant dense<0.000000e+00> : vector<64x2xf32>
    %50 = tpu.matmul %7, %49, %cst_32 {dimension_numbers = #tpu.dot_dimension_numbers<[1], [0], [0], [1], [0, 0, 1, 1], [], []>} : vector<64x128xbf16>, vector<128x2xbf16>, vector<64x2xf32> -> vector<64x2xf32>
    %cst_33 = arith.constant dense<0.000000e+00> : vector<64x2xf32>
    %51 = tpu.matmul %8, %49, %cst_33 {dimension_numbers = #tpu.dot_dimension_numbers<[1], [0], [0], [1], [0, 0, 1, 1], [], []>} : vector<64x128xbf16>, vector<128x2xbf16>, vector<64x2xf32> -> vector<64x2xf32>
    %52 = arith.maximumf %50, %51 : vector<64x2xf32>
    %c128 = arith.constant 128 : index
    %c0_34 = arith.constant 0 : index
    %53 = vector.load %arg18[%c128, %c0_34] : memref<256x2xf32, #tpu.memory_space<vmem>>, vector<64x2xf32>
    tpu.vector_store %arg18[%c128, %c0_34], %52 {strides = array<i32>} : memref<256x2xf32, #tpu.memory_space<vmem>>, vector<64x2xf32>,
    %c432 = arith.constant 432 : index
    %c0_35 = arith.constant 0 : index
    %54 = vector.load %arg17[%c432, %c0_35] : memref<864x2xf32, #tpu.memory_space<vmem>>, vector<432x2xf32>
    %55 = arith.truncf %54 : vector<432x2xf32> to vector<432x2xbf16>
    %cst_36 = arith.constant dense<0.000000e+00> : vector<256x2xf32>
    %56 = tpu.matmul %5, %55, %cst_36 {dimension_numbers = #tpu.dot_dimension_numbers<[1], [0], [0], [1], [0, 0, 1, 1], [], []>} : vector<256x432xbf16>, vector<432x2xbf16>, vector<256x2xf32> -> vector<256x2xf32>
    %57 = vector.broadcast %6 : vector<256x1xf32> to vector<256x2xf32>
    %58 = arith.addf %56, %57 : vector<256x2xf32>
    %cst_37 = arith.constant 0.000000e+00 : f32
    %59 = vector.broadcast %cst_37 : f32 to vector<256x2xf32>
    %60 = arith.maximumf %58, %59 : vector<256x2xf32>
    %61 = vector.extract_strided_slice %60 {offsets = [0, 0], sizes = [128, 2], strides = [1, 1]} : vector<256x2xf32> to vector<128x2xf32>
    %62 = vector.extract_strided_slice %60 {offsets = [128, 0], sizes = [128, 2], strides = [1, 1]} : vector<256x2xf32> to vector<128x2xf32>
    %63 = arith.maximumf %61, %62 : vector<128x2xf32>
    %64 = arith.truncf %63 : vector<128x2xf32> to vector<128x2xbf16>
    %cst_38 = arith.constant dense<0.000000e+00> : vector<64x2xf32>
    %65 = tpu.matmul %7, %64, %cst_38 {dimension_numbers = #tpu.dot_dimension_numbers<[1], [0], [0], [1], [0, 0, 1, 1], [], []>} : vector<64x128xbf16>, vector<128x2xbf16>, vector<64x2xf32> -> vector<64x2xf32>
    %cst_39 = arith.constant dense<0.000000e+00> : vector<64x2xf32>
    %66 = tpu.matmul %8, %64, %cst_39 {dimension_numbers = #tpu.dot_dimension_numbers<[1], [0], [0], [1], [0, 0, 1, 1], [], []>} : vector<64x128xbf16>, vector<128x2xbf16>, vector<64x2xf32> -> vector<64x2xf32>
    %67 = arith.maximumf %65, %66 : vector<64x2xf32>
    %c192 = arith.constant 192 : index
    %c0_40 = arith.constant 0 : index
    %68 = vector.load %arg18[%c192, %c0_40] : memref<256x2xf32, #tpu.memory_space<vmem>>, vector<64x2xf32>
    tpu.vector_store %arg18[%c192, %c0_40], %67 {strides = array<i32>} : memref<256x2xf32, #tpu.memory_space<vmem>>, vector<64x2xf32>,
    %c0_41 = arith.constant 0 : index
    %c0_42 = arith.constant 0 : index
    %69 = vector.load %arg18[%c0_41, %c0_42] : memref<256x2xf32, #tpu.memory_space<vmem>>, vector<256x2xf32>
    %70 = arith.truncf %69 : vector<256x2xf32> to vector<256x2xbf16>
    %c0_43 = arith.constant 0 : index
    %c0_44 = arith.constant 0 : index
    %71 = vector.load %arg10[%c0_43, %c0_44] : memref<120x256xbf16, #tpu.memory_space<vmem>>, vector<120x256xbf16>
    %cst_45 = arith.constant dense<0.000000e+00> : vector<120x2xf32>
    %72 = tpu.matmul %71, %70, %cst_45 {dimension_numbers = #tpu.dot_dimension_numbers<[1], [0], [0], [1], [0, 0, 1, 1], [], []>} : vector<120x256xbf16>, vector<256x2xbf16>, vector<120x2xf32> -> vector<120x2xf32>
    %c0_46 = arith.constant 0 : index
    %c0_47 = arith.constant 0 : index
    %73 = vector.load %arg11[%c0_46, %c0_47] : memref<120x1xf32, #tpu.memory_space<vmem>>, vector<120x1xf32>
    %74 = vector.broadcast %73 : vector<120x1xf32> to vector<120x2xf32>
    %75 = arith.addf %72, %74 : vector<120x2xf32>
    %cst_48 = arith.constant 0.000000e+00 : f32
    %76 = vector.broadcast %cst_48 : f32 to vector<120x2xf32>
    %77 = arith.maximumf %75, %76 : vector<120x2xf32>
    %78 = arith.truncf %77 : vector<120x2xf32> to vector<120x2xbf16>
    %c0_49 = arith.constant 0 : index
    %c0_50 = arith.constant 0 : index
    %79 = vector.load %arg12[%c0_49, %c0_50] : memref<84x120xbf16, #tpu.memory_space<vmem>>, vector<84x120xbf16>
    %cst_51 = arith.constant dense<0.000000e+00> : vector<84x2xf32>
    %80 = tpu.matmul %79, %78, %cst_51 {dimension_numbers = #tpu.dot_dimension_numbers<[1], [0], [0], [1], [0, 0, 1, 1], [], []>} : vector<84x120xbf16>, vector<120x2xbf16>, vector<84x2xf32> -> vector<84x2xf32>
    %c0_52 = arith.constant 0 : index
    %c0_53 = arith.constant 0 : index
    %81 = vector.load %arg13[%c0_52, %c0_53] : memref<84x1xf32, #tpu.memory_space<vmem>>, vector<84x1xf32>
    %82 = vector.broadcast %81 : vector<84x1xf32> to vector<84x2xf32>
    %83 = arith.addf %80, %82 : vector<84x2xf32>
    %cst_54 = arith.constant 0.000000e+00 : f32
    %84 = vector.broadcast %cst_54 : f32 to vector<84x2xf32>
    %85 = arith.maximumf %83, %84 : vector<84x2xf32>
    %86 = arith.truncf %85 : vector<84x2xf32> to vector<84x2xbf16>
    %c0_55 = arith.constant 0 : index
    %c0_56 = arith.constant 0 : index
    %87 = vector.load %arg14[%c0_55, %c0_56] : memref<10x84xbf16, #tpu.memory_space<vmem>>, vector<10x84xbf16>
    %cst_57 = arith.constant dense<0.000000e+00> : vector<10x2xf32>
    %88 = tpu.matmul %87, %86, %cst_57 {dimension_numbers = #tpu.dot_dimension_numbers<[1], [0], [0], [1], [0, 0, 1, 1], [], []>} : vector<10x84xbf16>, vector<84x2xbf16>, vector<10x2xf32> -> vector<10x2xf32>
    %c0_58 = arith.constant 0 : index
    %c0_59 = arith.constant 0 : index
    %89 = vector.load %arg15[%c0_58, %c0_59] : memref<10x1xf32, #tpu.memory_space<vmem>>, vector<10x1xf32>
    %90 = vector.broadcast %89 : vector<10x1xf32> to vector<10x2xf32>
    %91 = arith.addf %88, %90 : vector<10x2xf32>
    %c0_60 = arith.constant 0 : index
    %c0_61 = arith.constant 0 : index
    %92 = vector.load %arg16[%c0_60, %c0_61] : memref<10x2xf32, #tpu.memory_space<vmem>>, vector<10x2xf32>
    tpu.vector_store %arg16[%c0_60, %c0_61], %91 {strides = array<i32>} : memref<10x2xf32, #tpu.memory_space<vmem>>, vector<10x2xf32>,
    return
  }
  func.func @transform_0(%arg0: i32) -> (i32, i32) {
    %c0_i32 = arith.constant 0 : i32
    %c0_i32_0 = arith.constant 0 : i32
    return %c0_i32, %arg0 : i32, i32
  }
  func.func @transform_1(%arg0: i32) -> (i32, i32) {
    %c0_i32 = arith.constant 0 : i32
    %c0_i32_0 = arith.constant 0 : i32
    %c0_i32_1 = arith.constant 0 : i32
    return %c0_i32, %c0_i32_0 : i32, i32
  }
  func.func @transform_2(%arg0: i32) -> (i32, i32) {
    %c0_i32 = arith.constant 0 : i32
    %c0_i32_0 = arith.constant 0 : i32
    %c0_i32_1 = arith.constant 0 : i32
    return %c0_i32, %c0_i32_0 : i32, i32
  }
  func.func @transform_3(%arg0: i32) -> (i32, i32) {
    %c0_i32 = arith.constant 0 : i32
    %c0_i32_0 = arith.constant 0 : i32
    %c0_i32_1 = arith.constant 0 : i32
    return %c0_i32, %c0_i32_0 : i32, i32
  }
  func.func @transform_4(%arg0: i32) -> (i32, i32) {
    %c0_i32 = arith.constant 0 : i32
    %c0_i32_0 = arith.constant 0 : i32
    %c0_i32_1 = arith.constant 0 : i32
    return %c0_i32, %c0_i32_0 : i32, i32
  }
  func.func @transform_5(%arg0: i32) -> (i32, i32) {
    %c0_i32 = arith.constant 0 : i32
    %c0_i32_0 = arith.constant 0 : i32
    %c0_i32_1 = arith.constant 0 : i32
    return %c0_i32, %c0_i32_0 : i32, i32
  }
  func.func @transform_6(%arg0: i32) -> (i32, i32) {
    %c0_i32 = arith.constant 0 : i32
    %c0_i32_0 = arith.constant 0 : i32
    %c0_i32_1 = arith.constant 0 : i32
    return %c0_i32, %c0_i32_0 : i32, i32
  }
  func.func @transform_7(%arg0: i32) -> (i32, i32) {
    %c0_i32 = arith.constant 0 : i32
    %c0_i32_0 = arith.constant 0 : i32
    %c0_i32_1 = arith.constant 0 : i32
    return %c0_i32, %c0_i32_0 : i32, i32
  }
  func.func @transform_8(%arg0: i32) -> (i32, i32) {
    %c0_i32 = arith.constant 0 : i32
    %c0_i32_0 = arith.constant 0 : i32
    %c0_i32_1 = arith.constant 0 : i32
    return %c0_i32, %c0_i32_0 : i32, i32
  }
  func.func @transform_9(%arg0: i32) -> (i32, i32) {
    %c0_i32 = arith.constant 0 : i32
    %c0_i32_0 = arith.constant 0 : i32
    %c0_i32_1 = arith.constant 0 : i32
    return %c0_i32, %c0_i32_0 : i32, i32
  }
  func.func @transform_10(%arg0: i32) -> (i32, i32) {
    %c0_i32 = arith.constant 0 : i32
    %c0_i32_0 = arith.constant 0 : i32
    %c0_i32_1 = arith.constant 0 : i32
    return %c0_i32, %c0_i32_0 : i32, i32
  }
  func.func @transform_11(%arg0: i32) -> (i32, i32) {
    %c0_i32 = arith.constant 0 : i32
    %c0_i32_0 = arith.constant 0 : i32
    %c0_i32_1 = arith.constant 0 : i32
    return %c0_i32, %c0_i32_0 : i32, i32
  }
  func.func @transform_12(%arg0: i32) -> (i32, i32) {
    %c0_i32 = arith.constant 0 : i32
    %c0_i32_0 = arith.constant 0 : i32
    %c0_i32_1 = arith.constant 0 : i32
    return %c0_i32, %c0_i32_0 : i32, i32
  }
  func.func @transform_13(%arg0: i32) -> (i32, i32) {
    %c0_i32 = arith.constant 0 : i32
    %c0_i32_0 = arith.constant 0 : i32
    %c0_i32_1 = arith.constant 0 : i32
    return %c0_i32, %c0_i32_0 : i32, i32
  }
  func.func @transform_14(%arg0: i32) -> (i32, i32) {
    %c0_i32 = arith.constant 0 : i32
    %c0_i32_0 = arith.constant 0 : i32
    %c0_i32_1 = arith.constant 0 : i32
    return %c0_i32, %c0_i32_0 : i32, i32
  }
  func.func @transform_15(%arg0: i32) -> (i32, i32) {
    %c0_i32 = arith.constant 0 : i32
    %c0_i32_0 = arith.constant 0 : i32
    return %c0_i32, %arg0 : i32, i32
  }
}

</mosaic_0001>

<llo_original>
// kernel: tile.10
$region0: #{tile.10}
  #allocation0 [shape = 's32[1]{0}', space=sflag, size = 0x4, scoped, tag = 'scoped memory for tile.10']
  %s0 = inlined_call_operand.vmem [shape: f32[144], index: 0, kind: input, shape index: {}]
  %s1 = inlined_call_operand.vmem [shape: f32[2,144], index: 1, kind: output, shape index: {}]
  // Predicated region
  $region2: #{tile.10} parent=0 // pred_check
    _
  $region3: #{tile.10} parent=0 // pred_check_branch
    %3 = sbr.rel (0) target = $region5
  $region4: #{tile.10} parent=0 // pred_region
    _
  $region5: #{tile.10} parent=0 // pred_fallthru
    _
  %v4 = vld [vmem:[%s0] ss:$0 sm:$0xff]
  %5 = vst [vmem:[%s1] sm:$0x3] %v4
  %s6 = scalar_lea.vmem %s0, 1
  %v7 = vld [vmem:[%s6] ss:$0 sm:$0xff]
  %s8 = scalar_lea.vmem %s1, 2
  %9 = vst [vmem:[%s8] sm:$0x3] %v7

// kernel: tile.9
$region0: #{tile.9}
  %s0 = inlined_call_operand.vmem [shape: f32[6,24], index: 0, kind: input, shape index: {}]
  %s1 = inlined_call_operand.vmem [shape: f32[144], index: 1, kind: output, shape index: {}]
  $region1: #{tile.9} parent=0
    #allocation0 [shape = 'u8[4096]{0}', space=vmem, size = 0x1000, scoped, tag = 'scoped mem for output reshape']
    %v2 = vld [vmem:[%s0] sm:$0x1]
    %vm3 = vcmask 195584
    %4 = vst.msk [vmem:[#allocation0] sm:$0x1] %vm3, %v2
    %s5 = scalar_lea.vmem %s0, 5
    %v6 = vld [vmem:[%s5] sm:$0x1]
    %s7 = scalar_lea.vmem %s0, 5
    %v8 = vld [vmem:[%s7] sm:$0x1]
    %vm9 = vcmask 64512
    %v10 = vsel %vm9, %v8, %v6
    %11 = vrot.lane.b32.xlu0 %v10, 120
    %v12 = vpop.permute.xlu0 %11
    %vm13 = vcmask 130048
    %s14 = scalar_lea.vmem [#allocation0], 1
    %15 = vst.msk [vmem:[%s14] sm:$0x1] %vm13, %v12
    %vm16 = vcmask 1048512
    %17 = vst.msk [vmem:[#allocation0] sm:$0x1] %vm16, %v12
    %s18 = scalar_lea.vmem %s0, 4
    %v19 = vld [vmem:[%s18] sm:$0x1]
    %20 = vrot.lane.b32.xlu0 %v19, 96
    %v21 = vpop.permute.xlu0 %20
    %vm22 = vcmask 982784
    %23 = vst.msk [vmem:[#allocation0] sm:$0x1] %vm22, %v21
    %s24 = scalar_lea.vmem %s0, 3
    %v25 = vld [vmem:[%s24] sm:$0x1]
    %26 = vrot.lane.b32.xlu0 %v25, 72
    %v27 = vpop.permute.xlu0 %26
    %vm28 = vcmask 785984
    %29 = vst.msk [vmem:[#allocation0] sm:$0x1] %vm28, %v27
    %s30 = scalar_lea.vmem %s0, 2
    %v31 = vld [vmem:[%s30] sm:$0x1]
    %32 = vrot.lane.b32.xlu0 %v31, 48
    %v33 = vpop.permute.xlu0 %32
    %vm34 = vcmask 589184
    %35 = vst.msk [vmem:[#allocation0] sm:$0x1] %vm34, %v33
    %s36 = scalar_lea.vmem %s0, 1
    %v37 = vld [vmem:[%s36] sm:$0x1]
    %38 = vrot.lane.b32.xlu0 %v37, 24
    %v39 = vpop.permute.xlu0 %38
    %vm40 = vcmask 392384
    %41 = vst.msk [vmem:[#allocation0] sm:$0x1] %vm40, %v39
    %s43 = sshllo.u32 0, 2
    %v45 = vld [vmem:[#allocation0] sm:%s43]
    %s46 = sshllo.u32 0, 2
    %47 = vst [vmem:[%s1] sm:%s46] %v45

// kernel: tile.13
$region0: #{tile.13}
  %s0 = inlined_call_operand.vmem [shape: f32[16,8], index: 0, kind: input, shape index: {}]
  %s1 = inlined_call_operand.vmem [shape: f32[128], index: 1, kind: output, shape index: {}]
  $region1: #{tile.13} parent=0
    #allocation0 [shape = 'u8[4096]{0}', space=vmem, size = 0x1000, scoped, tag = 'scoped mem for output reshape']
    %v2 = vld [vmem:[%s0] sm:$0x1]
    %vm3 = vcmask 64512
    %4 = vst.msk [vmem:[#allocation0] sm:$0x1] %vm3, %v2
    %s5 = scalar_lea.vmem %s0, 15
    %v6 = vld [vmem:[%s5] sm:$0x1]
    %7 = vrot.lane.b32.xlu0 %v6, 120
    %v8 = vpop.permute.xlu0 %7
    %vm9 = vcmask 1048512
    %10 = vst.msk [vmem:[#allocation0] sm:$0x1] %vm9, %v8
    %s11 = scalar_lea.vmem %s0, 14
    %v12 = vld [vmem:[%s11] sm:$0x1]
    %13 = vrot.lane.b32.xlu0 %v12, 112
    %v14 = vpop.permute.xlu0 %13
    %vm15 = vcmask 982912
    %16 = vst.msk [vmem:[#allocation0] sm:$0x1] %vm15, %v14
    %s17 = scalar_lea.vmem %s0, 13
    %v18 = vld [vmem:[%s17] sm:$0x1]
    %19 = vrot.lane.b32.xlu0 %v18, 104
    %v20 = vpop.permute.xlu0 %19
    %vm21 = vcmask 917312
    %22 = vst.msk [vmem:[#allocation0] sm:$0x1] %vm21, %v20
    %s23 = scalar_lea.vmem %s0, 12
    %v24 = vld [vmem:[%s23] sm:$0x1]
    %25 = vrot.lane.b32.xlu0 %v24, 96
    %v26 = vpop.permute.xlu0 %25
    %vm27 = vcmask 851712
    %28 = vst.msk [vmem:[#allocation0] sm:$0x1] %vm27, %v26
    %s29 = scalar_lea.vmem %s0, 11
    %v30 = vld [vmem:[%s29] sm:$0x1]
    %31 = vrot.lane.b32.xlu0 %v30, 88
    %v32 = vpop.permute.xlu0 %31
    %vm33 = vcmask 786112
    %34 = vst.msk [vmem:[#allocation0] sm:$0x1] %vm33, %v32
    %s35 = scalar_lea.vmem %s0, 10
    %v36 = vld [vmem:[%s35] sm:$0x1]
    %37 = vrot.lane.b32.xlu0 %v36, 80
    %v38 = vpop.permute.xlu0 %37
    %vm39 = vcmask 720512
    %40 = vst.msk [vmem:[#allocation0] sm:$0x1] %vm39, %v38
    %s41 = scalar_lea.vmem %s0, 9
    %v42 = vld [vmem:[%s41] sm:$0x1]
    %43 = vrot.lane.b32.xlu0 %v42, 72
    %v44 = vpop.permute.xlu0 %43
    %vm45 = vcmask 654912
    %46 = vst.msk [vmem:[#allocation0] sm:$0x1] %vm45, %v44
    %s47 = scalar_lea.vmem %s0, 8
    %v48 = vld [vmem:[%s47] sm:$0x1]
    %49 = vrot.lane.b32.xlu0 %v48, 64
    %v50 = vpop.permute.xlu0 %49
    %vm51 = vcmask 589312
    %52 = vst.msk [vmem:[#allocation0] sm:$0x1] %vm51, %v50
    %s53 = scalar_lea.vmem %s0, 7
    %v54 = vld [vmem:[%s53] sm:$0x1]
    %55 = vrot.lane.b32.xlu0 %v54, 56
    %v56 = vpop.permute.xlu0 %55
    %vm57 = vcmask 523712
    %58 = vst.msk [vmem:[#allocation0] sm:$0x1] %vm57, %v56
    %s59 = scalar_lea.vmem %s0, 6
    %v60 = vld [vmem:[%s59] sm:$0x1]
    %61 = vrot.lane.b32.xlu0 %v60, 48
    %v62 = vpop.permute.xlu0 %61
    %vm63 = vcmask 458112
    %64 = vst.msk [vmem:[#allocation0] sm:$0x1] %vm63, %v62
    %s65 = scalar_lea.vmem %s0, 5
    %v66 = vld [vmem:[%s65] sm:$0x1]
    %67 = vrot.lane.b32.xlu0 %v66, 40
    %v68 = vpop.permute.xlu0 %67
    %vm69 = vcmask 392512
    %70 = vst.msk [vmem:[#allocation0] sm:$0x1] %vm69, %v68
    %s71 = scalar_lea.vmem %s0, 4
    %v72 = vld [vmem:[%s71] sm:$0x1]
    %73 = vrot.lane.b32.xlu0 %v72, 32
    %v74 = vpop.permute.xlu0 %73
    %vm75 = vcmask 326912
    %76 = vst.msk [vmem:[#allocation0] sm:$0x1] %vm75, %v74
    %s77 = scalar_lea.vmem %s0, 3
    %v78 = vld [vmem:[%s77] sm:$0x1]
    %79 = vrot.lane.b32.xlu0 %v78, 24
    %v80 = vpop.permute.xlu0 %79
    %vm81 = vcmask 261312
    %82 = vst.msk [vmem:[#allocation0] sm:$0x1] %vm81, %v80
    %s83 = scalar_lea.vmem %s0, 2
    %v84 = vld [vmem:[%s83] sm:$0x1]
    %85 = vrot.lane.b32.xlu0 %v84, 16
    %v86 = vpop.permute.xlu0 %85
    %vm87 = vcmask 195712
    %88 = vst.msk [vmem:[#allocation0] sm:$0x1] %vm87, %v86
    %s89 = scalar_lea.vmem %s0, 1
    %v90 = vld [vmem:[%s89] sm:$0x1]
    %91 = vrot.lane.b32.xlu0 %v90, 8
    %v92 = vpop.permute.xlu0 %91
    %vm93 = vcmask 130112
    %94 = vst.msk [vmem:[#allocation0] sm:$0x1] %vm93, %v92
    %s96 = sshllo.u32 0, 1
    %v98 = vld [vmem:[#allocation0] sm:%s96]
    %s99 = sshllo.u32 0, 1
    %100 = vst [vmem:[%s1] sm:%s99] %v98

// kernel: tile.14
$region0: #{tile.14}
  #allocation0 [shape = 's32[1]{0}', space=sflag, size = 0x4, scoped, tag = 'scoped memory for tile.14']
  %s0 = inlined_call_operand.vmem [shape: f32[128], index: 0, kind: input, shape index: {}]
  %s1 = inlined_call_operand.vmem [shape: f32[2,128], index: 1, kind: output, shape index: {}]
  // Predicated region
  $region2: #{tile.14} parent=0 // pred_check
    _
  $region3: #{tile.14} parent=0 // pred_check_branch
    %3 = sbr.rel (0) target = $region5
  $region4: #{tile.14} parent=0 // pred_region
    _
  $region5: #{tile.14} parent=0 // pred_fallthru
    _
  %v4 = vld [vmem:[%s0] ss:$0 sm:$0xff]
  %5 = vst [vmem:[%s1] sm:$0x3] %v4

// kernel: tile.0
$region0: #{tile.0}
  %s0 = inlined_call_operand.vmem [shape: f32[2,144], index: 0, kind: input, shape index: {}]
  %s1 = inlined_call_operand.vmem [shape: f32[288,1], index: 1, kind: output, shape index: {}]
  $region1: #{tile.0} parent=0
    #allocation0 [shape = 'u8[8192]{0}', space=vmem, size = 0x2000, scoped, tag = 'scoped mem for input reshape']
    %s3 = sshllo.u32 0, 2
    %s4 = scalar_lea.vmem %s0, 2
    %v5 = vld [vmem:[%s4] sm:%s3]
    %s6 = scalar_lea.vmem [#allocation0], 8
    %7 = vst [vmem:[%s6] sm:%s3] %v5
    %v8 = vld [vmem:[%s0] sm:%s3]
    %9 = vst [vmem:[#allocation0] sm:%s3] %v8
    %v10 = vld [vmem:[#allocation0] sm:$0x3]
    %vm11 = vcmask 7168
    %12 = vst.msk [vmem:[%s1] ss:$144 sm:$0x3] %vm11, %v10
    %s13 = scalar_lea.vmem [#allocation0], 8
    %v14 = vld [vmem:[%s13] sm:$0x3]
    %vm15 = vcmask 7168
    %s16 = scalar_lea.vmem %s1, 128
    %17 = vst.msk [vmem:[%s16] ss:$144 sm:$0x3] %vm15, %v14
    %v18 = vld.sshfl [vmem:[#allocation0] sm:$0xff pattern:$0x99999810]
    %19 = vrot.lane.b32.xlu0 %v18, 127
    %v20 = vpop.permute.xlu0 %19
    %vm21 = vcmask 7168
    %s22 = scalar_lea.vmem %s1, 1
    %23 = vst.msk [vmem:[%s22] ss:$144 sm:$0x3] %vm21, %v20
    %s24 = scalar_lea.vmem %s1, 4294967137
    %25 = vst.msk [vmem:[%s24] ss:$144 sm:$0xc] %vm21, %v20
    %v26 = vld.sshfl [vmem:[#allocation0] sm:$0xff pattern:$0x99999810]
    %27 = vrot.lane.b32.xlu0 %v26, 126
    %v28 = vpop.permute.xlu0 %27
    %vm29 = vcmask 7168
    %s30 = scalar_lea.vmem %s1, 2
    %31 = vst.msk [vmem:[%s30] ss:$144 sm:$0x3] %vm29, %v28
    %s32 = scalar_lea.vmem %s1, 4294967138
    %33 = vst.msk [vmem:[%s32] ss:$144 sm:$0xc] %vm29, %v28
    %v34 = vld.sshfl [vmem:[#allocation0] sm:$0xff pattern:$0x99999810]
    %35 = vrot.lane.b32.xlu0 %v34, 125
    %v36 = vpop.permute.xlu0 %35
    %vm37 = vcmask 7168
    %s38 = scalar_lea.vmem %s1, 3
    %39 = vst.msk [vmem:[%s38] ss:$144 sm:$0x3] %vm37, %v36
    %s40 = scalar_lea.vmem %s1, 4294967139
    %41 = vst.msk [vmem:[%s40] ss:$144 sm:$0xc] %vm37, %v36
    %v42 = vld.sshfl [vmem:[#allocation0] sm:$0xff pattern:$0x99999810]
    %43 = vrot.lane.b32.xlu0 %v42, 124
    %v44 = vpop.permute.xlu0 %43
    %vm45 = vcmask 7168
    %s46 = scalar_lea.vmem %s1, 4
    %47 = vst.msk [vmem:[%s46] ss:$144 sm:$0x3] %vm45, %v44
    %s48 = scalar_lea.vmem %s1, 4294967140
    %49 = vst.msk [vmem:[%s48] ss:$144 sm:$0xc] %vm45, %v44
    %v50 = vld.sshfl [vmem:[#allocation0] sm:$0xff pattern:$0x99999810]
    %51 = vrot.lane.b32.xlu0 %v50, 123
    %v52 = vpop.permute.xlu0 %51
    %vm53 = vcmask 7168
    %s54 = scalar_lea.vmem %s1, 5
    %55 = vst.msk [vmem:[%s54] ss:$144 sm:$0x3] %vm53, %v52
    %s56 = scalar_lea.vmem %s1, 4294967141
    %57 = vst.msk [vmem:[%s56] ss:$144 sm:$0xc] %vm53, %v52
    %v58 = vld.sshfl [vmem:[#allocation0] sm:$0xff pattern:$0x99999810]
    %59 = vrot.lane.b32.xlu0 %v58, 122
    %v60 = vpop.permute.xlu0 %59
    %vm61 = vcmask 7168
    %s62 = scalar_lea.vmem %s1, 6
    %63 = vst.msk [vmem:[%s62] ss:$144 sm:$0x3] %vm61, %v60
    %s64 = scalar_lea.vmem %s1, 4294967142
    %65 = vst.msk [vmem:[%s64] ss:$144 sm:$0xc] %vm61, %v60
    %v66 = vld.sshfl [vmem:[#allocation0] sm:$0xff pattern:$0x99999810]
    %67 = vrot.lane.b32.xlu0 %v66, 121
    %v68 = vpop.permute.xlu0 %67
    %vm69 = vcmask 7168
    %s70 = scalar_lea.vmem %s1, 7
    %71 = vst.msk [vmem:[%s70] ss:$144 sm:$0x3] %vm69, %v68
    %s72 = scalar_lea.vmem %s1, 4294967143
    %73 = vst.msk [vmem:[%s72] ss:$144 sm:$0xc] %vm69, %v68
    %v74 = vld.sshfl [vmem:[#allocation0] sm:$0xff pattern:$0x99999810]
    %75 = vrot.lane.b32.xlu0 %v74, 120
    %v76 = vpop.permute.xlu0 %75
    %vm77 = vcmask 7168
    %s78 = scalar_lea.vmem %s1, 8
    %79 = vst.msk [vmem:[%s78] ss:$144 sm:$0x3] %vm77, %v76
    %s80 = scalar_lea.vmem %s1, 4294967144
    %81 = vst.msk [vmem:[%s80] ss:$144 sm:$0xc] %vm77, %v76
    %v82 = vld.sshfl [vmem:[#allocation0] sm:$0xff pattern:$0x99999810]
    %83 = vrot.lane.b32.xlu0 %v82, 119
    %v84 = vpop.permute.xlu0 %83
    %vm85 = vcmask 7168
    %s86 = scalar_lea.vmem %s1, 9
    %87 = vst.msk [vmem:[%s86] ss:$144 sm:$0x3] %vm85, %v84
    %s88 = scalar_lea.vmem %s1, 4294967145
    %89 = vst.msk [vmem:[%s88] ss:$144 sm:$0xc] %vm85, %v84
    %v90 = vld.sshfl [vmem:[#allocation0] sm:$0xff pattern:$0x99999810]
    %91 = vrot.lane.b32.xlu0 %v90, 118
    %v92 = vpop.permute.xlu0 %91
    %vm93 = vcmask 7168
    %s94 = scalar_lea.vmem %s1, 10
    %95 = vst.msk [vmem:[%s94] ss:$144 sm:$0x3] %vm93, %v92
    %s96 = scalar_lea.vmem %s1, 4294967146
    %97 = vst.msk [vmem:[%s96] ss:$144 sm:$0xc] %vm93, %v92
    %v98 = vld.sshfl [vmem:[#allocation0] sm:$0xff pattern:$0x99999810]
    %99 = vrot.lane.b32.xlu0 %v98, 117
    %v100 = vpop.permute.xlu0 %99
    %vm101 = vcmask 7168
    %s102 = scalar_lea.vmem %s1, 11
    %103 = vst.msk [vmem:[%s102] ss:$144 sm:$0x3] %vm101, %v100
    %s104 = scalar_lea.vmem %s1, 4294967147
    %105 = vst.msk [vmem:[%s104] ss:$144 sm:$0xc] %vm101, %v100
    %v106 = vld.sshfl [vmem:[#allocation0] sm:$0xff pattern:$0x99999810]
    %107 = vrot.lane.b32.xlu0 %v106, 116
    %v108 = vpop.permute.xlu0 %107
    %vm109 = vcmask 7168
    %s110 = scalar_lea.vmem %s1, 12
    %111 = vst.msk [vmem:[%s110] ss:$144 sm:$0x3] %vm109, %v108
    %s112 = scalar_lea.vmem %s1, 4294967148
    %113 = vst.msk [vmem:[%s112] ss:$144 sm:$0xc] %vm109, %v108
    %v114 = vld.sshfl [vmem:[#allocation0] sm:$0xff pattern:$0x99999810]
    %115 = vrot.lane.b32.xlu0 %v114, 115
    %v116 = vpop.permute.xlu0 %115
    %vm117 = vcmask 7168
    %s118 = scalar_lea.vmem %s1, 13
    %119 = vst.msk [vmem:[%s118] ss:$144 sm:$0x3] %vm117, %v116
    %s120 = scalar_lea.vmem %s1, 4294967149
    %121 = vst.msk [vmem:[%s120] ss:$144 sm:$0xc] %vm117, %v116
    %v122 = vld.sshfl [vmem:[#allocation0] sm:$0xff pattern:$0x99999810]
    %123 = vrot.lane.b32.xlu0 %v122, 114
    %v124 = vpop.permute.xlu0 %123
    %vm125 = vcmask 7168
    %s126 = scalar_lea.vmem %s1, 14
    %127 = vst.msk [vmem:[%s126] ss:$144 sm:$0x3] %vm125, %v124
    %s128 = scalar_lea.vmem %s1, 4294967150
    %129 = vst.msk [vmem:[%s128] ss:$144 sm:$0xc] %vm125, %v124
    %v130 = vld.sshfl [vmem:[#allocation0] sm:$0xff pattern:$0x99999810]
    %131 = vrot.lane.b32.xlu0 %v130, 113
    %v132 = vpop.permute.xlu0 %131
    %vm133 = vcmask 7168
    %s134 = scalar_lea.vmem %s1, 15
    %135 = vst.msk [vmem:[%s134] ss:$144 sm:$0x3] %vm133, %v132
    %s136 = scalar_lea.vmem %s1, 4294967151
    %137 = vst.msk [vmem:[%s136] ss:$144 sm:$0xc] %vm133, %v132
    %s138 = scalar_lea.vmem [#allocation0], 1
    %s139 = smov 3
    %v140 = vld [vmem:[%s138] ss:$-1 sm:%s139]
    %141 = vrot.lane.b32.xlu0 %v140, 112
    %v142 = vpop.permute.xlu0 %141
    %vm143 = vcmask 7168
    %s144 = scalar_lea.vmem %s1, 160
    %145 = vst.msk [vmem:[%s144] ss:$-144 sm:$0x3] %vm143, %v142
    %s146 = scalar_lea.vmem [#allocation0], 1
    %s147 = smov 3
    %v148 = vld [vmem:[%s146] ss:$-1 sm:%s147]
    %149 = vrot.lane.b32.xlu0 %v148, 111
    %v150 = vpop.permute.xlu0 %149
    %vm151 = vcmask 7168
    %s152 = scalar_lea.vmem %s1, 161
    %153 = vst.msk [vmem:[%s152] ss:$-144 sm:$0x3] %vm151, %v150
    %s154 = scalar_lea.vmem [#allocation0], 1
    %s155 = smov 3
    %v156 = vld [vmem:[%s154] ss:$-1 sm:%s155]
    %157 = vrot.lane.b32.xlu0 %v156, 110
    %v158 = vpop.permute.xlu0 %157
    %vm159 = vcmask 7168
    %s160 = scalar_lea.vmem %s1, 162
    %161 = vst.msk [vmem:[%s160] ss:$-144 sm:$0x3] %vm159, %v158
    %s162 = scalar_lea.vmem [#allocation0], 1
    %s163 = smov 3
    %v164 = vld [vmem:[%s162] ss:$-1 sm:%s163]
    %165 = vrot.lane.b32.xlu0 %v164, 109
    %v166 = vpop.permute.xlu0 %165
    %vm167 = vcmask 7168
    %s168 = scalar_lea.vmem %s1, 163
    %169 = vst.msk [vmem:[%s168] ss:$-144 sm:$0x3] %vm167, %v166
    %s170 = scalar_lea.vmem [#allocation0], 1
    %s171 = smov 3
    %v172 = vld [vmem:[%s170] ss:$-1 sm:%s171]
    %173 = vrot.lane.b32.xlu0 %v172, 108
    %v174 = vpop.permute.xlu0 %173
    %vm175 = vcmask 7168
    %s176 = scalar_lea.vmem %s1, 164
    %177 = vst.msk [vmem:[%s176] ss:$-144 sm:$0x3] %vm175, %v174
    %s178 = scalar_lea.vmem [#allocation0], 1
    %s179 = smov 3
    %v180 = vld [vmem:[%s178] ss:$-1 sm:%s179]
    %181 = vrot.lane.b32.xlu0 %v180, 107
    %v182 = vpop.permute.xlu0 %181
    %vm183 = vcmask 7168
    %s184 = scalar_lea.vmem %s1, 165
    %185 = vst.msk [vmem:[%s184] ss:$-144 sm:$0x3] %vm183, %v182
    %s186 = scalar_lea.vmem [#allocation0], 1
    %s187 = smov 3
    %v188 = vld [vmem:[%s186] ss:$-1 sm:%s187]
    %189 = vrot.lane.b32.xlu0 %v188, 106
    %v190 = vpop.permute.xlu0 %189
    %vm191 = vcmask 7168
    %s192 = scalar_lea.vmem %s1, 166
    %193 = vst.msk [vmem:[%s192] ss:$-144 sm:$0x3] %vm191, %v190
    %s194 = scalar_lea.vmem [#allocation0], 1
    %s195 = smov 3
    %v196 = vld [vmem:[%s194] ss:$-1 sm:%s195]
    %197 = vrot.lane.b32.xlu0 %v196, 105
    %v198 = vpop.permute.xlu0 %197
    %vm199 = vcmask 7168
    %s200 = scalar_lea.vmem %s1, 167
    %201 = vst.msk [vmem:[%s200] ss:$-144 sm:$0x3] %vm199, %v198
    %s202 = scalar_lea.vmem [#allocation0], 1
    %s203 = smov 3
    %v204 = vld [vmem:[%s202] ss:$-1 sm:%s203]
    %205 = vrot.lane.b32.xlu0 %v204, 104
    %v206 = vpop.permute.xlu0 %205
    %vm207 = vcmask 7168
    %s208 = scalar_lea.vmem %s1, 168
    %209 = vst.msk [vmem:[%s208] ss:$-144 sm:$0x3] %vm207, %v206
    %s210 = scalar_lea.vmem [#allocation0], 1
    %s211 = smov 3
    %v212 = vld [vmem:[%s210] ss:$-1 sm:%s211]
    %213 = vrot.lane.b32.xlu0 %v212, 103
    %v214 = vpop.permute.xlu0 %213
    %vm215 = vcmask 7168
    %s216 = scalar_lea.vmem %s1, 169
    %217 = vst.msk [vmem:[%s216] ss:$-144 sm:$0x3] %vm215, %v214
    %s218 = scalar_lea.vmem [#allocation0], 1
    %s219 = smov 3
    %v220 = vld [vmem:[%s218] ss:$-1 sm:%s219]
    %221 = vrot.lane.b32.xlu0 %v220, 102
    %v222 = vpop.permute.xlu0 %221
    %vm223 = vcmask 7168
    %s224 = scalar_lea.vmem %s1, 170
    %225 = vst.msk [vmem:[%s224] ss:$-144 sm:$0x3] %vm223, %v222
    %s226 = scalar_lea.vmem [#allocation0], 1
    %s227 = smov 3
    %v228 = vld [vmem:[%s226] ss:$-1 sm:%s227]
    %229 = vrot.lane.b32.xlu0 %v228, 101
    %v230 = vpop.permute.xlu0 %229
    %vm231 = vcmask 7168
    %s232 = scalar_lea.vmem %s1, 171
    %233 = vst.msk [vmem:[%s232] ss:$-144 sm:$0x3] %vm231, %v230
    %s234 = scalar_lea.vmem [#allocation0], 1
    %s235 = smov 3
    %v236 = vld [vmem:[%s234] ss:$-1 sm:%s235]
    %237 = vrot.lane.b32.xlu0 %v236, 100
    %v238 = vpop.permute.xlu0 %237
    %vm239 = vcmask 7168
    %s240 = scalar_lea.vmem %s1, 172
    %241 = vst.msk [vmem:[%s240] ss:$-144 sm:$0x3] %vm239, %v238
    %s242 = scalar_lea.vmem [#allocation0], 1
    %s243 = smov 3
    %v244 = vld [vmem:[%s242] ss:$-1 sm:%s243]
    %245 = vrot.lane.b32.xlu0 %v244, 99
    %v246 = vpop.permute.xlu0 %245
    %vm247 = vcmask 7168
    %s248 = scalar_lea.vmem %s1, 173
    %249 = vst.msk [vmem:[%s248] ss:$-144 sm:$0x3] %vm247, %v246
    %s250 = scalar_lea.vmem [#allocation0], 1
    %s251 = smov 3
    %v252 = vld [vmem:[%s250] ss:$-1 sm:%s251]
    %253 = vrot.lane.b32.xlu0 %v252, 98
    %v254 = vpop.permute.xlu0 %253
    %vm255 = vcmask 7168
    %s256 = scalar_lea.vmem %s1, 174
    %257 = vst.msk [vmem:[%s256] ss:$-144 sm:$0x3] %vm255, %v254
    %s258 = scalar_lea.vmem [#allocation0], 1
    %s259 = smov 3
    %v260 = vld [vmem:[%s258] ss:$-1 sm:%s259]
    %261 = vrot.lane.b32.xlu0 %v260, 97
    %v262 = vpop.permute.xlu0 %261
    %vm263 = vcmask 7168
    %s264 = scalar_lea.vmem %s1, 175
    %265 = vst.msk [vmem:[%s264] ss:$-144 sm:$0x3] %vm263, %v262
    %v266 = vld [vmem:[#allocation0] sm:$0x3]
    %267 = vrot.lane.b32.xlu0 %v266, 96
    %v268 = vpop.permute.xlu0 %267
    %vm269 = vcmask 7168
    %s270 = scalar_lea.vmem %s1, 32
    %271 = vst.msk [vmem:[%s270] ss:$144 sm:$0x3] %vm269, %v268
    %v272 = vld [vmem:[#allocation0] sm:$0x3]
    %273 = vrot.lane.b32.xlu0 %v272, 95
    %v274 = vpop.permute.xlu0 %273
    %vm275 = vcmask 7168
    %s276 = scalar_lea.vmem %s1, 33
    %277 = vst.msk [vmem:[%s276] ss:$144 sm:$0x3] %vm275, %v274
    %v278 = vld [vmem:[#allocation0] sm:$0x3]
    %279 = vrot.lane.b32.xlu0 %v278, 94
    %v280 = vpop.permute.xlu0 %279
    %vm281 = vcmask 7168
    %s282 = scalar_lea.vmem %s1, 34
    %283 = vst.msk [vmem:[%s282] ss:$144 sm:$0x3] %vm281, %v280
    %v284 = vld [vmem:[#allocation0] sm:$0x3]
    %285 = vrot.lane.b32.xlu0 %v284, 93
    %v286 = vpop.permute.xlu0 %285
    %vm287 = vcmask 7168
    %s288 = scalar_lea.vmem %s1, 35
    %289 = vst.msk [vmem:[%s288] ss:$144 sm:$0x3] %vm287, %v286
    %v290 = vld [vmem:[#allocation0] sm:$0x3]
    %291 = vrot.lane.b32.xlu0 %v290, 92
    %v292 = vpop.permute.xlu0 %291
    %vm293 = vcmask 7168
    %s294 = scalar_lea.vmem %s1, 36
    %295 = vst.msk [vmem:[%s294] ss:$144 sm:$0x3] %vm293, %v292
    %v296 = vld [vmem:[#allocation0] sm:$0x3]
    %297 = vrot.lane.b32.xlu0 %v296, 91
    %v298 = vpop.permute.xlu0 %297
    %vm299 = vcmask 7168
    %s300 = scalar_lea.vmem %s1, 37
    %301 = vst.msk [vmem:[%s300] ss:$144 sm:$0x3] %vm299, %v298
    %v302 = vld [vmem:[#allocation0] sm:$0x3]
    %303 = vrot.lane.b32.xlu0 %v302, 90
    %v304 = vpop.permute.xlu0 %303
    %vm305 = vcmask 7168
    %s306 = scalar_lea.vmem %s1, 38
    %307 = vst.msk [vmem:[%s306] ss:$144 sm:$0x3] %vm305, %v304
    %v308 = vld [vmem:[#allocation0] sm:$0x3]
    %309 = vrot.lane.b32.xlu0 %v308, 89
    %v310 = vpop.permute.xlu0 %309
    %vm311 = vcmask 7168
    %s312 = scalar_lea.vmem %s1, 39
    %313 = vst.msk [vmem:[%s312] ss:$144 sm:$0x3] %vm311, %v310
    %v314 = vld [vmem:[#allocation0] sm:$0x3]
    %315 = vrot.lane.b32.xlu0 %v314, 88
    %v316 = vpop.permute.xlu0 %315
    %vm317 = vcmask 7168
    %s318 = scalar_lea.vmem %s1, 40
    %319 = vst.msk [vmem:[%s318] ss:$144 sm:$0x3] %vm317, %v316
    %v320 = vld [vmem:[#allocation0] sm:$0x3]
    %321 = vrot.lane.b32.xlu0 %v320, 87
    %v322 = vpop.permute.xlu0 %321
    %vm323 = vcmask 7168
    %s324 = scalar_lea.vmem %s1, 41
    %325 = vst.msk [vmem:[%s324] ss:$144 sm:$0x3] %vm323, %v322
    %v326 = vld [vmem:[#allocation0] sm:$0x3]
    %327 = vrot.lane.b32.xlu0 %v326, 86
    %v328 = vpop.permute.xlu0 %327
    %vm329 = vcmask 7168
    %s330 = scalar_lea.vmem %s1, 42
    %331 = vst.msk [vmem:[%s330] ss:$144 sm:$0x3] %vm329, %v328
    %v332 = vld [vmem:[#allocation0] sm:$0x3]
    %333 = vrot.lane.b32.xlu0 %v332, 85
    %v334 = vpop.permute.xlu0 %333
    %vm335 = vcmask 7168
    %s336 = scalar_lea.vmem %s1, 43
    %337 = vst.msk [vmem:[%s336] ss:$144 sm:$0x3] %vm335, %v334
    %v338 = vld [vmem:[#allocation0] sm:$0x3]
    %339 = vrot.lane.b32.xlu0 %v338, 84
    %v340 = vpop.permute.xlu0 %339
    %vm341 = vcmask 7168
    %s342 = scalar_lea.vmem %s1, 44
    %343 = vst.msk [vmem:[%s342] ss:$144 sm:$0x3] %vm341, %v340
    %v344 = vld [vmem:[#allocation0] sm:$0x3]
    %345 = vrot.lane.b32.xlu0 %v344, 83
    %v346 = vpop.permute.xlu0 %345
    %vm347 = vcmask 7168
    %s348 = scalar_lea.vmem %s1, 45
    %349 = vst.msk [vmem:[%s348] ss:$144 sm:$0x3] %vm347, %v346
    %v350 = vld [vmem:[#allocation0] sm:$0x3]
    %351 = vrot.lane.b32.xlu0 %v350, 82
    %v352 = vpop.permute.xlu0 %351
    %vm353 = vcmask 7168
    %s354 = scalar_lea.vmem %s1, 46
    %355 = vst.msk [vmem:[%s354] ss:$144 sm:$0x3] %vm353, %v352
    %v356 = vld [vmem:[#allocation0] sm:$0x3]
    %357 = vrot.lane.b32.xlu0 %v356, 81
    %v358 = vpop.permute.xlu0 %357
    %vm359 = vcmask 7168
    %s360 = scalar_lea.vmem %s1, 47
    %361 = vst.msk [vmem:[%s360] ss:$144 sm:$0x3] %vm359, %v358
    %s362 = scalar_lea.vmem [#allocation0], 1
    %s363 = smov 3
    %v364 = vld [vmem:[%s362] ss:$-1 sm:%s363]
    %365 = vrot.lane.b32.xlu0 %v364, 80
    %v366 = vpop.permute.xlu0 %365
    %vm367 = vcmask 7168
    %s368 = scalar_lea.vmem %s1, 192
    %369 = vst.msk [vmem:[%s368] ss:$-144 sm:$0x3] %vm367, %v366
    %s370 = scalar_lea.vmem [#allocation0], 1
    %s371 = smov 3
    %v372 = vld [vmem:[%s370] ss:$-1 sm:%s371]
    %373 = vrot.lane.b32.xlu0 %v372, 79
    %v374 = vpop.permute.xlu0 %373
    %vm375 = vcmask 7168
    %s376 = scalar_lea.vmem %s1, 193
    %377 = vst.msk [vmem:[%s376] ss:$-144 sm:$0x3] %vm375, %v374
    %s378 = scalar_lea.vmem [#allocation0], 1
    %s379 = smov 3
    %v380 = vld [vmem:[%s378] ss:$-1 sm:%s379]
    %381 = vrot.lane.b32.xlu0 %v380, 78
    %v382 = vpop.permute.xlu0 %381
    %vm383 = vcmask 7168
    %s384 = scalar_lea.vmem %s1, 194
    %385 = vst.msk [vmem:[%s384] ss:$-144 sm:$0x3] %vm383, %v382
    %s386 = scalar_lea.vmem [#allocation0], 1
    %s387 = smov 3
    %v388 = vld [vmem:[%s386] ss:$-1 sm:%s387]
    %389 = vrot.lane.b32.xlu0 %v388, 77
    %v390 = vpop.permute.xlu0 %389
    %vm391 = vcmask 7168
    %s392 = scalar_lea.vmem %s1, 195
    %393 = vst.msk [vmem:[%s392] ss:$-144 sm:$0x3] %vm391, %v390
    %s394 = scalar_lea.vmem [#allocation0], 1
    %s395 = smov 3
    %v396 = vld [vmem:[%s394] ss:$-1 sm:%s395]
    %397 = vrot.lane.b32.xlu0 %v396, 76
    %v398 = vpop.permute.xlu0 %397
    %vm399 = vcmask 7168
    %s400 = scalar_lea.vmem %s1, 196
    %401 = vst.msk [vmem:[%s400] ss:$-144 sm:$0x3] %vm399, %v398
    %s402 = scalar_lea.vmem [#allocation0], 1
    %s403 = smov 3
    %v404 = vld [vmem:[%s402] ss:$-1 sm:%s403]
    %405 = vrot.lane.b32.xlu0 %v404, 75
    %v406 = vpop.permute.xlu0 %405
    %vm407 = vcmask 7168
    %s408 = scalar_lea.vmem %s1, 197
    %409 = vst.msk [vmem:[%s408] ss:$-144 sm:$0x3] %vm407, %v406
    %s410 = scalar_lea.vmem [#allocation0], 1
    %s411 = smov 3
    %v412 = vld [vmem:[%s410] ss:$-1 sm:%s411]
    %413 = vrot.lane.b32.xlu0 %v412, 74
    %v414 = vpop.permute.xlu0 %413
    %vm415 = vcmask 7168
    %s416 = scalar_lea.vmem %s1, 198
    %417 = vst.msk [vmem:[%s416] ss:$-144 sm:$0x3] %vm415, %v414
    %s418 = scalar_lea.vmem [#allocation0], 1
    %s419 = smov 3
    %v420 = vld [vmem:[%s418] ss:$-1 sm:%s419]
    %421 = vrot.lane.b32.xlu0 %v420, 73
    %v422 = vpop.permute.xlu0 %421
    %vm423 = vcmask 7168
    %s424 = scalar_lea.vmem %s1, 199
    %425 = vst.msk [vmem:[%s424] ss:$-144 sm:$0x3] %vm423, %v422
    %s426 = scalar_lea.vmem [#allocation0], 1
    %s427 = smov 3
    %v428 = vld [vmem:[%s426] ss:$-1 sm:%s427]
    %429 = vrot.lane.b32.xlu0 %v428, 72
    %v430 = vpop.permute.xlu0 %429
    %vm431 = vcmask 7168
    %s432 = scalar_lea.vmem %s1, 200
    %433 = vst.msk [vmem:[%s432] ss:$-144 sm:$0x3] %vm431, %v430
    %s434 = scalar_lea.vmem [#allocation0], 1
    %s435 = smov 3
    %v436 = vld [vmem:[%s434] ss:$-1 sm:%s435]
    %437 = vrot.lane.b32.xlu0 %v436, 71
    %v438 = vpop.permute.xlu0 %437
    %vm439 = vcmask 7168
    %s440 = scalar_lea.vmem %s1, 201
    %441 = vst.msk [vmem:[%s440] ss:$-144 sm:$0x3] %vm439, %v438
    %s442 = scalar_lea.vmem [#allocation0], 1
    %s443 = smov 3
    %v444 = vld [vmem:[%s442] ss:$-1 sm:%s443]
    %445 = vrot.lane.b32.xlu0 %v444, 70
    %v446 = vpop.permute.xlu0 %445
    %vm447 = vcmask 7168
    %s448 = scalar_lea.vmem %s1, 202
    %449 = vst.msk [vmem:[%s448] ss:$-144 sm:$0x3] %vm447, %v446
    %s450 = scalar_lea.vmem [#allocation0], 1
    %s451 = smov 3
    %v452 = vld [vmem:[%s450] ss:$-1 sm:%s451]
    %453 = vrot.lane.b32.xlu0 %v452, 69
    %v454 = vpop.permute.xlu0 %453
    %vm455 = vcmask 7168
    %s456 = scalar_lea.vmem %s1, 203
    %457 = vst.msk [vmem:[%s456] ss:$-144 sm:$0x3] %vm455, %v454
    %s458 = scalar_lea.vmem [#allocation0], 1
    %s459 = smov 3
    %v460 = vld [vmem:[%s458] ss:$-1 sm:%s459]
    %461 = vrot.lane.b32.xlu0 %v460, 68
    %v462 = vpop.permute.xlu0 %461
    %vm463 = vcmask 7168
    %s464 = scalar_lea.vmem %s1, 204
    %465 = vst.msk [vmem:[%s464] ss:$-144 sm:$0x3] %vm463, %v462
    %s466 = scalar_lea.vmem [#allocation0], 1
    %s467 = smov 3
    %v468 = vld [vmem:[%s466] ss:$-1 sm:%s467]
    %469 = vrot.lane.b32.xlu0 %v468, 67
    %v470 = vpop.permute.xlu0 %469
    %vm471 = vcmask 7168
    %s472 = scalar_lea.vmem %s1, 205
    %473 = vst.msk [vmem:[%s472] ss:$-144 sm:$0x3] %vm471, %v470
    %s474 = scalar_lea.vmem [#allocation0], 1
    %s475 = smov 3
    %v476 = vld [vmem:[%s474] ss:$-1 sm:%s475]
    %477 = vrot.lane.b32.xlu0 %v476, 66
    %v478 = vpop.permute.xlu0 %477
    %vm479 = vcmask 7168
    %s480 = scalar_lea.vmem %s1, 206
    %481 = vst.msk [vmem:[%s480] ss:$-144 sm:$0x3] %vm479, %v478
    %s482 = scalar_lea.vmem [#allocation0], 1
    %s483 = smov 3
    %v484 = vld [vmem:[%s482] ss:$-1 sm:%s483]
    %485 = vrot.lane.b32.xlu0 %v484, 65
    %v486 = vpop.permute.xlu0 %485
    %vm487 = vcmask 7168
    %s488 = scalar_lea.vmem %s1, 207
    %489 = vst.msk [vmem:[%s488] ss:$-144 sm:$0x3] %vm487, %v486
    %v490 = vld [vmem:[#allocation0] sm:$0x3]
    %491 = vrot.lane.b32.xlu0 %v490, 64
    %v492 = vpop.permute.xlu0 %491
    %vm493 = vcmask 7168
    %s494 = scalar_lea.vmem %s1, 64
    %495 = vst.msk [vmem:[%s494] ss:$144 sm:$0x3] %vm493, %v492
    %v496 = vld [vmem:[#allocation0] sm:$0x3]
    %497 = vrot.lane.b32.xlu0 %v496, 63
    %v498 = vpop.permute.xlu0 %497
    %vm499 = vcmask 7168
    %s500 = scalar_lea.vmem %s1, 65
    %501 = vst.msk [vmem:[%s500] ss:$144 sm:$0x3] %vm499, %v498
    %v502 = vld [vmem:[#allocation0] sm:$0x3]
    %503 = vrot.lane.b32.xlu0 %v502, 62
    %v504 = vpop.permute.xlu0 %503
    %vm505 = vcmask 7168
    %s506 = scalar_lea.vmem %s1, 66
    %507 = vst.msk [vmem:[%s506] ss:$144 sm:$0x3] %vm505, %v504
    %v508 = vld [vmem:[#allocation0] sm:$0x3]
    %509 = vrot.lane.b32.xlu0 %v508, 61
    %v510 = vpop.permute.xlu0 %509
    %vm511 = vcmask 7168
    %s512 = scalar_lea.vmem %s1, 67
    %513 = vst.msk [vmem:[%s512] ss:$144 sm:$0x3] %vm511, %v510
    %v514 = vld [vmem:[#allocation0] sm:$0x3]
    %515 = vrot.lane.b32.xlu0 %v514, 60
    %v516 = vpop.permute.xlu0 %515
    %vm517 = vcmask 7168
    %s518 = scalar_lea.vmem %s1, 68
    %519 = vst.msk [vmem:[%s518] ss:$144 sm:$0x3] %vm517, %v516
    %v520 = vld [vmem:[#allocation0] sm:$0x3]
    %521 = vrot.lane.b32.xlu0 %v520, 59
    %v522 = vpop.permute.xlu0 %521
    %vm523 = vcmask 7168
    %s524 = scalar_lea.vmem %s1, 69
    %525 = vst.msk [vmem:[%s524] ss:$144 sm:$0x3] %vm523, %v522
    %v526 = vld [vmem:[#allocation0] sm:$0x3]
    %527 = vrot.lane.b32.xlu0 %v526, 58
    %v528 = vpop.permute.xlu0 %527
    %vm529 = vcmask 7168
    %s530 = scalar_lea.vmem %s1, 70
    %531 = vst.msk [vmem:[%s530] ss:$144 sm:$0x3] %vm529, %v528
    %v532 = vld [vmem:[#allocation0] sm:$0x3]
    %533 = vrot.lane.b32.xlu0 %v532, 57
    %v534 = vpop.permute.xlu0 %533
    %vm535 = vcmask 7168
    %s536 = scalar_lea.vmem %s1, 71
    %537 = vst.msk [vmem:[%s536] ss:$144 sm:$0x3] %vm535, %v534
    %v538 = vld [vmem:[#allocation0] sm:$0x3]
    %539 = vrot.lane.b32.xlu0 %v538, 56
    %v540 = vpop.permute.xlu0 %539
    %vm541 = vcmask 7168
    %s542 = scalar_lea.vmem %s1, 72
    %543 = vst.msk [vmem:[%s542] ss:$144 sm:$0x3] %vm541, %v540
    %v544 = vld [vmem:[#allocation0] sm:$0x3]
    %545 = vrot.lane.b32.xlu0 %v544, 55
    %v546 = vpop.permute.xlu0 %545
    %vm547 = vcmask 7168
    %s548 = scalar_lea.vmem %s1, 73
    %549 = vst.msk [vmem:[%s548] ss:$144 sm:$0x3] %vm547, %v546
    %v550 = vld [vmem:[#allocation0] sm:$0x3]
    %551 = vrot.lane.b32.xlu0 %v550, 54
    %v552 = vpop.permute.xlu0 %551
    %vm553 = vcmask 7168
    %s554 = scalar_lea.vmem %s1, 74
    %555 = vst.msk [vmem:[%s554] ss:$144 sm:$0x3] %vm553, %v552
    %v556 = vld [vmem:[#allocation0] sm:$0x3]
    %557 = vrot.lane.b32.xlu0 %v556, 53
    %v558 = vpop.permute.xlu0 %557
    %vm559 = vcmask 7168
    %s560 = scalar_lea.vmem %s1, 75
    %561 = vst.msk [vmem:[%s560] ss:$144 sm:$0x3] %vm559, %v558
    %v562 = vld [vmem:[#allocation0] sm:$0x3]
    %563 = vrot.lane.b32.xlu0 %v562, 52
    %v564 = vpop.permute.xlu0 %563
    %vm565 = vcmask 7168
    %s566 = scalar_lea.vmem %s1, 76
    %567 = vst.msk [vmem:[%s566] ss:$144 sm:$0x3] %vm565, %v564
    %v568 = vld [vmem:[#allocation0] sm:$0x3]
    %569 = vrot.lane.b32.xlu0 %v568, 51
    %v570 = vpop.permute.xlu0 %569
    %vm571 = vcmask 7168
    %s572 = scalar_lea.vmem %s1, 77
    %573 = vst.msk [vmem:[%s572] ss:$144 sm:$0x3] %vm571, %v570
    %v574 = vld [vmem:[#allocation0] sm:$0x3]
    %575 = vrot.lane.b32.xlu0 %v574, 50
    %v576 = vpop.permute.xlu0 %575
    %vm577 = vcmask 7168
    %s578 = scalar_lea.vmem %s1, 78
    %579 = vst.msk [vmem:[%s578] ss:$144 sm:$0x3] %vm577, %v576
    %v580 = vld [vmem:[#allocation0] sm:$0x3]
    %581 = vrot.lane.b32.xlu0 %v580, 49
    %v582 = vpop.permute.xlu0 %581
    %vm583 = vcmask 7168
    %s584 = scalar_lea.vmem %s1, 79
    %585 = vst.msk [vmem:[%s584] ss:$144 sm:$0x3] %vm583, %v582
    %s586 = scalar_lea.vmem [#allocation0], 1
    %s587 = smov 3
    %v588 = vld [vmem:[%s586] ss:$-1 sm:%s587]
    %589 = vrot.lane.b32.xlu0 %v588, 48
    %v590 = vpop.permute.xlu0 %589
    %vm591 = vcmask 7168
    %s592 = scalar_lea.vmem %s1, 224
    %593 = vst.msk [vmem:[%s592] ss:$-144 sm:$0x3] %vm591, %v590
    %s594 = scalar_lea.vmem [#allocation0], 1
    %s595 = smov 3
    %v596 = vld [vmem:[%s594] ss:$-1 sm:%s595]
    %597 = vrot.lane.b32.xlu0 %v596, 47
    %v598 = vpop.permute.xlu0 %597
    %vm599 = vcmask 7168
    %s600 = scalar_lea.vmem %s1, 225
    %601 = vst.msk [vmem:[%s600] ss:$-144 sm:$0x3] %vm599, %v598
    %s602 = scalar_lea.vmem [#allocation0], 1
    %s603 = smov 3
    %v604 = vld [vmem:[%s602] ss:$-1 sm:%s603]
    %605 = vrot.lane.b32.xlu0 %v604, 46
    %v606 = vpop.permute.xlu0 %605
    %vm607 = vcmask 7168
    %s608 = scalar_lea.vmem %s1, 226
    %609 = vst.msk [vmem:[%s608] ss:$-144 sm:$0x3] %vm607, %v606
    %s610 = scalar_lea.vmem [#allocation0], 1
    %s611 = smov 3
    %v612 = vld [vmem:[%s610] ss:$-1 sm:%s611]
    %613 = vrot.lane.b32.xlu0 %v612, 45
    %v614 = vpop.permute.xlu0 %613
    %vm615 = vcmask 7168
    %s616 = scalar_lea.vmem %s1, 227
    %617 = vst.msk [vmem:[%s616] ss:$-144 sm:$0x3] %vm615, %v614
    %s618 = scalar_lea.vmem [#allocation0], 1
    %s619 = smov 3
    %v620 = vld [vmem:[%s618] ss:$-1 sm:%s619]
    %621 = vrot.lane.b32.xlu0 %v620, 44
    %v622 = vpop.permute.xlu0 %621
    %vm623 = vcmask 7168
    %s624 = scalar_lea.vmem %s1, 228
    %625 = vst.msk [vmem:[%s624] ss:$-144 sm:$0x3] %vm623, %v622
    %s626 = scalar_lea.vmem [#allocation0], 1
    %s627 = smov 3
    %v628 = vld [vmem:[%s626] ss:$-1 sm:%s627]
    %629 = vrot.lane.b32.xlu0 %v628, 43
    %v630 = vpop.permute.xlu0 %629
    %vm631 = vcmask 7168
    %s632 = scalar_lea.vmem %s1, 229
    %633 = vst.msk [vmem:[%s632] ss:$-144 sm:$0x3] %vm631, %v630
    %s634 = scalar_lea.vmem [#allocation0], 1
    %s635 = smov 3
    %v636 = vld [vmem:[%s634] ss:$-1 sm:%s635]
    %637 = vrot.lane.b32.xlu0 %v636, 42
    %v638 = vpop.permute.xlu0 %637
    %vm639 = vcmask 7168
    %s640 = scalar_lea.vmem %s1, 230
    %641 = vst.msk [vmem:[%s640] ss:$-144 sm:$0x3] %vm639, %v638
    %s642 = scalar_lea.vmem [#allocation0], 1
    %s643 = smov 3
    %v644 = vld [vmem:[%s642] ss:$-1 sm:%s643]
    %645 = vrot.lane.b32.xlu0 %v644, 41
    %v646 = vpop.permute.xlu0 %645
    %vm647 = vcmask 7168
    %s648 = scalar_lea.vmem %s1, 231
    %649 = vst.msk [vmem:[%s648] ss:$-144 sm:$0x3] %vm647, %v646
    %s650 = scalar_lea.vmem [#allocation0], 1
    %s651 = smov 3
    %v652 = vld [vmem:[%s650] ss:$-1 sm:%s651]
    %653 = vrot.lane.b32.xlu0 %v652, 40
    %v654 = vpop.permute.xlu0 %653
    %vm655 = vcmask 7168
    %s656 = scalar_lea.vmem %s1, 232
    %657 = vst.msk [vmem:[%s656] ss:$-144 sm:$0x3] %vm655, %v654
    %s658 = scalar_lea.vmem [#allocation0], 1
    %s659 = smov 3
    %v660 = vld [vmem:[%s658] ss:$-1 sm:%s659]
    %661 = vrot.lane.b32.xlu0 %v660, 39
    %v662 = vpop.permute.xlu0 %661
    %vm663 = vcmask 7168
    %s664 = scalar_lea.vmem %s1, 233
    %665 = vst.msk [vmem:[%s664] ss:$-144 sm:$0x3] %vm663, %v662
    %s666 = scalar_lea.vmem [#allocation0], 1
    %s667 = smov 3
    %v668 = vld [vmem:[%s666] ss:$-1 sm:%s667]
    %669 = vrot.lane.b32.xlu0 %v668, 38
    %v670 = vpop.permute.xlu0 %669
    %vm671 = vcmask 7168
    %s672 = scalar_lea.vmem %s1, 234
    %673 = vst.msk [vmem:[%s672] ss:$-144 sm:$0x3] %vm671, %v670
    %s674 = scalar_lea.vmem [#allocation0], 1
    %s675 = smov 3
    %v676 = vld [vmem:[%s674] ss:$-1 sm:%s675]
    %677 = vrot.lane.b32.xlu0 %v676, 37
    %v678 = vpop.permute.xlu0 %677
    %vm679 = vcmask 7168
    %s680 = scalar_lea.vmem %s1, 235
    %681 = vst.msk [vmem:[%s680] ss:$-144 sm:$0x3] %vm679, %v678
    %s682 = scalar_lea.vmem [#allocation0], 1
    %s683 = smov 3
    %v684 = vld [vmem:[%s682] ss:$-1 sm:%s683]
    %685 = vrot.lane.b32.xlu0 %v684, 36
    %v686 = vpop.permute.xlu0 %685
    %vm687 = vcmask 7168
    %s688 = scalar_lea.vmem %s1, 236
    %689 = vst.msk [vmem:[%s688] ss:$-144 sm:$0x3] %vm687, %v686
    %s690 = scalar_lea.vmem [#allocation0], 1
    %s691 = smov 3
    %v692 = vld [vmem:[%s690] ss:$-1 sm:%s691]
    %693 = vrot.lane.b32.xlu0 %v692, 35
    %v694 = vpop.permute.xlu0 %693
    %vm695 = vcmask 7168
    %s696 = scalar_lea.vmem %s1, 237
    %697 = vst.msk [vmem:[%s696] ss:$-144 sm:$0x3] %vm695, %v694
    %s698 = scalar_lea.vmem [#allocation0], 1
    %s699 = smov 3
    %v700 = vld [vmem:[%s698] ss:$-1 sm:%s699]
    %701 = vrot.lane.b32.xlu0 %v700, 34
    %v702 = vpop.permute.xlu0 %701
    %vm703 = vcmask 7168
    %s704 = scalar_lea.vmem %s1, 238
    %705 = vst.msk [vmem:[%s704] ss:$-144 sm:$0x3] %vm703, %v702
    %s706 = scalar_lea.vmem [#allocation0], 1
    %s707 = smov 3
    %v708 = vld [vmem:[%s706] ss:$-1 sm:%s707]
    %709 = vrot.lane.b32.xlu0 %v708, 33
    %v710 = vpop.permute.xlu0 %709
    %vm711 = vcmask 7168
    %s712 = scalar_lea.vmem %s1, 239
    %713 = vst.msk [vmem:[%s712] ss:$-144 sm:$0x3] %vm711, %v710
    %v714 = vld [vmem:[#allocation0] sm:$0x3]
    %715 = vrot.lane.b32.xlu0 %v714, 32
    %v716 = vpop.permute.xlu0 %715
    %vm717 = vcmask 7168
    %s718 = scalar_lea.vmem %s1, 96
    %719 = vst.msk [vmem:[%s718] ss:$144 sm:$0x3] %vm717, %v716
    %v720 = vld [vmem:[#allocation0] sm:$0x3]
    %721 = vrot.lane.b32.xlu0 %v720, 31
    %v722 = vpop.permute.xlu0 %721
    %vm723 = vcmask 7168
    %s724 = scalar_lea.vmem %s1, 97
    %725 = vst.msk [vmem:[%s724] ss:$144 sm:$0x3] %vm723, %v722
    %v726 = vld [vmem:[#allocation0] sm:$0x3]
    %727 = vrot.lane.b32.xlu0 %v726, 30
    %v728 = vpop.permute.xlu0 %727
    %vm729 = vcmask 7168
    %s730 = scalar_lea.vmem %s1, 98
    %731 = vst.msk [vmem:[%s730] ss:$144 sm:$0x3] %vm729, %v728
    %v732 = vld [vmem:[#allocation0] sm:$0x3]
    %733 = vrot.lane.b32.xlu0 %v732, 29
    %v734 = vpop.permute.xlu0 %733
    %vm735 = vcmask 7168
    %s736 = scalar_lea.vmem %s1, 99
    %737 = vst.msk [vmem:[%s736] ss:$144 sm:$0x3] %vm735, %v734
    %v738 = vld [vmem:[#allocation0] sm:$0x3]
    %739 = vrot.lane.b32.xlu0 %v738, 28
    %v740 = vpop.permute.xlu0 %739
    %vm741 = vcmask 7168
    %s742 = scalar_lea.vmem %s1, 100
    %743 = vst.msk [vmem:[%s742] ss:$144 sm:$0x3] %vm741, %v740
    %v744 = vld [vmem:[#allocation0] sm:$0x3]
    %745 = vrot.lane.b32.xlu0 %v744, 27
    %v746 = vpop.permute.xlu0 %745
    %vm747 = vcmask 7168
    %s748 = scalar_lea.vmem %s1, 101
    %749 = vst.msk [vmem:[%s748] ss:$144 sm:$0x3] %vm747, %v746
    %v750 = vld [vmem:[#allocation0] sm:$0x3]
    %751 = vrot.lane.b32.xlu0 %v750, 26
    %v752 = vpop.permute.xlu0 %751
    %vm753 = vcmask 7168
    %s754 = scalar_lea.vmem %s1, 102
    %755 = vst.msk [vmem:[%s754] ss:$144 sm:$0x3] %vm753, %v752
    %v756 = vld [vmem:[#allocation0] sm:$0x3]
    %757 = vrot.lane.b32.xlu0 %v756, 25
    %v758 = vpop.permute.xlu0 %757
    %vm759 = vcmask 7168
    %s760 = scalar_lea.vmem %s1, 103
    %761 = vst.msk [vmem:[%s760] ss:$144 sm:$0x3] %vm759, %v758
    %v762 = vld [vmem:[#allocation0] sm:$0x3]
    %763 = vrot.lane.b32.xlu0 %v762, 24
    %v764 = vpop.permute.xlu0 %763
    %vm765 = vcmask 7168
    %s766 = scalar_lea.vmem %s1, 104
    %767 = vst.msk [vmem:[%s766] ss:$144 sm:$0x3] %vm765, %v764
    %v768 = vld [vmem:[#allocation0] sm:$0x3]
    %769 = vrot.lane.b32.xlu0 %v768, 23
    %v770 = vpop.permute.xlu0 %769
    %vm771 = vcmask 7168
    %s772 = scalar_lea.vmem %s1, 105
    %773 = vst.msk [vmem:[%s772] ss:$144 sm:$0x3] %vm771, %v770
    %v774 = vld [vmem:[#allocation0] sm:$0x3]
    %775 = vrot.lane.b32.xlu0 %v774, 22
    %v776 = vpop.permute.xlu0 %775
    %vm777 = vcmask 7168
    %s778 = scalar_lea.vmem %s1, 106
    %779 = vst.msk [vmem:[%s778] ss:$144 sm:$0x3] %vm777, %v776
    %v780 = vld [vmem:[#allocation0] sm:$0x3]
    %781 = vrot.lane.b32.xlu0 %v780, 21
    %v782 = vpop.permute.xlu0 %781
    %vm783 = vcmask 7168
    %s784 = scalar_lea.vmem %s1, 107
    %785 = vst.msk [vmem:[%s784] ss:$144 sm:$0x3] %vm783, %v782
    %v786 = vld [vmem:[#allocation0] sm:$0x3]
    %787 = vrot.lane.b32.xlu0 %v786, 20
    %v788 = vpop.permute.xlu0 %787
    %vm789 = vcmask 7168
    %s790 = scalar_lea.vmem %s1, 108
    %791 = vst.msk [vmem:[%s790] ss:$144 sm:$0x3] %vm789, %v788
    %v792 = vld [vmem:[#allocation0] sm:$0x3]
    %793 = vrot.lane.b32.xlu0 %v792, 19
    %v794 = vpop.permute.xlu0 %793
    %vm795 = vcmask 7168
    %s796 = scalar_lea.vmem %s1, 109
    %797 = vst.msk [vmem:[%s796] ss:$144 sm:$0x3] %vm795, %v794
    %v798 = vld [vmem:[#allocation0] sm:$0x3]
    %799 = vrot.lane.b32.xlu0 %v798, 18
    %v800 = vpop.permute.xlu0 %799
    %vm801 = vcmask 7168
    %s802 = scalar_lea.vmem %s1, 110
    %803 = vst.msk [vmem:[%s802] ss:$144 sm:$0x3] %vm801, %v800
    %v804 = vld [vmem:[#allocation0] sm:$0x3]
    %805 = vrot.lane.b32.xlu0 %v804, 17
    %v806 = vpop.permute.xlu0 %805
    %vm807 = vcmask 7168
    %s808 = scalar_lea.vmem %s1, 111
    %809 = vst.msk [vmem:[%s808] ss:$144 sm:$0x3] %vm807, %v806
    %s810 = scalar_lea.vmem [#allocation0], 1
    %s811 = smov 3
    %v812 = vld [vmem:[%s810] ss:$-1 sm:%s811]
    %813 = vrot.lane.b32.xlu0 %v812, 16
    %v814 = vpop.permute.xlu0 %813
    %vm815 = vcmask 7168
    %s816 = scalar_lea.vmem %s1, 256
    %817 = vst.msk [vmem:[%s816] ss:$-144 sm:$0x3] %vm815, %v814
    %s818 = scalar_lea.vmem [#allocation0], 1
    %s819 = smov 3
    %v820 = vld [vmem:[%s818] ss:$-1 sm:%s819]
    %821 = vrot.lane.b32.xlu0 %v820, 15
    %v822 = vpop.permute.xlu0 %821
    %vm823 = vcmask 7168
    %s824 = scalar_lea.vmem %s1, 257
    %825 = vst.msk [vmem:[%s824] ss:$-144 sm:$0x3] %vm823, %v822
    %s826 = scalar_lea.vmem [#allocation0], 1
    %s827 = smov 3
    %v828 = vld [vmem:[%s826] ss:$-1 sm:%s827]
    %829 = vrot.lane.b32.xlu0 %v828, 14
    %v830 = vpop.permute.xlu0 %829
    %vm831 = vcmask 7168
    %s832 = scalar_lea.vmem %s1, 258
    %833 = vst.msk [vmem:[%s832] ss:$-144 sm:$0x3] %vm831, %v830
    %s834 = scalar_lea.vmem [#allocation0], 1
    %s835 = smov 3
    %v836 = vld [vmem:[%s834] ss:$-1 sm:%s835]
    %837 = vrot.lane.b32.xlu0 %v836, 13
    %v838 = vpop.permute.xlu0 %837
    %vm839 = vcmask 7168
    %s840 = scalar_lea.vmem %s1, 259
    %841 = vst.msk [vmem:[%s840] ss:$-144 sm:$0x3] %vm839, %v838
    %s842 = scalar_lea.vmem [#allocation0], 1
    %s843 = smov 3
    %v844 = vld [vmem:[%s842] ss:$-1 sm:%s843]
    %845 = vrot.lane.b32.xlu0 %v844, 12
    %v846 = vpop.permute.xlu0 %845
    %vm847 = vcmask 7168
    %s848 = scalar_lea.vmem %s1, 260
    %849 = vst.msk [vmem:[%s848] ss:$-144 sm:$0x3] %vm847, %v846
    %s850 = scalar_lea.vmem [#allocation0], 1
    %s851 = smov 3
    %v852 = vld [vmem:[%s850] ss:$-1 sm:%s851]
    %853 = vrot.lane.b32.xlu0 %v852, 11
    %v854 = vpop.permute.xlu0 %853
    %vm855 = vcmask 7168
    %s856 = scalar_lea.vmem %s1, 261
    %857 = vst.msk [vmem:[%s856] ss:$-144 sm:$0x3] %vm855, %v854
    %s858 = scalar_lea.vmem [#allocation0], 1
    %s859 = smov 3
    %v860 = vld [vmem:[%s858] ss:$-1 sm:%s859]
    %861 = vrot.lane.b32.xlu0 %v860, 10
    %v862 = vpop.permute.xlu0 %861
    %vm863 = vcmask 7168
    %s864 = scalar_lea.vmem %s1, 262
    %865 = vst.msk [vmem:[%s864] ss:$-144 sm:$0x3] %vm863, %v862
    %s866 = scalar_lea.vmem [#allocation0], 1
    %s867 = smov 3
    %v868 = vld [vmem:[%s866] ss:$-1 sm:%s867]
    %869 = vrot.lane.b32.xlu0 %v868, 9
    %v870 = vpop.permute.xlu0 %869
    %vm871 = vcmask 7168
    %s872 = scalar_lea.vmem %s1, 263
    %873 = vst.msk [vmem:[%s872] ss:$-144 sm:$0x3] %vm871, %v870
    %s874 = scalar_lea.vmem [#allocation0], 1
    %s875 = smov 3
    %v876 = vld [vmem:[%s874] ss:$-1 sm:%s875]
    %877 = vrot.lane.b32.xlu0 %v876, 8
    %v878 = vpop.permute.xlu0 %877
    %vm879 = vcmask 7168
    %s880 = scalar_lea.vmem %s1, 264
    %881 = vst.msk [vmem:[%s880] ss:$-144 sm:$0x3] %vm879, %v878
    %s882 = scalar_lea.vmem [#allocation0], 1
    %s883 = smov 3
    %v884 = vld [vmem:[%s882] ss:$-1 sm:%s883]
    %885 = vrot.lane.b32.xlu0 %v884, 7
    %v886 = vpop.permute.xlu0 %885
    %vm887 = vcmask 7168
    %s888 = scalar_lea.vmem %s1, 265
    %889 = vst.msk [vmem:[%s888] ss:$-144 sm:$0x3] %vm887, %v886
    %s890 = scalar_lea.vmem [#allocation0], 1
    %s891 = smov 3
    %v892 = vld [vmem:[%s890] ss:$-1 sm:%s891]
    %893 = vrot.lane.b32.xlu0 %v892, 6
    %v894 = vpop.permute.xlu0 %893
    %vm895 = vcmask 7168
    %s896 = scalar_lea.vmem %s1, 266
    %897 = vst.msk [vmem:[%s896] ss:$-144 sm:$0x3] %vm895, %v894
    %s898 = scalar_lea.vmem [#allocation0], 1
    %s899 = smov 3
    %v900 = vld [vmem:[%s898] ss:$-1 sm:%s899]
    %901 = vrot.lane.b32.xlu0 %v900, 5
    %v902 = vpop.permute.xlu0 %901
    %vm903 = vcmask 7168
    %s904 = scalar_lea.vmem %s1, 267
    %905 = vst.msk [vmem:[%s904] ss:$-144 sm:$0x3] %vm903, %v902
    %s906 = scalar_lea.vmem [#allocation0], 1
    %s907 = smov 3
    %v908 = vld [vmem:[%s906] ss:$-1 sm:%s907]
    %909 = vrot.lane.b32.xlu0 %v908, 4
    %v910 = vpop.permute.xlu0 %909
    %vm911 = vcmask 7168
    %s912 = scalar_lea.vmem %s1, 268
    %913 = vst.msk [vmem:[%s912] ss:$-144 sm:$0x3] %vm911, %v910
    %s914 = scalar_lea.vmem [#allocation0], 1
    %s915 = smov 3
    %v916 = vld [vmem:[%s914] ss:$-1 sm:%s915]
    %917 = vrot.lane.b32.xlu0 %v916, 3
    %v918 = vpop.permute.xlu0 %917
    %vm919 = vcmask 7168
    %s920 = scalar_lea.vmem %s1, 269
    %921 = vst.msk [vmem:[%s920] ss:$-144 sm:$0x3] %vm919, %v918
    %s922 = scalar_lea.vmem [#allocation0], 1
    %s923 = smov 3
    %v924 = vld [vmem:[%s922] ss:$-1 sm:%s923]
    %925 = vrot.lane.b32.xlu0 %v924, 2
    %v926 = vpop.permute.xlu0 %925
    %vm927 = vcmask 7168
    %s928 = scalar_lea.vmem %s1, 270
    %929 = vst.msk [vmem:[%s928] ss:$-144 sm:$0x3] %vm927, %v926
    %s930 = scalar_lea.vmem [#allocation0], 1
    %s931 = smov 3
    %v932 = vld [vmem:[%s930] ss:$-1 sm:%s931]
    %933 = vrot.lane.b32.xlu0 %v932, 1
    %v934 = vpop.permute.xlu0 %933
    %vm935 = vcmask 7168
    %s936 = scalar_lea.vmem %s1, 271
    %937 = vst.msk [vmem:[%s936] ss:$-144 sm:$0x3] %vm935, %v934

// kernel: lenet_forward.1
$region0: #{lenet_forward.1}
  #allocation0 [shape = 'u32[]', space=smem, size = 0x4, offset = 0x4, fixed_abs, tag = 'smem constant byte address 0x4 - core index']
  #allocation1 [shape = 'u32[144,128]{1,0:T(1,128)}', space=vmem, size = 0x12000, scoped, tag = 'internal scratch']
  #allocation2 [shape = 'f32[864,2]{1,0:T(8,128)}', space=vmem, size = 0x6c000, scoped, tag = 'scratch operand']
  #allocation3 [shape = 'f32[256,2]{1,0:T(8,128)}', space=vmem, size = 0x20000, scoped, tag = 'scratch operand']
  %s0 = inlined_call_operand.vmem [shape: f32[784,2], index: 0, kind: input, shape index: {}]
  %s1 = inlined_call_operand.vmem [shape: bf16[288,168], index: 1, kind: input, shape index: {}]
  %s2 = inlined_call_operand.vmem [shape: f32[288,1], index: 2, kind: input, shape index: {}]
  %s3 = inlined_call_operand.vmem [shape: bf16[72,144], index: 3, kind: input, shape index: {}]
  %s4 = inlined_call_operand.vmem [shape: bf16[72,144], index: 4, kind: input, shape index: {}]
  %s5 = inlined_call_operand.vmem [shape: bf16[256,432], index: 5, kind: input, shape index: {}]
  %s6 = inlined_call_operand.vmem [shape: f32[256,1], index: 6, kind: input, shape index: {}]
  %s7 = inlined_call_operand.vmem [shape: bf16[64,128], index: 7, kind: input, shape index: {}]
  %s8 = inlined_call_operand.vmem [shape: bf16[64,128], index: 8, kind: input, shape index: {}]
  %s9 = inlined_call_operand.vmem [shape: bf16[120,256], index: 9, kind: input, shape index: {}]
  %s10 = inlined_call_operand.vmem [shape: f32[120,1], index: 10, kind: input, shape index: {}]
  %s11 = inlined_call_operand.vmem [shape: bf16[84,120], index: 11, kind: input, shape index: {}]
  %s12 = inlined_call_operand.vmem [shape: f32[84,1], index: 12, kind: input, shape index: {}]
  %s13 = inlined_call_operand.vmem [shape: bf16[10,84], index: 13, kind: input, shape index: {}]
  %s14 = inlined_call_operand.vmem [shape: f32[10,1], index: 14, kind: input, shape index: {}]
  %s15 = inlined_call_operand.vmem [shape: f32[10,2], index: 15, kind: output, shape index: {}]
  %s16 = sld [smem:[#allocation0]]
  $region77: #{lenet_forward.1} parent=0
    _
  %s18 = ssub.s32 1, %s16
  %s19 = scalar_select 0, %s18, %s16
  // Predicated region
  $region2: #{lenet_forward.1} parent=0 // pred_check
    _
  $region3: #{lenet_forward.1} parent=0 // pred_check_branch
    %21 = sbr.rel (0) target = $region5
  $region4: #{lenet_forward.1} parent=0 // pred_region
    _
  $region5: #{lenet_forward.1} parent=0 // pred_fallthru
    _
  // Predicated region
  $region6: #{lenet_forward.1} parent=0 // pred_check
    _
  $region7: #{lenet_forward.1} parent=0 // pred_check_branch
    %23 = sbr.rel (0) target = $region9
  $region8: #{lenet_forward.1} parent=0 // pred_region
    _
  $region9: #{lenet_forward.1} parent=0 // pred_fallthru
    _
  // Predicated region
  $region10: #{lenet_forward.1} parent=0 // pred_check
    _
  $region11: #{lenet_forward.1} parent=0 // pred_check_branch
    %25 = sbr.rel (0) target = $region13
  $region12: #{lenet_forward.1} parent=0 // pred_region
    _
  $region13: #{lenet_forward.1} parent=0 // pred_fallthru
    _
  // Predicated region
  $region14: #{lenet_forward.1} parent=0 // pred_check
    _
  $region15: #{lenet_forward.1} parent=0 // pred_check_branch
    %27 = sbr.rel (0) target = $region17
  $region16: #{lenet_forward.1} parent=0 // pred_region
    _
  $region17: #{lenet_forward.1} parent=0 // pred_fallthru
    _
  // Predicated region
  $region18: #{lenet_forward.1} parent=0 // pred_check
    _
  $region19: #{lenet_forward.1} parent=0 // pred_check_branch
    %29 = sbr.rel (0) target = $region21
  $region20: #{lenet_forward.1} parent=0 // pred_region
    _
  $region21: #{lenet_forward.1} parent=0 // pred_fallthru
    _
  // Predicated region
  $region22: #{lenet_forward.1} parent=0 // pred_check
    _
  $region23: #{lenet_forward.1} parent=0 // pred_check_branch
    %31 = sbr.rel (0) target = $region25
  $region24: #{lenet_forward.1} parent=0 // pred_region
    _
  $region25: #{lenet_forward.1} parent=0 // pred_fallthru
    _
  // Predicated region
  $region26: #{lenet_forward.1} parent=0 // pred_check
    _
  $region27: #{lenet_forward.1} parent=0 // pred_check_branch
    %33 = sbr.rel (0) target = $region29
  $region28: #{lenet_forward.1} parent=0 // pred_region
    _
  $region29: #{lenet_forward.1} parent=0 // pred_fallthru
    _
  // Predicated region
  $region30: #{lenet_forward.1} parent=0 // pred_check
    _
  $region31: #{lenet_forward.1} parent=0 // pred_check_branch
    %35 = sbr.rel (0) target = $region33
  $region32: #{lenet_forward.1} parent=0 // pred_region
    _
  $region33: #{lenet_forward.1} parent=0 // pred_fallthru
    _
  // Predicated region
  $region34: #{lenet_forward.1} parent=0 // pred_check
    _
  $region35: #{lenet_forward.1} parent=0 // pred_check_branch
    %37 = sbr.rel (0) target = $region37
  $region36: #{lenet_forward.1} parent=0 // pred_region
    _
  $region37: #{lenet_forward.1} parent=0 // pred_fallthru
    _
  // Predicated region
  $region38: #{lenet_forward.1} parent=0 // pred_check
    _
  $region39: #{lenet_forward.1} parent=0 // pred_check_branch
    %39 = sbr.rel (0) target = $region41
  $region40: #{lenet_forward.1} parent=0 // pred_region
    _
  $region41: #{lenet_forward.1} parent=0 // pred_fallthru
    _
  // Predicated region
  $region42: #{lenet_forward.1} parent=0 // pred_check
    _
  $region43: #{lenet_forward.1} parent=0 // pred_check_branch
    %41 = sbr.rel (0) target = $region45
  $region44: #{lenet_forward.1} parent=0 // pred_region
    _
  $region45: #{lenet_forward.1} parent=0 // pred_fallthru
    _
  // Predicated region
  $region46: #{lenet_forward.1} parent=0 // pred_check
    _
  $region47: #{lenet_forward.1} parent=0 // pred_check_branch
    %43 = sbr.rel (0) target = $region49
  $region48: #{lenet_forward.1} parent=0 // pred_region
    _
  $region49: #{lenet_forward.1} parent=0 // pred_fallthru
    _
  // Predicated region
  $region50: #{lenet_forward.1} parent=0 // pred_check
    _
  $region51: #{lenet_forward.1} parent=0 // pred_check_branch
    %45 = sbr.rel (0) target = $region53
  $region52: #{lenet_forward.1} parent=0 // pred_region
    _
  $region53: #{lenet_forward.1} parent=0 // pred_fallthru
    _
  // Predicated region
  $region54: #{lenet_forward.1} parent=0 // pred_check
    _
  $region55: #{lenet_forward.1} parent=0 // pred_check_branch
    %47 = sbr.rel (0) target = $region57
  $region56: #{lenet_forward.1} parent=0 // pred_region
    _
  $region57: #{lenet_forward.1} parent=0 // pred_fallthru
    _
  // Predicated region
  $region58: #{lenet_forward.1} parent=0 // pred_check
    _
  $region59: #{lenet_forward.1} parent=0 // pred_check_branch
    %49 = sbr.rel (0) target = $region61
  $region60: #{lenet_forward.1} parent=0 // pred_region
    _
  $region61: #{lenet_forward.1} parent=0 // pred_fallthru
    _
  %v51 = vld [vmem:[%s1] sm:$0xff]
  %v52 = vld [vmem:[%s1 + $0x8] sm:$0xff]
  %v53 = vld [vmem:[%s1 + $0x10] sm:$0xff]
  %v54 = vld [vmem:[%s1 + $0x18] sm:$0xff]
  %v55 = vld [vmem:[%s1 + $0x20] sm:$0xff]
  %v56 = vld [vmem:[%s1 + $0x28] sm:$0xff]
  %v57 = vld [vmem:[%s1 + $0x30] sm:$0xff]
  %v58 = vld [vmem:[%s1 + $0x38] sm:$0xff]
  %v59 = vld [vmem:[%s1 + $0x40] sm:$0xff]
  %v60 = vld [vmem:[%s1 + $0x48] sm:$0xff]
  %v61 = vld [vmem:[%s1 + $0x50] sm:$0xff]
  %v62 = vld [vmem:[%s1 + $0x58] sm:$0xff]
  %v63 = vld [vmem:[%s1 + $0x60] sm:$0xff]
  %v64 = vld [vmem:[%s1 + $0x68] sm:$0xff]
  %v65 = vld [vmem:[%s1 + $0x70] sm:$0xff]
  %v66 = vld [vmem:[%s1 + $0x78] sm:$0xff]
  %v67 = vld [vmem:[%s1 + $0x80] sm:$0xff]
  %v68 = vld [vmem:[%s1 + $0x88] sm:$0xff]
  %v69 = vld [vmem:[%s1 + $0x90] sm:$0xff]
  %v70 = vld [vmem:[%s1 + $0x98] sm:$0xff]
  %v71 = vld [vmem:[%s1 + $0xa0] sm:$0xff]
  %v72 = vld [vmem:[%s1 + $0xa8] sm:$0xff]
  %v73 = vld [vmem:[%s1 + $0xb0] sm:$0xff]
  %v74 = vld [vmem:[%s1 + $0xb8] sm:$0xff]
  %v75 = vld [vmem:[%s1 + $0xc0] sm:$0xff]
  %v76 = vld [vmem:[%s1 + $0xc8] sm:$0xff]
  %v77 = vld [vmem:[%s1 + $0xd0] sm:$0xff]
  %v78 = vld [vmem:[%s1 + $0xd8] sm:$0xff]
  %v79 = vld [vmem:[%s1 + $0xe0] sm:$0xff]
  %v80 = vld [vmem:[%s1 + $0xe8] sm:$0xff]
  %v81 = vld [vmem:[%s1 + $0xf0] sm:$0xff]
  %v82 = vld [vmem:[%s1 + $0xf8] sm:$0xff]
  %v83 = vld [vmem:[%s1 + $0x100] sm:$0xff]
  %v84 = vld [vmem:[%s1 + $0x108] sm:$0xff]
  %v85 = vld [vmem:[%s1 + $0x110] sm:$0xff]
  %v86 = vld [vmem:[%s1 + $0x118] sm:$0xff]
  %v87 = vld [vmem:[%s2] sm:$0xff]
  %v88 = vld [vmem:[%s2 + $0x8] sm:$0xff]
  %v89 = vld [vmem:[%s2 + $0x10] sm:$0xff]
  %v90 = vld [vmem:[%s2 + $0x18] sm:$0xff]
  %v91 = vld [vmem:[%s2 + $0x20] sm:$0xff]
  %v92 = vld [vmem:[%s2 + $0x28] sm:$0xff]
  %v93 = vld [vmem:[%s2 + $0x30] sm:$0xff]
  %v94 = vld [vmem:[%s2 + $0x38] sm:$0xff]
  %v95 = vld [vmem:[%s2 + $0x40] sm:$0xff]
  %v96 = vld [vmem:[%s2 + $0x48] sm:$0xff]
  %v97 = vld [vmem:[%s2 + $0x50] sm:$0xff]
  %v98 = vld [vmem:[%s2 + $0x58] sm:$0xff]
  %v99 = vld [vmem:[%s2 + $0x60] sm:$0xff]
  %v100 = vld [vmem:[%s2 + $0x68] sm:$0xff]
  %v101 = vld [vmem:[%s2 + $0x70] sm:$0xff]
  %v102 = vld [vmem:[%s2 + $0x78] sm:$0xff]
  %v103 = vld [vmem:[%s2 + $0x80] sm:$0xff]
  %v104 = vld [vmem:[%s2 + $0x88] sm:$0xff]
  %v105 = vld [vmem:[%s2 + $0x90] sm:$0xff]
  %v106 = vld [vmem:[%s2 + $0x98] sm:$0xff]
  %v107 = vld [vmem:[%s2 + $0xa0] sm:$0xff]
  %v108 = vld [vmem:[%s2 + $0xa8] sm:$0xff]
  %v109 = vld [vmem:[%s2 + $0xb0] sm:$0xff]
  %v110 = vld [vmem:[%s2 + $0xb8] sm:$0xff]
  %v111 = vld [vmem:[%s2 + $0xc0] sm:$0xff]
  %v112 = vld [vmem:[%s2 + $0xc8] sm:$0xff]
  %v113 = vld [vmem:[%s2 + $0xd0] sm:$0xff]
  %v114 = vld [vmem:[%s2 + $0xd8] sm:$0xff]
  %v115 = vld [vmem:[%s2 + $0xe0] sm:$0xff]
  %v116 = vld [vmem:[%s2 + $0xe8] sm:$0xff]
  %v117 = vld [vmem:[%s2 + $0xf0] sm:$0xff]
  %v118 = vld [vmem:[%s2 + $0xf8] sm:$0xff]
  %v119 = vld [vmem:[%s2 + $0x100] sm:$0xff]
  %v120 = vld [vmem:[%s2 + $0x108] sm:$0xff]
  %v121 = vld [vmem:[%s2 + $0x110] sm:$0xff]
  %v122 = vld [vmem:[%s2 + $0x118] sm:$0xff]
  %v123 = vld [vmem:[%s3] sm:$0xff]
  %v124 = vld [vmem:[%s3 + $0x8] sm:$0xff]
  %v125 = vld [vmem:[%s3 + $0x10] sm:$0xff]
  %v126 = vld [vmem:[%s3 + $0x18] sm:$0xff]
  %v127 = vld [vmem:[%s3 + $0x20] sm:$0xff]
  %v128 = vld [vmem:[%s3 + $0x28] sm:$0xff]
  %v129 = vld [vmem:[%s3 + $0x30] sm:$0xff]
  %v130 = vld [vmem:[%s3 + $0x38] sm:$0xff]
  %v131 = vld [vmem:[%s3 + $0x40] sm:$0xff]
  %v132 = vld [vmem:[%s4] sm:$0xff]
  %v133 = vld [vmem:[%s4 + $0x8] sm:$0xff]
  %v134 = vld [vmem:[%s4 + $0x10] sm:$0xff]
  %v135 = vld [vmem:[%s4 + $0x18] sm:$0xff]
  %v136 = vld [vmem:[%s4 + $0x20] sm:$0xff]
  %v137 = vld [vmem:[%s4 + $0x28] sm:$0xff]
  %v138 = vld [vmem:[%s4 + $0x30] sm:$0xff]
  %v139 = vld [vmem:[%s4 + $0x38] sm:$0xff]
  %v140 = vld [vmem:[%s4 + $0x40] sm:$0xff]
  loop: start=0, step=1, limit=12
  $region62: #{lenet_forward.1} parent=0 // loop_pre_header
    _
  $region63: #{lenet_forward.1} parent=0 // loop_header
    %s142 = sphi 0, %s146
    %p143 = scmp.ge.s32.totalorder %s142, 12
  $region64: #{lenet_forward.1} parent=0 // loop_header_branch
    %145 = sbr.rel (%p143) target = $region68
  $region65: #{lenet_forward.1} parent=0 // loop_body
    %s147 = smul.u32 %s142, 56
    %s148 = scalar_lea.vmem %s0, %s147
    %v149 = vld [vmem:[%s148] sm:$0xff]
    %v150 = vld [vmem:[%s148 + $0x8] sm:$0xff]
    %v151 = vld [vmem:[%s148 + $0x10] sm:$0xff]
    %v152 = vld [vmem:[%s148 + $0x18] sm:$0xff]
    %v153 = vld [vmem:[%s148 + $0x20] sm:$0xff]
    %v154 = vld [vmem:[%s148 + $0x28] sm:$0xff]
    %v155 = vld [vmem:[%s148 + $0x30] sm:$0xff]
    %v156 = vld [vmem:[%s148 + $0x38] sm:$0xff]
    %v157 = vld [vmem:[%s148 + $0x40] sm:$0xff]
    %v158 = vld [vmem:[%s148 + $0x48] sm:$0xff]
    %v159 = vld [vmem:[%s148 + $0x50] sm:$0xff]
    %v160 = vld [vmem:[%s148 + $0x58] sm:$0xff]
    %v161 = vld [vmem:[%s148 + $0x60] sm:$0xff]
    %v162 = vld [vmem:[%s148 + $0x68] sm:$0xff]
    %v163 = vld [vmem:[%s148 + $0x70] sm:$0xff]
    %v164 = vld [vmem:[%s148 + $0x78] sm:$0xff]
    %v165 = vld [vmem:[%s148 + $0x80] sm:$0xff]
    %v166 = vld [vmem:[%s148 + $0x88] sm:$0xff]
    %v167 = vld [vmem:[%s148 + $0x90] sm:$0xff]
    %v168 = vld [vmem:[%s148 + $0x98] sm:$0xff]
    %v169 = vld [vmem:[%s148 + $0xa0] sm:$0xff]
    %v170 = vpack.c.bf16 %v150, %v149
    %v171 = vpack.c.bf16 %v152, %v151
    %v172 = vpack.c.bf16 %v154, %v153
    %v173 = vpack.c.bf16 %v156, %v155
    %v174 = vpack.c.bf16 %v158, %v157
    %v175 = vpack.c.bf16 %v160, %v159
    %v176 = vpack.c.bf16 %v162, %v161
    %v177 = vpack.c.bf16 %v164, %v163
    %v178 = vpack.c.bf16 %v166, %v165
    %v179 = vpack.c.bf16 %v168, %v167
    %v180 = vpack.c.bf16 %v169, %v169
    %182 = vset.pattern.permute.xlu0 0
    %183 = vperm.xlu0 %182, %v87
    %v184 = vpop.permute.xlu0 %183
    %187 = vset.pattern.permute.xlu0 0
    %188 = vperm.xlu0 %187, %v88
    %v189 = vpop.permute.xlu0 %188
    %192 = vset.pattern.permute.xlu0 0
    %193 = vperm.xlu0 %192, %v89
    %v194 = vpop.permute.xlu0 %193
    %197 = vset.pattern.permute.xlu0 0
    %198 = vperm.xlu0 %197, %v90
    %v199 = vpop.permute.xlu0 %198
    %202 = vset.pattern.permute.xlu0 0
    %203 = vperm.xlu0 %202, %v91
    %v204 = vpop.permute.xlu0 %203
    %207 = vset.pattern.permute.xlu0 0
    %208 = vperm.xlu0 %207, %v92
    %v209 = vpop.permute.xlu0 %208
    %212 = vset.pattern.permute.xlu0 0
    %213 = vperm.xlu0 %212, %v93
    %v214 = vpop.permute.xlu0 %213
    %217 = vset.pattern.permute.xlu0 0
    %218 = vperm.xlu0 %217, %v94
    %v219 = vpop.permute.xlu0 %218
    %222 = vset.pattern.permute.xlu0 0
    %223 = vperm.xlu0 %222, %v95
    %v224 = vpop.permute.xlu0 %223
    %227 = vset.pattern.permute.xlu0 0
    %228 = vperm.xlu0 %227, %v96
    %v229 = vpop.permute.xlu0 %228
    %232 = vset.pattern.permute.xlu0 0
    %233 = vperm.xlu0 %232, %v97
    %v234 = vpop.permute.xlu0 %233
    %237 = vset.pattern.permute.xlu0 0
    %238 = vperm.xlu0 %237, %v98
    %v239 = vpop.permute.xlu0 %238
    %242 = vset.pattern.permute.xlu0 0
    %243 = vperm.xlu0 %242, %v99
    %v244 = vpop.permute.xlu0 %243
    %247 = vset.pattern.permute.xlu0 0
    %248 = vperm.xlu0 %247, %v100
    %v249 = vpop.permute.xlu0 %248
    %252 = vset.pattern.permute.xlu0 0
    %253 = vperm.xlu0 %252, %v101
    %v254 = vpop.permute.xlu0 %253
    %257 = vset.pattern.permute.xlu0 0
    %258 = vperm.xlu0 %257, %v102
    %v259 = vpop.permute.xlu0 %258
    %262 = vset.pattern.permute.xlu0 0
    %263 = vperm.xlu0 %262, %v103
    %v264 = vpop.permute.xlu0 %263
    %267 = vset.pattern.permute.xlu0 0
    %268 = vperm.xlu0 %267, %v104
    %v269 = vpop.permute.xlu0 %268
    %272 = vset.pattern.permute.xlu0 0
    %273 = vperm.xlu0 %272, %v105
    %v274 = vpop.permute.xlu0 %273
    %277 = vset.pattern.permute.xlu0 0
    %278 = vperm.xlu0 %277, %v106
    %v279 = vpop.permute.xlu0 %278
    %282 = vset.pattern.permute.xlu0 0
    %283 = vperm.xlu0 %282, %v107
    %v284 = vpop.permute.xlu0 %283
    %287 = vset.pattern.permute.xlu0 0
    %288 = vperm.xlu0 %287, %v108
    %v289 = vpop.permute.xlu0 %288
    %292 = vset.pattern.permute.xlu0 0
    %293 = vperm.xlu0 %292, %v109
    %v294 = vpop.permute.xlu0 %293
    %297 = vset.pattern.permute.xlu0 0
    %298 = vperm.xlu0 %297, %v110
    %v299 = vpop.permute.xlu0 %298
    %302 = vset.pattern.permute.xlu0 0
    %303 = vperm.xlu0 %302, %v111
    %v304 = vpop.permute.xlu0 %303
    %307 = vset.pattern.permute.xlu0 0
    %308 = vperm.xlu0 %307, %v112
    %v309 = vpop.permute.xlu0 %308
    %312 = vset.pattern.permute.xlu0 0
    %313 = vperm.xlu0 %312, %v113
    %v314 = vpop.permute.xlu0 %313
    %317 = vset.pattern.permute.xlu0 0
    %318 = vperm.xlu0 %317, %v114
    %v319 = vpop.permute.xlu0 %318
    %322 = vset.pattern.permute.xlu0 0
    %323 = vperm.xlu0 %322, %v115
    %v324 = vpop.permute.xlu0 %323
    %327 = vset.pattern.permute.xlu0 0
    %328 = vperm.xlu0 %327, %v116
    %v329 = vpop.permute.xlu0 %328
    %332 = vset.pattern.permute.xlu0 0
    %333 = vperm.xlu0 %332, %v117
    %v334 = vpop.permute.xlu0 %333
    %337 = vset.pattern.permute.xlu0 0
    %338 = vperm.xlu0 %337, %v118
    %v339 = vpop.permute.xlu0 %338
    %342 = vset.pattern.permute.xlu0 0
    %343 = vperm.xlu0 %342, %v119
    %v344 = vpop.permute.xlu0 %343
    %347 = vset.pattern.permute.xlu0 0
    %348 = vperm.xlu0 %347, %v120
    %v349 = vpop.permute.xlu0 %348
    %352 = vset.pattern.permute.xlu0 0
    %353 = vperm.xlu0 %352, %v121
    %v354 = vpop.permute.xlu0 %353
    %357 = vset.pattern.permute.xlu0 0
    %358 = vperm.xlu0 %357, %v122
    %v359 = vpop.permute.xlu0 %358
    %v397 = vunpack.c.l.b16 %v51
    %v398 = vunpack.c.h.b16 %v51
    %v399 = vunpack.c.l.b16 %v52
    %v400 = vunpack.c.h.b16 %v52
    %v401 = vunpack.c.l.b16 %v53
    %v402 = vunpack.c.h.b16 %v53
    %v403 = vunpack.c.l.b16 %v54
    %v404 = vunpack.c.h.b16 %v54
    %v405 = vunpack.c.l.b16 %v55
    %v406 = vunpack.c.h.b16 %v55
    %v407 = vunpack.c.l.b16 %v56
    %v408 = vunpack.c.h.b16 %v56
    %v409 = vunpack.c.l.b16 %v57
    %v410 = vunpack.c.h.b16 %v57
    %v411 = vunpack.c.l.b16 %v58
    %v412 = vunpack.c.h.b16 %v58
    %v413 = vunpack.c.l.b16 %v59
    %v414 = vunpack.c.h.b16 %v59
    %v415 = vunpack.c.l.b16 %v60
    %v416 = vunpack.c.h.b16 %v60
    %v417 = vunpack.c.l.b16 %v61
    %v418 = vunpack.c.h.b16 %v61
    %v419 = vunpack.c.l.b16 %v62
    %v420 = vunpack.c.h.b16 %v62
    %v421 = vunpack.c.l.b16 %v63
    %v422 = vunpack.c.h.b16 %v63
    %v423 = vunpack.c.l.b16 %v64
    %v424 = vunpack.c.h.b16 %v64
    %v425 = vunpack.c.l.b16 %v65
    %v426 = vunpack.c.h.b16 %v65
    %v427 = vunpack.c.l.b16 %v66
    %v428 = vunpack.c.h.b16 %v66
    %v429 = vunpack.c.l.b16 %v67
    %v430 = vunpack.c.h.b16 %v67
    %v431 = vunpack.c.l.b16 %v68
    %v432 = vunpack.c.h.b16 %v68
    %v433 = vunpack.c.l.b16 %v69
    %v434 = vunpack.c.h.b16 %v69
    %v435 = vunpack.c.l.b16 %v70
    %v436 = vunpack.c.h.b16 %v70
    %v437 = vunpack.c.l.b16 %v71
    %v438 = vunpack.c.h.b16 %v71
    %v439 = vunpack.c.l.b16 %v72
    %v440 = vunpack.c.h.b16 %v72
    %v441 = vunpack.c.l.b16 %v73
    %v442 = vunpack.c.h.b16 %v73
    %v443 = vunpack.c.l.b16 %v74
    %v444 = vunpack.c.h.b16 %v74
    %v445 = vunpack.c.l.b16 %v75
    %v446 = vunpack.c.h.b16 %v75
    %v447 = vunpack.c.l.b16 %v76
    %v448 = vunpack.c.h.b16 %v76
    %v449 = vunpack.c.l.b16 %v77
    %v450 = vunpack.c.h.b16 %v77
    %v451 = vunpack.c.l.b16 %v78
    %v452 = vunpack.c.h.b16 %v78
    %v453 = vunpack.c.l.b16 %v79
    %v454 = vunpack.c.h.b16 %v79
    %v455 = vunpack.c.l.b16 %v80
    %v456 = vunpack.c.h.b16 %v80
    %v457 = vunpack.c.l.b16 %v81
    %v458 = vunpack.c.h.b16 %v81
    %v459 = vunpack.c.l.b16 %v82
    %v460 = vunpack.c.h.b16 %v82
    %v461 = vunpack.c.l.b16 %v83
    %v462 = vunpack.c.h.b16 %v83
    %v463 = vunpack.c.l.b16 %v84
    %v464 = vunpack.c.h.b16 %v84
    %v465 = vunpack.c.l.b16 %v85
    %v466 = vunpack.c.h.b16 %v85
    %v467 = vunpack.c.l.b16 %v86
    %v468 = vunpack.c.h.b16 %v86
    %v469 = vpack.c.b16 %v399, %v397
    %v470 = vpack.c.b16 %v400, %v398
    %v471 = vpack.c.b16 %v403, %v401
    %v472 = vpack.c.b16 %v404, %v402
    %v473 = vpack.c.b16 %v407, %v405
    %v474 = vpack.c.b16 %v408, %v406
    %v475 = vpack.c.b16 %v411, %v409
    %v476 = vpack.c.b16 %v412, %v410
    %v477 = vpack.c.b16 %v415, %v413
    %v478 = vpack.c.b16 %v416, %v414
    %v479 = vpack.c.b16 %v419, %v417
    %v480 = vpack.c.b16 %v420, %v418
    %v481 = vpack.c.b16 %v423, %v421
    %v482 = vpack.c.b16 %v424, %v422
    %v483 = vpack.c.b16 %v427, %v425
    %v484 = vpack.c.b16 %v428, %v426
    %v485 = vpack.c.b16 %v431, %v429
    %v486 = vpack.c.b16 %v432, %v430
    %v487 = vpack.c.b16 %v435, %v433
    %v488 = vpack.c.b16 %v436, %v434
    %v489 = vpack.c.b16 %v439, %v437
    %v490 = vpack.c.b16 %v440, %v438
    %v491 = vpack.c.b16 %v443, %v441
    %v492 = vpack.c.b16 %v444, %v442
    %v493 = vpack.c.b16 %v447, %v445
    %v494 = vpack.c.b16 %v448, %v446
    %v495 = vpack.c.b16 %v451, %v449
    %v496 = vpack.c.b16 %v452, %v450
    %v497 = vpack.c.b16 %v455, %v453
    %v498 = vpack.c.b16 %v456, %v454
    %v499 = vpack.c.b16 %v459, %v457
    %v500 = vpack.c.b16 %v460, %v458
    %v501 = vpack.c.b16 %v463, %v461
    %v502 = vpack.c.b16 %v464, %v462
    %v503 = vpack.c.b16 %v467, %v465
    %v504 = vpack.c.b16 %v468, %v466
    %vm523 = vcmask 326656
    %v525 = vsel %vm523, %v470, 0
    %v528 = vsel %vm523, %v472, 0
    %v531 = vsel %vm523, %v474, 0
    %v534 = vsel %vm523, %v476, 0
    %v537 = vsel %vm523, %v478, 0
    %v540 = vsel %vm523, %v480, 0
    %v543 = vsel %vm523, %v482, 0
    %v546 = vsel %vm523, %v484, 0
    %v549 = vsel %vm523, %v486, 0
    %v552 = vsel %vm523, %v488, 0
    %v555 = vsel %vm523, %v490, 0
    %v558 = vsel %vm523, %v492, 0
    %v561 = vsel %vm523, %v494, 0
    %v564 = vsel %vm523, %v496, 0
    %v567 = vsel %vm523, %v498, 0
    %v570 = vsel %vm523, %v500, 0
    %v573 = vsel %vm523, %v502, 0
    %v576 = vsel %vm523, %v504, 0
    %vm578 = vcmask 1043456
    %v580 = vsel %vm578, %v180, 0
    %582 = vmatprep.subr.bf16.mxu0 0
    %583 = vmatpush1.bf16.msra.mxu0 %v170
    %584 = vmatprep.subr.bf16.mxu0 0
    %585 = vmatpush1.bf16.msra.mxu0 %v171
    %586 = vmatprep.subr.bf16.mxu0 0
    %587 = vmatpush1.bf16.msra.mxu0 %v172
    %588 = vmatprep.subr.bf16.mxu0 0
    %589 = vmatpush1.bf16.msra.mxu0 %v173
    %590 = vmatprep.subr.bf16.mxu0 0
    %591 = vmatpush1.bf16.msra.mxu0 %v174
    %592 = vmatprep.subr.bf16.mxu0 0
    %593 = vmatpush1.bf16.msra.mxu0 %v175
    %594 = vmatprep.subr.bf16.mxu0 0
    %595 = vmatpush1.bf16.msra.mxu0 %v176
    %596 = vmatprep.subr.bf16.mxu0 0
    %597 = vmatpush1.bf16.msra.mxu0 %v177
    %598 = vmatprep.subr.bf16.mxu0 0
    %599 = vmatpush1.bf16.msra.mxu0 %v178
    %600 = vmatprep.subr.bf16.mxu0 0
    %601 = vmatpush1.bf16.msra.mxu0 %v179
    %602 = vmatprep.subr.bf16.mxu0 0
    %603 = vmatpush1.bf16.msra.mxu0 %v580
    %604 = vmatprep.subr.bf16.mxu0 0
    %605 = vmatpush1.bf16.msra.mxu0 0
    %606 = vmatprep.subr.bf16.mxu0 0
    %607 = vmatpush1.bf16.msra.mxu0 0
    %608 = vmatprep.subr.bf16.mxu0 0
    %609 = vmatpush1.bf16.msra.mxu0 0
    %610 = vmatprep.subr.bf16.mxu0 0
    %611 = vmatpush1.bf16.msra.mxu0 0
    %612 = vmatprep.subr.bf16.mxu0 0
    %613 = vmatpush1.bf16.msra.mxu0 0
    %614 = vmatprep.mubr.bf16.mxu0 %v525
    %615 = vmatmul.mubr.bf16.gmra.mrb[0].mxu0 %v469
    %v616 = vpop.f32.mrb[0].mxu0
    %v617 = vadd.f32 %v184, %v616
    %v618 = vpop.f32.mrb[0].mxu0
    %v619 = vpop.f32.mrb[0].mxu0
    %v620 = vadd.f32 %v189, %v619
    %v621 = vpop.f32.mrb[0].mxu0
    %622 = vmatprep.mubr.bf16.mxu0 %v528
    %623 = vmatmul.mubr.bf16.gmra.mrb[0].mxu0 %v471
    %v624 = vpop.f32.mrb[0].mxu0
    %v625 = vadd.f32 %v194, %v624
    %v626 = vpop.f32.mrb[0].mxu0
    %v627 = vpop.f32.mrb[0].mxu0
    %v628 = vadd.f32 %v199, %v627
    %v629 = vpop.f32.mrb[0].mxu0
    %630 = vmatprep.mubr.bf16.mxu0 %v531
    %631 = vmatmul.mubr.bf16.gmra.mrb[0].mxu0 %v473
    %v632 = vpop.f32.mrb[0].mxu0
    %v633 = vadd.f32 %v204, %v632
    %v634 = vpop.f32.mrb[0].mxu0
    %v635 = vpop.f32.mrb[0].mxu0
    %v636 = vadd.f32 %v209, %v635
    %v637 = vpop.f32.mrb[0].mxu0
    %638 = vmatprep.mubr.bf16.mxu0 %v534
    %639 = vmatmul.mubr.bf16.gmra.mrb[0].mxu0 %v475
    %v640 = vpop.f32.mrb[0].mxu0
    %v641 = vadd.f32 %v214, %v640
    %v642 = vpop.f32.mrb[0].mxu0
    %v643 = vpop.f32.mrb[0].mxu0
    %v644 = vadd.f32 %v219, %v643
    %v645 = vpop.f32.mrb[0].mxu0
    %646 = vmatprep.mubr.bf16.mxu0 %v537
    %647 = vmatmul.mubr.bf16.gmra.mrb[0].mxu0 %v477
    %v648 = vpop.f32.mrb[0].mxu0
    %v649 = vadd.f32 %v224, %v648
    %v650 = vpop.f32.mrb[0].mxu0
    %v651 = vpop.f32.mrb[0].mxu0
    %v652 = vadd.f32 %v229, %v651
    %v653 = vpop.f32.mrb[0].mxu0
    %654 = vmatprep.mubr.bf16.mxu0 %v540
    %655 = vmatmul.mubr.bf16.gmra.mrb[0].mxu0 %v479
    %v656 = vpop.f32.mrb[0].mxu0
    %v657 = vadd.f32 %v234, %v656
    %v658 = vpop.f32.mrb[0].mxu0
    %v659 = vpop.f32.mrb[0].mxu0
    %v660 = vadd.f32 %v239, %v659
    %v661 = vpop.f32.mrb[0].mxu0
    %662 = vmatprep.mubr.bf16.mxu0 %v543
    %663 = vmatmul.mubr.bf16.gmra.mrb[0].mxu0 %v481
    %v664 = vpop.f32.mrb[0].mxu0
    %v665 = vadd.f32 %v244, %v664
    %v666 = vpop.f32.mrb[0].mxu0
    %v667 = vpop.f32.mrb[0].mxu0
    %v668 = vadd.f32 %v249, %v667
    %v669 = vpop.f32.mrb[0].mxu0
    %670 = vmatprep.mubr.bf16.mxu0 %v546
    %671 = vmatmul.mubr.bf16.gmra.mrb[0].mxu0 %v483
    %v672 = vpop.f32.mrb[0].mxu0
    %v673 = vadd.f32 %v254, %v672
    %v674 = vpop.f32.mrb[0].mxu0
    %v675 = vpop.f32.mrb[0].mxu0
    %v676 = vadd.f32 %v259, %v675
    %v677 = vpop.f32.mrb[0].mxu0
    %678 = vmatprep.mubr.bf16.mxu0 %v549
    %679 = vmatmul.mubr.bf16.gmra.mrb[0].mxu0 %v485
    %v680 = vpop.f32.mrb[0].mxu0
    %v681 = vadd.f32 %v264, %v680
    %v682 = vpop.f32.mrb[0].mxu0
    %v683 = vpop.f32.mrb[0].mxu0
    %v684 = vadd.f32 %v269, %v683
    %v685 = vpop.f32.mrb[0].mxu0
    %686 = vmatprep.mubr.bf16.mxu0 %v552
    %687 = vmatmul.mubr.bf16.gmra.mrb[0].mxu0 %v487
    %v688 = vpop.f32.mrb[0].mxu0
    %v689 = vadd.f32 %v274, %v688
    %v690 = vpop.f32.mrb[0].mxu0
    %v691 = vpop.f32.mrb[0].mxu0
    %v692 = vadd.f32 %v279, %v691
    %v693 = vpop.f32.mrb[0].mxu0
    %694 = vmatprep.mubr.bf16.mxu0 %v555
    %695 = vmatmul.mubr.bf16.gmra.mrb[0].mxu0 %v489
    %v696 = vpop.f32.mrb[0].mxu0
    %v697 = vadd.f32 %v284, %v696
    %v698 = vpop.f32.mrb[0].mxu0
    %v699 = vpop.f32.mrb[0].mxu0
    %v700 = vadd.f32 %v289, %v699
    %v701 = vpop.f32.mrb[0].mxu0
    %702 = vmatprep.mubr.bf16.mxu0 %v558
    %703 = vmatmul.mubr.bf16.gmra.mrb[0].mxu0 %v491
    %v704 = vpop.f32.mrb[0].mxu0
    %v705 = vadd.f32 %v294, %v704
    %v706 = vpop.f32.mrb[0].mxu0
    %v707 = vpop.f32.mrb[0].mxu0
    %v708 = vadd.f32 %v299, %v707
    %v709 = vpop.f32.mrb[0].mxu0
    %710 = vmatprep.mubr.bf16.mxu0 %v561
    %711 = vmatmul.mubr.bf16.gmra.mrb[0].mxu0 %v493
    %v712 = vpop.f32.mrb[0].mxu0
    %v713 = vadd.f32 %v304, %v712
    %v714 = vpop.f32.mrb[0].mxu0
    %v715 = vpop.f32.mrb[0].mxu0
    %v716 = vadd.f32 %v309, %v715
    %v717 = vpop.f32.mrb[0].mxu0
    %718 = vmatprep.mubr.bf16.mxu0 %v564
    %719 = vmatmul.mubr.bf16.gmra.mrb[0].mxu0 %v495
    %v720 = vpop.f32.mrb[0].mxu0
    %v721 = vadd.f32 %v314, %v720
    %v722 = vpop.f32.mrb[0].mxu0
    %v723 = vpop.f32.mrb[0].mxu0
    %v724 = vadd.f32 %v319, %v723
    %v725 = vpop.f32.mrb[0].mxu0
    %726 = vmatprep.mubr.bf16.mxu0 %v567
    %727 = vmatmul.mubr.bf16.gmra.mrb[0].mxu0 %v497
    %v728 = vpop.f32.mrb[0].mxu0
    %v729 = vadd.f32 %v324, %v728
    %v730 = vpop.f32.mrb[0].mxu0
    %v731 = vpop.f32.mrb[0].mxu0
    %v732 = vadd.f32 %v329, %v731
    %v733 = vpop.f32.mrb[0].mxu0
    %734 = vmatprep.mubr.bf16.mxu0 %v570
    %735 = vmatmul.mubr.bf16.gmra.mrb[0].mxu0 %v499
    %v736 = vpop.f32.mrb[0].mxu0
    %v737 = vadd.f32 %v334, %v736
    %v738 = vpop.f32.mrb[0].mxu0
    %v739 = vpop.f32.mrb[0].mxu0
    %v740 = vadd.f32 %v339, %v739
    %v741 = vpop.f32.mrb[0].mxu0
    %742 = vmatprep.mubr.bf16.mxu0 %v573
    %743 = vmatmul.mubr.bf16.gmra.mrb[0].mxu0 %v501
    %v744 = vpop.f32.mrb[0].mxu0
    %v745 = vadd.f32 %v344, %v744
    %v746 = vpop.f32.mrb[0].mxu0
    %v747 = vpop.f32.mrb[0].mxu0
    %v748 = vadd.f32 %v349, %v747
    %v749 = vpop.f32.mrb[0].mxu0
    %750 = vmatprep.mubr.bf16.mxu0 %v576
    %751 = vmatmul.mubr.bf16.gmra.mrb[0].mxu0 %v503
    %v752 = vpop.f32.mrb[0].mxu0
    %v753 = vadd.f32 %v354, %v752
    %v754 = vpop.f32.mrb[0].mxu0
    %v755 = vpop.f32.mrb[0].mxu0
    %v756 = vadd.f32 %v359, %v755
    %v757 = vpop.f32.mrb[0].mxu0
    %758 = vdwg.mxu0
    %v759 = vmax.f32 %v617, 0.0
    %v760 = vmax.f32 %v620, 0.0
    %v761 = vmax.f32 %v625, 0.0
    %v762 = vmax.f32 %v628, 0.0
    %v763 = vmax.f32 %v633, 0.0
    %v764 = vmax.f32 %v636, 0.0
    %v765 = vmax.f32 %v641, 0.0
    %v766 = vmax.f32 %v644, 0.0
    %v767 = vmax.f32 %v649, 0.0
    %v768 = vmax.f32 %v652, 0.0
    %v769 = vmax.f32 %v657, 0.0
    %v770 = vmax.f32 %v660, 0.0
    %v771 = vmax.f32 %v665, 0.0
    %v772 = vmax.f32 %v668, 0.0
    %v773 = vmax.f32 %v673, 0.0
    %v774 = vmax.f32 %v676, 0.0
    %v775 = vmax.f32 %v681, 0.0
    %v776 = vmax.f32 %v684, 0.0
    %v777 = vmax.f32 %v689, 0.0
    %v778 = vmax.f32 %v692, 0.0
    %v779 = vmax.f32 %v697, 0.0
    %v780 = vmax.f32 %v700, 0.0
    %v781 = vmax.f32 %v705, 0.0
    %v782 = vmax.f32 %v708, 0.0
    %v783 = vmax.f32 %v713, 0.0
    %v784 = vmax.f32 %v716, 0.0
    %v785 = vmax.f32 %v721, 0.0
    %v786 = vmax.f32 %v724, 0.0
    %v787 = vmax.f32 %v729, 0.0
    %v788 = vmax.f32 %v732, 0.0
    %v789 = vmax.f32 %v737, 0.0
    %v790 = vmax.f32 %v740, 0.0
    %v791 = vmax.f32 %v745, 0.0
    %v792 = vmax.f32 %v748, 0.0
    %v793 = vmax.f32 %v753, 0.0
    %v794 = vmax.f32 %v756, 0.0
    %v795 = vmax.f32 %v759, %v777
    %v796 = vmax.f32 %v760, %v778
    %v797 = vmax.f32 %v761, %v779
    %v798 = vmax.f32 %v762, %v780
    %v799 = vmax.f32 %v763, %v781
    %v800 = vmax.f32 %v764, %v782
    %v801 = vmax.f32 %v765, %v783
    %v802 = vmax.f32 %v766, %v784
    %v803 = vmax.f32 %v767, %v785
    %v804 = vmax.f32 %v768, %v786
    %v805 = vmax.f32 %v769, %v787
    %v806 = vmax.f32 %v770, %v788
    %v807 = vmax.f32 %v771, %v789
    %v808 = vmax.f32 %v772, %v790
    %v809 = vmax.f32 %v773, %v791
    %v810 = vmax.f32 %v774, %v792
    %v811 = vmax.f32 %v775, %v793
    %v812 = vmax.f32 %v776, %v794
    %v813 = vpack.c.bf16 %v796, %v795
    %v814 = vpack.c.bf16 %v798, %v797
    %v815 = vpack.c.bf16 %v800, %v799
    %v816 = vpack.c.bf16 %v802, %v801
    %v817 = vpack.c.bf16 %v804, %v803
    %v818 = vpack.c.bf16 %v806, %v805
    %v819 = vpack.c.bf16 %v808, %v807
    %v820 = vpack.c.bf16 %v810, %v809
    %v821 = vpack.c.bf16 %v812, %v811
    %v831 = vunpack.c.l.b16 %v123
    %v832 = vunpack.c.h.b16 %v123
    %v833 = vunpack.c.l.b16 %v124
    %v834 = vunpack.c.h.b16 %v124
    %v835 = vunpack.c.l.b16 %v125
    %v836 = vunpack.c.h.b16 %v125
    %v837 = vunpack.c.l.b16 %v126
    %v838 = vunpack.c.h.b16 %v126
    %v839 = vunpack.c.l.b16 %v127
    %v840 = vunpack.c.h.b16 %v127
    %v841 = vunpack.c.l.b16 %v128
    %v842 = vunpack.c.h.b16 %v128
    %v843 = vunpack.c.l.b16 %v129
    %v844 = vunpack.c.h.b16 %v129
    %v845 = vunpack.c.l.b16 %v130
    %v846 = vunpack.c.h.b16 %v130
    %v847 = vunpack.c.l.b16 %v131
    %v848 = vunpack.c.h.b16 %v131
    %v849 = vpack.c.b16 %v833, %v831
    %v850 = vpack.c.b16 %v834, %v832
    %v851 = vpack.c.b16 %v837, %v835
    %v852 = vpack.c.b16 %v838, %v836
    %v853 = vpack.c.b16 %v841, %v839
    %v854 = vpack.c.b16 %v842, %v840
    %v855 = vpack.c.b16 %v845, %v843
    %v856 = vpack.c.b16 %v846, %v844
    %v857 = vpack.c.b16 %v847, %v847
    %v858 = vpack.c.b16 %v848, %v848
    %vm864 = vcmask 130048
    %v866 = vsel %vm864, %v850, 0
    %v869 = vsel %vm864, %v852, 0
    %v872 = vsel %vm864, %v854, 0
    %v875 = vsel %vm864, %v856, 0
    %v878 = vsel %vm864, %v858, 0
    %880 = vmatprep.subr.bf16.mxu0 0
    %881 = vmatpush1.bf16.msra.mxu0 %v813
    %882 = vmatprep.subr.bf16.mxu0 0
    %883 = vmatpush1.bf16.msra.mxu0 %v814
    %884 = vmatprep.subr.bf16.mxu0 0
    %885 = vmatpush1.bf16.msra.mxu0 %v815
    %886 = vmatprep.subr.bf16.mxu0 0
    %887 = vmatpush1.bf16.msra.mxu0 %v816
    %888 = vmatprep.subr.bf16.mxu0 0
    %889 = vmatpush1.bf16.msra.mxu0 %v817
    %890 = vmatprep.subr.bf16.mxu0 0
    %891 = vmatpush1.bf16.msra.mxu0 %v818
    %892 = vmatprep.subr.bf16.mxu0 0
    %893 = vmatpush1.bf16.msra.mxu0 %v819
    %894 = vmatprep.subr.bf16.mxu0 0
    %895 = vmatpush1.bf16.msra.mxu0 %v820
    %896 = vmatprep.subr.bf16.mxu0 0
    %897 = vmatpush1.bf16.msra.mxu0 %v821
    %898 = vmatprep.subr.bf16.mxu0 0
    %899 = vmatpush1.bf16.msra.mxu0 0
    %900 = vmatprep.subr.bf16.mxu0 0
    %901 = vmatpush1.bf16.msra.mxu0 0
    %902 = vmatprep.subr.bf16.mxu0 0
    %903 = vmatpush1.bf16.msra.mxu0 0
    %904 = vmatprep.subr.bf16.mxu0 0
    %905 = vmatpush1.bf16.msra.mxu0 0
    %906 = vmatprep.subr.bf16.mxu0 0
    %907 = vmatpush1.bf16.msra.mxu0 0
    %908 = vmatprep.subr.bf16.mxu0 0
    %909 = vmatpush1.bf16.msra.mxu0 0
    %910 = vmatprep.subr.bf16.mxu0 0
    %911 = vmatpush1.bf16.msra.mxu0 0
    %912 = vmatprep.mubr.bf16.mxu0 %v866
    %913 = vmatmul.mubr.bf16.gmra.mrb[0].mxu0 %v849
    %v914 = vpop.f32.mrb[0].mxu0
    %v915 = vadd.f32 0.0, %v914
    %v916 = vpop.f32.mrb[0].mxu0
    %v917 = vpop.f32.mrb[0].mxu0
    %v918 = vadd.f32 0.0, %v917
    %v919 = vpop.f32.mrb[0].mxu0
    %920 = vmatprep.mubr.bf16.mxu0 %v869
    %921 = vmatmul.mubr.bf16.gmra.mrb[0].mxu0 %v851
    %v922 = vpop.f32.mrb[0].mxu0
    %v923 = vadd.f32 0.0, %v922
    %v924 = vpop.f32.mrb[0].mxu0
    %v925 = vpop.f32.mrb[0].mxu0
    %v926 = vadd.f32 0.0, %v925
    %v927 = vpop.f32.mrb[0].mxu0
    %928 = vmatprep.mubr.bf16.mxu0 %v872
    %929 = vmatmul.mubr.bf16.gmra.mrb[0].mxu0 %v853
    %v930 = vpop.f32.mrb[0].mxu0
    %v931 = vadd.f32 0.0, %v930
    %v932 = vpop.f32.mrb[0].mxu0
    %v933 = vpop.f32.mrb[0].mxu0
    %v934 = vadd.f32 0.0, %v933
    %v935 = vpop.f32.mrb[0].mxu0
    %936 = vmatprep.mubr.bf16.mxu0 %v875
    %937 = vmatmul.mubr.bf16.gmra.mrb[0].mxu0 %v855
    %v938 = vpop.f32.mrb[0].mxu0
    %v939 = vadd.f32 0.0, %v938
    %v940 = vpop.f32.mrb[0].mxu0
    %v941 = vpop.f32.mrb[0].mxu0
    %v942 = vadd.f32 0.0, %v941
    %v943 = vpop.f32.mrb[0].mxu0
    %944 = vmatprep.mubr.bf16.mxu0 %v878
    %945 = vmatmul.mubr.bf16.gmra.mrb[0].mxu0 %v857
    %v946 = vpop.f32.mrb[0].mxu0
    %v947 = vadd.f32 0.0, %v946
    %v948 = vpop.f32.mrb[0].mxu0
    %v949 = vpop.f32.mrb[0].mxu0
    %v950 = vpop.f32.mrb[0].mxu0
    %951 = vdwg.mxu0
    %v961 = vunpack.c.l.b16 %v132
    %v962 = vunpack.c.h.b16 %v132
    %v963 = vunpack.c.l.b16 %v133
    %v964 = vunpack.c.h.b16 %v133
    %v965 = vunpack.c.l.b16 %v134
    %v966 = vunpack.c.h.b16 %v134
    %v967 = vunpack.c.l.b16 %v135
    %v968 = vunpack.c.h.b16 %v135
    %v969 = vunpack.c.l.b16 %v136
    %v970 = vunpack.c.h.b16 %v136
    %v971 = vunpack.c.l.b16 %v137
    %v972 = vunpack.c.h.b16 %v137
    %v973 = vunpack.c.l.b16 %v138
    %v974 = vunpack.c.h.b16 %v138
    %v975 = vunpack.c.l.b16 %v139
    %v976 = vunpack.c.h.b16 %v139
    %v977 = vunpack.c.l.b16 %v140
    %v978 = vunpack.c.h.b16 %v140
    %v979 = vpack.c.b16 %v963, %v961
    %v980 = vpack.c.b16 %v964, %v962
    %v981 = vpack.c.b16 %v967, %v965
    %v982 = vpack.c.b16 %v968, %v966
    %v983 = vpack.c.b16 %v971, %v969
    %v984 = vpack.c.b16 %v972, %v970
    %v985 = vpack.c.b16 %v975, %v973
    %v986 = vpack.c.b16 %v976, %v974
    %v987 = vpack.c.b16 %v977, %v977
    %v988 = vpack.c.b16 %v978, %v978
    %v995 = vsel %vm864, %v980, 0
    %v998 = vsel %vm864, %v982, 0
    %v1001 = vsel %vm864, %v984, 0
    %v1004 = vsel %vm864, %v986, 0
    %v1007 = vsel %vm864, %v988, 0
    %1009 = vmatprep.subr.bf16.mxu0 0
    %1010 = vmatpush1.bf16.msra.mxu0 %v813
    %1011 = vmatprep.subr.bf16.mxu0 0
    %1012 = vmatpush1.bf16.msra.mxu0 %v814
    %1013 = vmatprep.subr.bf16.mxu0 0
    %1014 = vmatpush1.bf16.msra.mxu0 %v815
    %1015 = vmatprep.subr.bf16.mxu0 0
    %1016 = vmatpush1.bf16.msra.mxu0 %v816
    %1017 = vmatprep.subr.bf16.mxu0 0
    %1018 = vmatpush1.bf16.msra.mxu0 %v817
    %1019 = vmatprep.subr.bf16.mxu0 0
    %1020 = vmatpush1.bf16.msra.mxu0 %v818
    %1021 = vmatprep.subr.bf16.mxu0 0
    %1022 = vmatpush1.bf16.msra.mxu0 %v819
    %1023 = vmatprep.subr.bf16.mxu0 0
    %1024 = vmatpush1.bf16.msra.mxu0 %v820
    %1025 = vmatprep.subr.bf16.mxu0 0
    %1026 = vmatpush1.bf16.msra.mxu0 %v821
    %1027 = vmatprep.subr.bf16.mxu0 0
    %1028 = vmatpush1.bf16.msra.mxu0 0
    %1029 = vmatprep.subr.bf16.mxu0 0
    %1030 = vmatpush1.bf16.msra.mxu0 0
    %1031 = vmatprep.subr.bf16.mxu0 0
    %1032 = vmatpush1.bf16.msra.mxu0 0
    %1033 = vmatprep.subr.bf16.mxu0 0
    %1034 = vmatpush1.bf16.msra.mxu0 0
    %1035 = vmatprep.subr.bf16.mxu0 0
    %1036 = vmatpush1.bf16.msra.mxu0 0
    %1037 = vmatprep.subr.bf16.mxu0 0
    %1038 = vmatpush1.bf16.msra.mxu0 0
    %1039 = vmatprep.subr.bf16.mxu0 0
    %1040 = vmatpush1.bf16.msra.mxu0 0
    %1041 = vmatprep.mubr.bf16.mxu0 %v995
    %1042 = vmatmul.mubr.bf16.gmra.mrb[0].mxu0 %v979
    %v1043 = vpop.f32.mrb[0].mxu0
    %v1044 = vadd.f32 0.0, %v1043
    %v1045 = vpop.f32.mrb[0].mxu0
    %v1046 = vpop.f32.mrb[0].mxu0
    %v1047 = vadd.f32 0.0, %v1046
    %v1048 = vpop.f32.mrb[0].mxu0
    %1049 = vmatprep.mubr.bf16.mxu0 %v998
    %1050 = vmatmul.mubr.bf16.gmra.mrb[0].mxu0 %v981
    %v1051 = vpop.f32.mrb[0].mxu0
    %v1052 = vadd.f32 0.0, %v1051
    %v1053 = vpop.f32.mrb[0].mxu0
    %v1054 = vpop.f32.mrb[0].mxu0
    %v1055 = vadd.f32 0.0, %v1054
    %v1056 = vpop.f32.mrb[0].mxu0
    %1057 = vmatprep.mubr.bf16.mxu0 %v1001
    %1058 = vmatmul.mubr.bf16.gmra.mrb[0].mxu0 %v983
    %v1059 = vpop.f32.mrb[0].mxu0
    %v1060 = vadd.f32 0.0, %v1059
    %v1061 = vpop.f32.mrb[0].mxu0
    %v1062 = vpop.f32.mrb[0].mxu0
    %v1063 = vadd.f32 0.0, %v1062
    %v1064 = vpop.f32.mrb[0].mxu0
    %1065 = vmatprep.mubr.bf16.mxu0 %v1004
    %1066 = vmatmul.mubr.bf16.gmra.mrb[0].mxu0 %v985
    %v1067 = vpop.f32.mrb[0].mxu0
    %v1068 = vadd.f32 0.0, %v1067
    %v1069 = vpop.f32.mrb[0].mxu0
    %v1070 = vpop.f32.mrb[0].mxu0
    %v1071 = vadd.f32 0.0, %v1070
    %v1072 = vpop.f32.mrb[0].mxu0
    %1073 = vmatprep.mubr.bf16.mxu0 %v1007
    %1074 = vmatmul.mubr.bf16.gmra.mrb[0].mxu0 %v987
    %v1075 = vpop.f32.mrb[0].mxu0
    %v1076 = vadd.f32 0.0, %v1075
    %v1077 = vpop.f32.mrb[0].mxu0
    %v1078 = vpop.f32.mrb[0].mxu0
    %v1079 = vpop.f32.mrb[0].mxu0
    %1080 = vdwg.mxu0
    %v1081 = vmax.f32 %v915, %v1044
    %v1082 = vmax.f32 %v918, %v1047
    %v1083 = vmax.f32 %v923, %v1052
    %v1084 = vmax.f32 %v926, %v1055
    %v1085 = vmax.f32 %v931, %v1060
    %v1086 = vmax.f32 %v934, %v1063
    %v1087 = vmax.f32 %v939, %v1068
    %v1088 = vmax.f32 %v942, %v1071
    %v1089 = vmax.f32 %v947, %v1076
    %s1090 = smul.u32 %s142, 72
    %s1091 = scalar_lea.vmem [#allocation2], %s1090
    %vm1092 = vcmask 15360
    %1093 = vst.msk [vmem:[%s1091] sm:$0xff] %vm1092, %v1081
    %1094 = vst.msk [vmem:[%s1091 + $0x8] sm:$0xff] %vm1092, %v1082
    %1095 = vst.msk [vmem:[%s1091 + $0x10] sm:$0xff] %vm1092, %v1083
    %1096 = vst.msk [vmem:[%s1091 + $0x18] sm:$0xff] %vm1092, %v1084
    %1097 = vst.msk [vmem:[%s1091 + $0x20] sm:$0xff] %vm1092, %v1085
    %1098 = vst.msk [vmem:[%s1091 + $0x28] sm:$0xff] %vm1092, %v1086
    %1099 = vst.msk [vmem:[%s1091 + $0x30] sm:$0xff] %vm1092, %v1087
    %1100 = vst.msk [vmem:[%s1091 + $0x38] sm:$0xff] %vm1092, %v1088
    %1101 = vst.msk [vmem:[%s1091 + $0x40] sm:$0xff] %vm1092, %v1089
  $region66: #{lenet_forward.1} parent=0 // loop_footer
    %s146 = sadd.s32 1, %s142
  $region67: #{lenet_forward.1} parent=0 // loop_footer_branch
    %141 = sbr.rel target = $region63
  $region68: #{lenet_forward.1} parent=0 // loop_exit
    _
  %v1102 = vld [vmem:[%s5] sm:$0xff]
  %v1103 = vld [vmem:[%s5 + $0x8] sm:$0xff]
  %v1104 = vld [vmem:[%s5 + $0x10] sm:$0xff]
  %v1105 = vld [vmem:[%s5 + $0x18] sm:$0xff]
  %v1106 = vld [vmem:[%s5 + $0x20] sm:$0xff]
  %v1107 = vld [vmem:[%s5 + $0x28] sm:$0xff]
  %v1108 = vld [vmem:[%s5 + $0x30] sm:$0xff]
  %v1109 = vld [vmem:[%s5 + $0x38] sm:$0xff]
  %v1110 = vld [vmem:[%s5 + $0x40] sm:$0xff]
  %v1111 = vld [vmem:[%s5 + $0x48] sm:$0xff]
  %v1112 = vld [vmem:[%s5 + $0x50] sm:$0xff]
  %v1113 = vld [vmem:[%s5 + $0x58] sm:$0xff]
  %v1114 = vld [vmem:[%s5 + $0x60] sm:$0xff]
  %v1115 = vld [vmem:[%s5 + $0x68] sm:$0xff]
  %v1116 = vld [vmem:[%s5 + $0x70] sm:$0xff]
  %v1117 = vld [vmem:[%s5 + $0x78] sm:$0xff]
  %v1118 = vld [vmem:[%s5 + $0x80] sm:$0xff]
  %v1119 = vld [vmem:[%s5 + $0x88] sm:$0xff]
  %v1120 = vld [vmem:[%s5 + $0x90] sm:$0xff]
  %v1121 = vld [vmem:[%s5 + $0x98] sm:$0xff]
  %v1122 = vld [vmem:[%s5 + $0xa0] sm:$0xff]
  %v1123 = vld [vmem:[%s5 + $0xa8] sm:$0xff]
  %v1124 = vld [vmem:[%s5 + $0xb0] sm:$0xff]
  %v1125 = vld [vmem:[%s5 + $0xb8] sm:$0xff]
  %v1126 = vld [vmem:[%s5 + $0xc0] sm:$0xff]
  %v1127 = vld [vmem:[%s5 + $0xc8] sm:$0xff]
  %v1128 = vld [vmem:[%s5 + $0xd0] sm:$0xff]
  %v1129 = vld [vmem:[%s5 + $0xd8] sm:$0xff]
  %v1130 = vld [vmem:[%s5 + $0xe0] sm:$0xff]
  %v1131 = vld [vmem:[%s5 + $0xe8] sm:$0xff]
  %v1132 = vld [vmem:[%s5 + $0xf0] sm:$0xff]
  %v1133 = vld [vmem:[%s5 + $0xf8] sm:$0xff]
  %v1134 = vld [vmem:[%s5 + $0x100] sm:$0xff]
  %v1135 = vld [vmem:[%s5 + $0x108] sm:$0xff]
  %v1136 = vld [vmem:[%s5 + $0x110] sm:$0xff]
  %v1137 = vld [vmem:[%s5 + $0x118] sm:$0xff]
  %v1138 = vld [vmem:[%s5 + $0x120] sm:$0xff]
  %v1139 = vld [vmem:[%s5 + $0x128] sm:$0xff]
  %v1140 = vld [vmem:[%s5 + $0x130] sm:$0xff]
  %v1141 = vld [vmem:[%s5 + $0x138] sm:$0xff]
  %v1142 = vld [vmem:[%s5 + $0x140] sm:$0xff]
  %v1143 = vld [vmem:[%s5 + $0x148] sm:$0xff]
  %v1144 = vld [vmem:[%s5 + $0x150] sm:$0xff]
  %v1145 = vld [vmem:[%s5 + $0x158] sm:$0xff]
  %v1146 = vld [vmem:[%s5 + $0x160] sm:$0xff]
  %v1147 = vld [vmem:[%s5 + $0x168] sm:$0xff]
  %v1148 = vld [vmem:[%s5 + $0x170] sm:$0xff]
  %v1149 = vld [vmem:[%s5 + $0x178] sm:$0xff]
  %v1150 = vld [vmem:[%s5 + $0x180] sm:$0xff]
  %v1151 = vld [vmem:[%s5 + $0x188] sm:$0xff]
  %v1152 = vld [vmem:[%s5 + $0x190] sm:$0xff]
  %v1153 = vld [vmem:[%s5 + $0x198] sm:$0xff]
  %v1154 = vld [vmem:[%s5 + $0x1a0] sm:$0xff]
  %v1155 = vld [vmem:[%s5 + $0x1a8] sm:$0xff]
  %v1156 = vld [vmem:[%s5 + $0x1b0] sm:$0xff]
  %v1157 = vld [vmem:[%s5 + $0x1b8] sm:$0xff]
  %v1158 = vld [vmem:[%s5 + $0x1c0] sm:$0xff]
  %v1159 = vld [vmem:[%s5 + $0x1c8] sm:$0xff]
  %v1160 = vld [vmem:[%s5 + $0x1d0] sm:$0xff]
  %v1161 = vld [vmem:[%s5 + $0x1d8] sm:$0xff]
  %v1162 = vld [vmem:[%s5 + $0x1e0] sm:$0xff]
  %v1163 = vld [vmem:[%s5 + $0x1e8] sm:$0xff]
  %v1164 = vld [vmem:[%s5 + $0x1f0] sm:$0xff]
  %v1165 = vld [vmem:[%s5 + $0x1f8] sm:$0xff]
  %v1166 = vld [vmem:[%s6] sm:$0xff]
  %v1167 = vld [vmem:[%s6 + $0x8] sm:$0xff]
  %v1168 = vld [vmem:[%s6 + $0x10] sm:$0xff]
  %v1169 = vld [vmem:[%s6 + $0x18] sm:$0xff]
  %v1170 = vld [vmem:[%s6 + $0x20] sm:$0xff]
  %v1171 = vld [vmem:[%s6 + $0x28] sm:$0xff]
  %v1172 = vld [vmem:[%s6 + $0x30] sm:$0xff]
  %v1173 = vld [vmem:[%s6 + $0x38] sm:$0xff]
  %v1174 = vld [vmem:[%s6 + $0x40] sm:$0xff]
  %v1175 = vld [vmem:[%s6 + $0x48] sm:$0xff]
  %v1176 = vld [vmem:[%s6 + $0x50] sm:$0xff]
  %v1177 = vld [vmem:[%s6 + $0x58] sm:$0xff]
  %v1178 = vld [vmem:[%s6 + $0x60] sm:$0xff]
  %v1179 = vld [vmem:[%s6 + $0x68] sm:$0xff]
  %v1180 = vld [vmem:[%s6 + $0x70] sm:$0xff]
  %v1181 = vld [vmem:[%s6 + $0x78] sm:$0xff]
  %v1182 = vld [vmem:[%s6 + $0x80] sm:$0xff]
  %v1183 = vld [vmem:[%s6 + $0x88] sm:$0xff]
  %v1184 = vld [vmem:[%s6 + $0x90] sm:$0xff]
  %v1185 = vld [vmem:[%s6 + $0x98] sm:$0xff]
  %v1186 = vld [vmem:[%s6 + $0xa0] sm:$0xff]
  %v1187 = vld [vmem:[%s6 + $0xa8] sm:$0xff]
  %v1188 = vld [vmem:[%s6 + $0xb0] sm:$0xff]
  %v1189 = vld [vmem:[%s6 + $0xb8] sm:$0xff]
  %v1190 = vld [vmem:[%s6 + $0xc0] sm:$0xff]
  %v1191 = vld [vmem:[%s6 + $0xc8] sm:$0xff]
  %v1192 = vld [vmem:[%s6 + $0xd0] sm:$0xff]
  %v1193 = vld [vmem:[%s6 + $0xd8] sm:$0xff]
  %v1194 = vld [vmem:[%s6 + $0xe0] sm:$0xff]
  %v1195 = vld [vmem:[%s6 + $0xe8] sm:$0xff]
  %v1196 = vld [vmem:[%s6 + $0xf0] sm:$0xff]
  %v1197 = vld [vmem:[%s6 + $0xf8] sm:$0xff]
  %v1198 = vld [vmem:[%s7] sm:$0xf]
  %v1199 = vld [vmem:[%s7 + $0x4] sm:$0xf]
  %v1200 = vld [vmem:[%s7 + $0x8] sm:$0xf]
  %v1201 = vld [vmem:[%s7 + $0xc] sm:$0xf]
  %v1202 = vld [vmem:[%s7 + $0x10] sm:$0xf]
  %v1203 = vld [vmem:[%s7 + $0x14] sm:$0xf]
  %v1204 = vld [vmem:[%s7 + $0x18] sm:$0xf]
  %v1205 = vld [vmem:[%s7 + $0x1c] sm:$0xf]
  %v1206 = vld [vmem:[%s8] sm:$0xf]
  %v1207 = vld [vmem:[%s8 + $0x4] sm:$0xf]
  %v1208 = vld [vmem:[%s8 + $0x8] sm:$0xf]
  %v1209 = vld [vmem:[%s8 + $0xc] sm:$0xf]
  %v1210 = vld [vmem:[%s8 + $0x10] sm:$0xf]
  %v1211 = vld [vmem:[%s8 + $0x14] sm:$0xf]
  %v1212 = vld [vmem:[%s8 + $0x18] sm:$0xf]
  %v1213 = vld [vmem:[%s8 + $0x1c] sm:$0xf]
  %v1214 = vld [vmem:[#allocation2] sm:$0xff]
  %v1215 = vld [vmem:[#allocation2 + $0x8] sm:$0xff]
  %v1216 = vld [vmem:[#allocation2 + $0x10] sm:$0xff]
  %v1217 = vld [vmem:[#allocation2 + $0x18] sm:$0xff]
  %v1218 = vld [vmem:[#allocation2 + $0x20] sm:$0xff]
  %v1219 = vld [vmem:[#allocation2 + $0x28] sm:$0xff]
  %v1220 = vld [vmem:[#allocation2 + $0x30] sm:$0xff]
  %v1221 = vld [vmem:[#allocation2 + $0x38] sm:$0xff]
  %v1222 = vld [vmem:[#allocation2 + $0x40] sm:$0xff]
  %v1223 = vld [vmem:[#allocation2 + $0x48] sm:$0xff]
  %v1224 = vld [vmem:[#allocation2 + $0x50] sm:$0xff]
  %v1225 = vld [vmem:[#allocation2 + $0x58] sm:$0xff]
  %v1226 = vld [vmem:[#allocation2 + $0x60] sm:$0xff]
  %v1227 = vld [vmem:[#allocation2 + $0x68] sm:$0xff]
  %v1228 = vld [vmem:[#allocation2 + $0x70] sm:$0xff]
  %v1229 = vld [vmem:[#allocation2 + $0x78] sm:$0xff]
  %v1230 = vld [vmem:[#allocation2 + $0x80] sm:$0xff]
  %v1231 = vld [vmem:[#allocation2 + $0x88] sm:$0xff]
  %v1232 = vld [vmem:[#allocation2 + $0x90] sm:$0xff]
  %v1233 = vld [vmem:[#allocation2 + $0x98] sm:$0xff]
  %v1234 = vld [vmem:[#allocation2 + $0xa0] sm:$0xff]
  %v1235 = vld [vmem:[#allocation2 + $0xa8] sm:$0xff]
  %v1236 = vld [vmem:[#allocation2 + $0xb0] sm:$0xff]
  %v1237 = vld [vmem:[#allocation2 + $0xb8] sm:$0xff]
  %v1238 = vld [vmem:[#allocation2 + $0xc0] sm:$0xff]
  %v1239 = vld [vmem:[#allocation2 + $0xc8] sm:$0xff]
  %v1240 = vld [vmem:[#allocation2 + $0xd0] sm:$0xff]
  %v1241 = vld [vmem:[#allocation2 + $0xd8] sm:$0xff]
  %v1242 = vld [vmem:[#allocation2 + $0xe0] sm:$0xff]
  %v1243 = vld [vmem:[#allocation2 + $0xe8] sm:$0xff]
  %v1244 = vld [vmem:[#allocation2 + $0xf0] sm:$0xff]
  %v1245 = vld [vmem:[#allocation2 + $0xf8] sm:$0xff]
  %v1246 = vld [vmem:[#allocation2 + $0x100] sm:$0xff]
  %v1247 = vld [vmem:[#allocation2 + $0x108] sm:$0xff]
  %v1248 = vld [vmem:[#allocation2 + $0x110] sm:$0xff]
  %v1249 = vld [vmem:[#allocation2 + $0x118] sm:$0xff]
  %v1250 = vld [vmem:[#allocation2 + $0x120] sm:$0xff]
  %v1251 = vld [vmem:[#allocation2 + $0x128] sm:$0xff]
  %v1252 = vld [vmem:[#allocation2 + $0x130] sm:$0xff]
  %v1253 = vld [vmem:[#allocation2 + $0x138] sm:$0xff]
  %v1254 = vld [vmem:[#allocation2 + $0x140] sm:$0xff]
  %v1255 = vld [vmem:[#allocation2 + $0x148] sm:$0xff]
  %v1256 = vld [vmem:[#allocation2 + $0x150] sm:$0xff]
  %v1257 = vld [vmem:[#allocation2 + $0x158] sm:$0xff]
  %v1258 = vld [vmem:[#allocation2 + $0x160] sm:$0xff]
  %v1259 = vld [vmem:[#allocation2 + $0x168] sm:$0xff]
  %v1260 = vld [vmem:[#allocation2 + $0x170] sm:$0xff]
  %v1261 = vld [vmem:[#allocation2 + $0x178] sm:$0xff]
  %v1262 = vld [vmem:[#allocation2 + $0x180] sm:$0xff]
  %v1263 = vld [vmem:[#allocation2 + $0x188] sm:$0xff]
  %v1264 = vld [vmem:[#allocation2 + $0x190] sm:$0xff]
  %v1265 = vld [vmem:[#allocation2 + $0x198] sm:$0xff]
  %v1266 = vld [vmem:[#allocation2 + $0x1a0] sm:$0xff]
  %v1267 = vld [vmem:[#allocation2 + $0x1a8] sm:$0xff]
  %v1268 = vpack.c.bf16 %v1215, %v1214
  %v1269 = vpack.c.bf16 %v1217, %v1216
  %v1270 = vpack.c.bf16 %v1219, %v1218
  %v1271 = vpack.c.bf16 %v1221, %v1220
  %v1272 = vpack.c.bf16 %v1223, %v1222
  %v1273 = vpack.c.bf16 %v1225, %v1224
  %v1274 = vpack.c.bf16 %v1227, %v1226
  %v1275 = vpack.c.bf16 %v1229, %v1228
  %v1276 = vpack.c.bf16 %v1231, %v1230
  %v1277 = vpack.c.bf16 %v1233, %v1232
  %v1278 = vpack.c.bf16 %v1235, %v1234
  %v1279 = vpack.c.bf16 %v1237, %v1236
  %v1280 = vpack.c.bf16 %v1239, %v1238
  %v1281 = vpack.c.bf16 %v1241, %v1240
  %v1282 = vpack.c.bf16 %v1243, %v1242
  %v1283 = vpack.c.bf16 %v1245, %v1244
  %v1284 = vpack.c.bf16 %v1247, %v1246
  %v1285 = vpack.c.bf16 %v1249, %v1248
  %v1286 = vpack.c.bf16 %v1251, %v1250
  %v1287 = vpack.c.bf16 %v1253, %v1252
  %v1288 = vpack.c.bf16 %v1255, %v1254
  %v1289 = vpack.c.bf16 %v1257, %v1256
  %v1290 = vpack.c.bf16 %v1259, %v1258
  %v1291 = vpack.c.bf16 %v1261, %v1260
  %v1292 = vpack.c.bf16 %v1263, %v1262
  %v1293 = vpack.c.bf16 %v1265, %v1264
  %v1294 = vpack.c.bf16 %v1267, %v1266
  %1296 = vset.pattern.permute.xlu0 0
  %1297 = vperm.xlu0 %1296, %v1166
  %v1298 = vpop.permute.xlu0 %1297
  %1301 = vset.pattern.permute.xlu0 0
  %1302 = vperm.xlu0 %1301, %v1167
  %v1303 = vpop.permute.xlu0 %1302
  %1306 = vset.pattern.permute.xlu0 0
  %1307 = vperm.xlu0 %1306, %v1168
  %v1308 = vpop.permute.xlu0 %1307
  %1311 = vset.pattern.permute.xlu0 0
  %1312 = vperm.xlu0 %1311, %v1169
  %v1313 = vpop.permute.xlu0 %1312
  %1316 = vset.pattern.permute.xlu0 0
  %1317 = vperm.xlu0 %1316, %v1170
  %v1318 = vpop.permute.xlu0 %1317
  %1321 = vset.pattern.permute.xlu0 0
  %1322 = vperm.xlu0 %1321, %v1171
  %v1323 = vpop.permute.xlu0 %1322
  %1326 = vset.pattern.permute.xlu0 0
  %1327 = vperm.xlu0 %1326, %v1172
  %v1328 = vpop.permute.xlu0 %1327
  %1331 = vset.pattern.permute.xlu0 0
  %1332 = vperm.xlu0 %1331, %v1173
  %v1333 = vpop.permute.xlu0 %1332
  %1336 = vset.pattern.permute.xlu0 0
  %1337 = vperm.xlu0 %1336, %v1174
  %v1338 = vpop.permute.xlu0 %1337
  %1341 = vset.pattern.permute.xlu0 0
  %1342 = vperm.xlu0 %1341, %v1175
  %v1343 = vpop.permute.xlu0 %1342
  %1346 = vset.pattern.permute.xlu0 0
  %1347 = vperm.xlu0 %1346, %v1176
  %v1348 = vpop.permute.xlu0 %1347
  %1351 = vset.pattern.permute.xlu0 0
  %1352 = vperm.xlu0 %1351, %v1177
  %v1353 = vpop.permute.xlu0 %1352
  %1356 = vset.pattern.permute.xlu0 0
  %1357 = vperm.xlu0 %1356, %v1178
  %v1358 = vpop.permute.xlu0 %1357
  %1361 = vset.pattern.permute.xlu0 0
  %1362 = vperm.xlu0 %1361, %v1179
  %v1363 = vpop.permute.xlu0 %1362
  %1366 = vset.pattern.permute.xlu0 0
  %1367 = vperm.xlu0 %1366, %v1180
  %v1368 = vpop.permute.xlu0 %1367
  %1371 = vset.pattern.permute.xlu0 0
  %1372 = vperm.xlu0 %1371, %v1181
  %v1373 = vpop.permute.xlu0 %1372
  %1376 = vset.pattern.permute.xlu0 0
  %1377 = vperm.xlu0 %1376, %v1182
  %v1378 = vpop.permute.xlu0 %1377
  %1381 = vset.pattern.permute.xlu0 0
  %1382 = vperm.xlu0 %1381, %v1183
  %v1383 = vpop.permute.xlu0 %1382
  %1386 = vset.pattern.permute.xlu0 0
  %1387 = vperm.xlu0 %1386, %v1184
  %v1388 = vpop.permute.xlu0 %1387
  %1391 = vset.pattern.permute.xlu0 0
  %1392 = vperm.xlu0 %1391, %v1185
  %v1393 = vpop.permute.xlu0 %1392
  %1396 = vset.pattern.permute.xlu0 0
  %1397 = vperm.xlu0 %1396, %v1186
  %v1398 = vpop.permute.xlu0 %1397
  %1401 = vset.pattern.permute.xlu0 0
  %1402 = vperm.xlu0 %1401, %v1187
  %v1403 = vpop.permute.xlu0 %1402
  %1406 = vset.pattern.permute.xlu0 0
  %1407 = vperm.xlu0 %1406, %v1188
  %v1408 = vpop.permute.xlu0 %1407
  %1411 = vset.pattern.permute.xlu0 0
  %1412 = vperm.xlu0 %1411, %v1189
  %v1413 = vpop.permute.xlu0 %1412
  %1416 = vset.pattern.permute.xlu0 0
  %1417 = vperm.xlu0 %1416, %v1190
  %v1418 = vpop.permute.xlu0 %1417
  %1421 = vset.pattern.permute.xlu0 0
  %1422 = vperm.xlu0 %1421, %v1191
  %v1423 = vpop.permute.xlu0 %1422
  %1426 = vset.pattern.permute.xlu0 0
  %1427 = vperm.xlu0 %1426, %v1192
  %v1428 = vpop.permute.xlu0 %1427
  %1431 = vset.pattern.permute.xlu0 0
  %1432 = vperm.xlu0 %1431, %v1193
  %v1433 = vpop.permute.xlu0 %1432
  %1436 = vset.pattern.permute.xlu0 0
  %1437 = vperm.xlu0 %1436, %v1194
  %v1438 = vpop.permute.xlu0 %1437
  %1441 = vset.pattern.permute.xlu0 0
  %1442 = vperm.xlu0 %1441, %v1195
  %v1443 = vpop.permute.xlu0 %1442
  %1446 = vset.pattern.permute.xlu0 0
  %1447 = vperm.xlu0 %1446, %v1196
  %v1448 = vpop.permute.xlu0 %1447
  %1451 = vset.pattern.permute.xlu0 0
  %1452 = vperm.xlu0 %1451, %v1197
  %v1453 = vpop.permute.xlu0 %1452
  %v1519 = vunpack.c.l.b16 %v1102
  %v1520 = vunpack.c.h.b16 %v1102
  %v1521 = vunpack.c.l.b16 %v1103
  %v1522 = vunpack.c.h.b16 %v1103
  %v1523 = vunpack.c.l.b16 %v1104
  %v1524 = vunpack.c.h.b16 %v1104
  %v1525 = vunpack.c.l.b16 %v1105
  %v1526 = vunpack.c.h.b16 %v1105
  %v1527 = vunpack.c.l.b16 %v1106
  %v1528 = vunpack.c.h.b16 %v1106
  %v1529 = vunpack.c.l.b16 %v1107
  %v1530 = vunpack.c.h.b16 %v1107
  %v1531 = vunpack.c.l.b16 %v1108
  %v1532 = vunpack.c.h.b16 %v1108
  %v1533 = vunpack.c.l.b16 %v1109
  %v1534 = vunpack.c.h.b16 %v1109
  %v1535 = vunpack.c.l.b16 %v1110
  %v1536 = vunpack.c.h.b16 %v1110
  %v1537 = vunpack.c.l.b16 %v1111
  %v1538 = vunpack.c.h.b16 %v1111
  %v1539 = vunpack.c.l.b16 %v1112
  %v1540 = vunpack.c.h.b16 %v1112
  %v1541 = vunpack.c.l.b16 %v1113
  %v1542 = vunpack.c.h.b16 %v1113
  %v1543 = vunpack.c.l.b16 %v1114
  %v1544 = vunpack.c.h.b16 %v1114
  %v1545 = vunpack.c.l.b16 %v1115
  %v1546 = vunpack.c.h.b16 %v1115
  %v1547 = vunpack.c.l.b16 %v1116
  %v1548 = vunpack.c.h.b16 %v1116
  %v1549 = vunpack.c.l.b16 %v1117
  %v1550 = vunpack.c.h.b16 %v1117
  %v1551 = vunpack.c.l.b16 %v1118
  %v1552 = vunpack.c.h.b16 %v1118
  %v1553 = vunpack.c.l.b16 %v1119
  %v1554 = vunpack.c.h.b16 %v1119
  %v1555 = vunpack.c.l.b16 %v1120
  %v1556 = vunpack.c.h.b16 %v1120
  %v1557 = vunpack.c.l.b16 %v1121
  %v1558 = vunpack.c.h.b16 %v1121
  %v1559 = vunpack.c.l.b16 %v1122
  %v1560 = vunpack.c.h.b16 %v1122
  %v1561 = vunpack.c.l.b16 %v1123
  %v1562 = vunpack.c.h.b16 %v1123
  %v1563 = vunpack.c.l.b16 %v1124
  %v1564 = vunpack.c.h.b16 %v1124
  %v1565 = vunpack.c.l.b16 %v1125
  %v1566 = vunpack.c.h.b16 %v1125
  %v1567 = vunpack.c.l.b16 %v1126
  %v1568 = vunpack.c.h.b16 %v1126
  %v1569 = vunpack.c.l.b16 %v1127
  %v1570 = vunpack.c.h.b16 %v1127
  %v1571 = vunpack.c.l.b16 %v1128
  %v1572 = vunpack.c.h.b16 %v1128
  %v1573 = vunpack.c.l.b16 %v1129
  %v1574 = vunpack.c.h.b16 %v1129
  %v1575 = vunpack.c.l.b16 %v1130
  %v1576 = vunpack.c.h.b16 %v1130
  %v1577 = vunpack.c.l.b16 %v1131
  %v1578 = vunpack.c.h.b16 %v1131
  %v1579 = vunpack.c.l.b16 %v1132
  %v1580 = vunpack.c.h.b16 %v1132
  %v1581 = vunpack.c.l.b16 %v1133
  %v1582 = vunpack.c.h.b16 %v1133
  %v1583 = vunpack.c.l.b16 %v1134
  %v1584 = vunpack.c.h.b16 %v1134
  %v1585 = vunpack.c.l.b16 %v1135
  %v1586 = vunpack.c.h.b16 %v1135
  %v1587 = vunpack.c.l.b16 %v1136
  %v1588 = vunpack.c.h.b16 %v1136
  %v1589 = vunpack.c.l.b16 %v1137
  %v1590 = vunpack.c.h.b16 %v1137
  %v1591 = vunpack.c.l.b16 %v1138
  %v1592 = vunpack.c.h.b16 %v1138
  %v1593 = vunpack.c.l.b16 %v1139
  %v1594 = vunpack.c.h.b16 %v1139
  %v1595 = vunpack.c.l.b16 %v1140
  %v1596 = vunpack.c.h.b16 %v1140
  %v1597 = vunpack.c.l.b16 %v1141
  %v1598 = vunpack.c.h.b16 %v1141
  %v1599 = vunpack.c.l.b16 %v1142
  %v1600 = vunpack.c.h.b16 %v1142
  %v1601 = vunpack.c.l.b16 %v1143
  %v1602 = vunpack.c.h.b16 %v1143
  %v1603 = vunpack.c.l.b16 %v1144
  %v1604 = vunpack.c.h.b16 %v1144
  %v1605 = vunpack.c.l.b16 %v1145
  %v1606 = vunpack.c.h.b16 %v1145
  %v1607 = vunpack.c.l.b16 %v1146
  %v1608 = vunpack.c.h.b16 %v1146
  %v1609 = vunpack.c.l.b16 %v1147
  %v1610 = vunpack.c.h.b16 %v1147
  %v1611 = vunpack.c.l.b16 %v1148
  %v1612 = vunpack.c.h.b16 %v1148
  %v1613 = vunpack.c.l.b16 %v1149
  %v1614 = vunpack.c.h.b16 %v1149
  %v1615 = vunpack.c.l.b16 %v1150
  %v1616 = vunpack.c.h.b16 %v1150
  %v1617 = vunpack.c.l.b16 %v1151
  %v1618 = vunpack.c.h.b16 %v1151
  %v1619 = vunpack.c.l.b16 %v1152
  %v1620 = vunpack.c.h.b16 %v1152
  %v1621 = vunpack.c.l.b16 %v1153
  %v1622 = vunpack.c.h.b16 %v1153
  %v1623 = vunpack.c.l.b16 %v1154
  %v1624 = vunpack.c.h.b16 %v1154
  %v1625 = vunpack.c.l.b16 %v1155
  %v1626 = vunpack.c.h.b16 %v1155
  %v1627 = vunpack.c.l.b16 %v1156
  %v1628 = vunpack.c.h.b16 %v1156
  %v1629 = vunpack.c.l.b16 %v1157
  %v1630 = vunpack.c.h.b16 %v1157
  %v1631 = vunpack.c.l.b16 %v1158
  %v1632 = vunpack.c.h.b16 %v1158
  %v1633 = vunpack.c.l.b16 %v1159
  %v1634 = vunpack.c.h.b16 %v1159
  %v1635 = vunpack.c.l.b16 %v1160
  %v1636 = vunpack.c.h.b16 %v1160
  %v1637 = vunpack.c.l.b16 %v1161
  %v1638 = vunpack.c.h.b16 %v1161
  %v1639 = vunpack.c.l.b16 %v1162
  %v1640 = vunpack.c.h.b16 %v1162
  %v1641 = vunpack.c.l.b16 %v1163
  %v1642 = vunpack.c.h.b16 %v1163
  %v1643 = vunpack.c.l.b16 %v1164
  %v1644 = vunpack.c.h.b16 %v1164
  %v1645 = vunpack.c.l.b16 %v1165
  %v1646 = vunpack.c.h.b16 %v1165
  %v1647 = vpack.c.b16 %v1523, %v1519
  %v1648 = vpack.c.b16 %v1524, %v1520
  %v1649 = vpack.c.b16 %v1525, %v1521
  %v1650 = vpack.c.b16 %v1526, %v1522
  %v1651 = vpack.c.b16 %v1531, %v1527
  %v1652 = vpack.c.b16 %v1532, %v1528
  %v1653 = vpack.c.b16 %v1533, %v1529
  %v1654 = vpack.c.b16 %v1534, %v1530
  %v1655 = vpack.c.b16 %v1539, %v1535
  %v1656 = vpack.c.b16 %v1540, %v1536
  %v1657 = vpack.c.b16 %v1541, %v1537
  %v1658 = vpack.c.b16 %v1542, %v1538
  %v1659 = vpack.c.b16 %v1547, %v1543
  %v1660 = vpack.c.b16 %v1548, %v1544
  %v1661 = vpack.c.b16 %v1549, %v1545
  %v1662 = vpack.c.b16 %v1550, %v1546
  %v1663 = vpack.c.b16 %v1555, %v1551
  %v1664 = vpack.c.b16 %v1556, %v1552
  %v1665 = vpack.c.b16 %v1557, %v1553
  %v1666 = vpack.c.b16 %v1558, %v1554
  %v1667 = vpack.c.b16 %v1563, %v1559
  %v1668 = vpack.c.b16 %v1564, %v1560
  %v1669 = vpack.c.b16 %v1565, %v1561
  %v1670 = vpack.c.b16 %v1566, %v1562
  %v1671 = vpack.c.b16 %v1571, %v1567
  %v1672 = vpack.c.b16 %v1572, %v1568
  %v1673 = vpack.c.b16 %v1573, %v1569
  %v1674 = vpack.c.b16 %v1574, %v1570
  %v1675 = vpack.c.b16 %v1579, %v1575
  %v1676 = vpack.c.b16 %v1580, %v1576
  %v1677 = vpack.c.b16 %v1581, %v1577
  %v1678 = vpack.c.b16 %v1582, %v1578
  %v1679 = vpack.c.b16 %v1587, %v1583
  %v1680 = vpack.c.b16 %v1588, %v1584
  %v1681 = vpack.c.b16 %v1589, %v1585
  %v1682 = vpack.c.b16 %v1590, %v1586
  %v1683 = vpack.c.b16 %v1595, %v1591
  %v1684 = vpack.c.b16 %v1596, %v1592
  %v1685 = vpack.c.b16 %v1597, %v1593
  %v1686 = vpack.c.b16 %v1598, %v1594
  %v1687 = vpack.c.b16 %v1603, %v1599
  %v1688 = vpack.c.b16 %v1604, %v1600
  %v1689 = vpack.c.b16 %v1605, %v1601
  %v1690 = vpack.c.b16 %v1606, %v1602
  %v1691 = vpack.c.b16 %v1611, %v1607
  %v1692 = vpack.c.b16 %v1612, %v1608
  %v1693 = vpack.c.b16 %v1613, %v1609
  %v1694 = vpack.c.b16 %v1614, %v1610
  %v1695 = vpack.c.b16 %v1619, %v1615
  %v1696 = vpack.c.b16 %v1620, %v1616
  %v1697 = vpack.c.b16 %v1621, %v1617
  %v1698 = vpack.c.b16 %v1622, %v1618
  %v1699 = vpack.c.b16 %v1627, %v1623
  %v1700 = vpack.c.b16 %v1628, %v1624
  %v1701 = vpack.c.b16 %v1629, %v1625
  %v1702 = vpack.c.b16 %v1630, %v1626
  %v1703 = vpack.c.b16 %v1635, %v1631
  %v1704 = vpack.c.b16 %v1636, %v1632
  %v1705 = vpack.c.b16 %v1637, %v1633
  %v1706 = vpack.c.b16 %v1638, %v1634
  %v1707 = vpack.c.b16 %v1643, %v1639
  %v1708 = vpack.c.b16 %v1644, %v1640
  %v1709 = vpack.c.b16 %v1645, %v1641
  %v1710 = vpack.c.b16 %v1646, %v1642
  %vm1759 = vcmask 392192
  %v1761 = vsel %vm1759, %v1650, 0
  %v1764 = vsel %vm1759, %v1654, 0
  %v1767 = vsel %vm1759, %v1658, 0
  %v1770 = vsel %vm1759, %v1662, 0
  %v1773 = vsel %vm1759, %v1666, 0
  %v1776 = vsel %vm1759, %v1670, 0
  %v1779 = vsel %vm1759, %v1674, 0
  %v1782 = vsel %vm1759, %v1678, 0
  %v1785 = vsel %vm1759, %v1682, 0
  %v1788 = vsel %vm1759, %v1686, 0
  %v1791 = vsel %vm1759, %v1690, 0
  %v1794 = vsel %vm1759, %v1694, 0
  %v1797 = vsel %vm1759, %v1698, 0
  %v1800 = vsel %vm1759, %v1702, 0
  %v1803 = vsel %vm1759, %v1706, 0
  %v1806 = vsel %vm1759, %v1710, 0
  %1808 = vmatprep.subr.bf16.mxu0 0
  %1809 = vmatpush1.bf16.msra.mxu0 %v1268
  %1810 = vmatprep.subr.bf16.mxu0 0
  %1811 = vmatpush1.bf16.msra.mxu0 %v1269
  %1812 = vmatprep.subr.bf16.mxu0 0
  %1813 = vmatpush1.bf16.msra.mxu0 %v1270
  %1814 = vmatprep.subr.bf16.mxu0 0
  %1815 = vmatpush1.bf16.msra.mxu0 %v1271
  %1816 = vmatprep.subr.bf16.mxu0 0
  %1817 = vmatpush1.bf16.msra.mxu0 %v1272
  %1818 = vmatprep.subr.bf16.mxu0 0
  %1819 = vmatpush1.bf16.msra.mxu0 %v1273
  %1820 = vmatprep.subr.bf16.mxu0 0
  %1821 = vmatpush1.bf16.msra.mxu0 %v1274
  %1822 = vmatprep.subr.bf16.mxu0 0
  %1823 = vmatpush1.bf16.msra.mxu0 %v1275
  %1824 = vmatprep.subr.bf16.mxu0 0
  %1825 = vmatpush1.bf16.msra.mxu0 %v1276
  %1826 = vmatprep.subr.bf16.mxu0 0
  %1827 = vmatpush1.bf16.msra.mxu0 %v1277
  %1828 = vmatprep.subr.bf16.mxu0 0
  %1829 = vmatpush1.bf16.msra.mxu0 %v1278
  %1830 = vmatprep.subr.bf16.mxu0 0
  %1831 = vmatpush1.bf16.msra.mxu0 %v1279
  %1832 = vmatprep.subr.bf16.mxu0 0
  %1833 = vmatpush1.bf16.msra.mxu0 %v1280
  %1834 = vmatprep.subr.bf16.mxu0 0
  %1835 = vmatpush1.bf16.msra.mxu0 %v1281
  %1836 = vmatprep.subr.bf16.mxu0 0
  %1837 = vmatpush1.bf16.msra.mxu0 %v1282
  %1838 = vmatprep.subr.bf16.mxu0 0
  %1839 = vmatpush1.bf16.msra.mxu0 %v1283
  %1840 = vmatprep.mubr.bf16.mxu0 %v1648
  %1841 = vmatmul.mubr.bf16.gmra.mrb[0].mxu0 %v1647
  %v1842 = vpop.f32.mrb[0].mxu0
  %v1843 = vadd.f32 %v1298, %v1842
  %v1844 = vpop.f32.mrb[0].mxu0
  %v1845 = vpop.f32.mrb[0].mxu0
  %v1846 = vadd.f32 %v1303, %v1845
  %v1847 = vpop.f32.mrb[0].mxu0
  %1848 = vmatprep.mubr.bf16.mxu0 %v1652
  %1849 = vmatmul.mubr.bf16.gmra.mrb[0].mxu0 %v1651
  %v1850 = vpop.f32.mrb[0].mxu0
  %v1851 = vadd.f32 %v1308, %v1850
  %v1852 = vpop.f32.mrb[0].mxu0
  %v1853 = vpop.f32.mrb[0].mxu0
  %v1854 = vadd.f32 %v1313, %v1853
  %v1855 = vpop.f32.mrb[0].mxu0
  %1856 = vmatprep.mubr.bf16.mxu0 %v1656
  %1857 = vmatmul.mubr.bf16.gmra.mrb[0].mxu0 %v1655
  %v1858 = vpop.f32.mrb[0].mxu0
  %v1859 = vadd.f32 %v1318, %v1858
  %v1860 = vpop.f32.mrb[0].mxu0
  %v1861 = vpop.f32.mrb[0].mxu0
  %v1862 = vadd.f32 %v1323, %v1861
  %v1863 = vpop.f32.mrb[0].mxu0
  %1864 = vmatprep.mubr.bf16.mxu0 %v1660
  %1865 = vmatmul.mubr.bf16.gmra.mrb[0].mxu0 %v1659
  %v1866 = vpop.f32.mrb[0].mxu0
  %v1867 = vadd.f32 %v1328, %v1866
  %v1868 = vpop.f32.mrb[0].mxu0
  %v1869 = vpop.f32.mrb[0].mxu0
  %v1870 = vadd.f32 %v1333, %v1869
  %v1871 = vpop.f32.mrb[0].mxu0
  %1872 = vmatprep.mubr.bf16.mxu0 %v1664
  %1873 = vmatmul.mubr.bf16.gmra.mrb[0].mxu0 %v1663
  %v1874 = vpop.f32.mrb[0].mxu0
  %v1875 = vadd.f32 %v1338, %v1874
  %v1876 = vpop.f32.mrb[0].mxu0
  %v1877 = vpop.f32.mrb[0].mxu0
  %v1878 = vadd.f32 %v1343, %v1877
  %v1879 = vpop.f32.mrb[0].mxu0
  %1880 = vmatprep.mubr.bf16.mxu0 %v1668
  %1881 = vmatmul.mubr.bf16.gmra.mrb[0].mxu0 %v1667
  %v1882 = vpop.f32.mrb[0].mxu0
  %v1883 = vadd.f32 %v1348, %v1882
  %v1884 = vpop.f32.mrb[0].mxu0
  %v1885 = vpop.f32.mrb[0].mxu0
  %v1886 = vadd.f32 %v1353, %v1885
  %v1887 = vpop.f32.mrb[0].mxu0
  %1888 = vmatprep.mubr.bf16.mxu0 %v1672
  %1889 = vmatmul.mubr.bf16.gmra.mrb[0].mxu0 %v1671
  %v1890 = vpop.f32.mrb[0].mxu0
  %v1891 = vadd.f32 %v1358, %v1890
  %v1892 = vpop.f32.mrb[0].mxu0
  %v1893 = vpop.f32.mrb[0].mxu0
  %v1894 = vadd.f32 %v1363, %v1893
  %v1895 = vpop.f32.mrb[0].mxu0
  %1896 = vmatprep.mubr.bf16.mxu0 %v1676
  %1897 = vmatmul.mubr.bf16.gmra.mrb[0].mxu0 %v1675
  %v1898 = vpop.f32.mrb[0].mxu0
  %v1899 = vadd.f32 %v1368, %v1898
  %v1900 = vpop.f32.mrb[0].mxu0
  %v1901 = vpop.f32.mrb[0].mxu0
  %v1902 = vadd.f32 %v1373, %v1901
  %v1903 = vpop.f32.mrb[0].mxu0
  %1904 = vmatprep.mubr.bf16.mxu0 %v1680
  %1905 = vmatmul.mubr.bf16.gmra.mrb[0].mxu0 %v1679
  %v1906 = vpop.f32.mrb[0].mxu0
  %v1907 = vadd.f32 %v1378, %v1906
  %v1908 = vpop.f32.mrb[0].mxu0
  %v1909 = vpop.f32.mrb[0].mxu0
  %v1910 = vadd.f32 %v1383, %v1909
  %v1911 = vpop.f32.mrb[0].mxu0
  %1912 = vmatprep.mubr.bf16.mxu0 %v1684
  %1913 = vmatmul.mubr.bf16.gmra.mrb[0].mxu0 %v1683
  %v1914 = vpop.f32.mrb[0].mxu0
  %v1915 = vadd.f32 %v1388, %v1914
  %v1916 = vpop.f32.mrb[0].mxu0
  %v1917 = vpop.f32.mrb[0].mxu0
  %v1918 = vadd.f32 %v1393, %v1917
  %v1919 = vpop.f32.mrb[0].mxu0
  %1920 = vmatprep.mubr.bf16.mxu0 %v1688
  %1921 = vmatmul.mubr.bf16.gmra.mrb[0].mxu0 %v1687
  %v1922 = vpop.f32.mrb[0].mxu0
  %v1923 = vadd.f32 %v1398, %v1922
  %v1924 = vpop.f32.mrb[0].mxu0
  %v1925 = vpop.f32.mrb[0].mxu0
  %v1926 = vadd.f32 %v1403, %v1925
  %v1927 = vpop.f32.mrb[0].mxu0
  %1928 = vmatprep.mubr.bf16.mxu0 %v1692
  %1929 = vmatmul.mubr.bf16.gmra.mrb[0].mxu0 %v1691
  %v1930 = vpop.f32.mrb[0].mxu0
  %v1931 = vadd.f32 %v1408, %v1930
  %v1932 = vpop.f32.mrb[0].mxu0
  %v1933 = vpop.f32.mrb[0].mxu0
  %v1934 = vadd.f32 %v1413, %v1933
  %v1935 = vpop.f32.mrb[0].mxu0
  %1936 = vmatprep.mubr.bf16.mxu0 %v1696
  %1937 = vmatmul.mubr.bf16.gmra.mrb[0].mxu0 %v1695
  %v1938 = vpop.f32.mrb[0].mxu0
  %v1939 = vadd.f32 %v1418, %v1938
  %v1940 = vpop.f32.mrb[0].mxu0
  %v1941 = vpop.f32.mrb[0].mxu0
  %v1942 = vadd.f32 %v1423, %v1941
  %v1943 = vpop.f32.mrb[0].mxu0
  %1944 = vmatprep.mubr.bf16.mxu0 %v1700
  %1945 = vmatmul.mubr.bf16.gmra.mrb[0].mxu0 %v1699
  %v1946 = vpop.f32.mrb[0].mxu0
  %v1947 = vadd.f32 %v1428, %v1946
  %v1948 = vpop.f32.mrb[0].mxu0
  %v1949 = vpop.f32.mrb[0].mxu0
  %v1950 = vadd.f32 %v1433, %v1949
  %v1951 = vpop.f32.mrb[0].mxu0
  %1952 = vmatprep.mubr.bf16.mxu0 %v1704
  %1953 = vmatmul.mubr.bf16.gmra.mrb[0].mxu0 %v1703
  %v1954 = vpop.f32.mrb[0].mxu0
  %v1955 = vadd.f32 %v1438, %v1954
  %v1956 = vpop.f32.mrb[0].mxu0
  %v1957 = vpop.f32.mrb[0].mxu0
  %v1958 = vadd.f32 %v1443, %v1957
  %v1959 = vpop.f32.mrb[0].mxu0
  %1960 = vmatprep.mubr.bf16.mxu0 %v1708
  %1961 = vmatmul.mubr.bf16.gmra.mrb[0].mxu0 %v1707
  %v1962 = vpop.f32.mrb[0].mxu0
  %v1963 = vadd.f32 %v1448, %v1962
  %v1964 = vpop.f32.mrb[0].mxu0
  %v1965 = vpop.f32.mrb[0].mxu0
  %v1966 = vadd.f32 %v1453, %v1965
  %v1967 = vpop.f32.mrb[0].mxu0
  %1968 = vdwg.mxu0
  %1969 = vmatprep.subr.bf16.mxu0 0
  %1970 = vmatpush1.bf16.msra.mxu0 %v1284
  %1971 = vmatprep.subr.bf16.mxu0 0
  %1972 = vmatpush1.bf16.msra.mxu0 %v1285
  %1973 = vmatprep.subr.bf16.mxu0 0
  %1974 = vmatpush1.bf16.msra.mxu0 %v1286
  %1975 = vmatprep.subr.bf16.mxu0 0
  %1976 = vmatpush1.bf16.msra.mxu0 %v1287
  %1977 = vmatprep.subr.bf16.mxu0 0
  %1978 = vmatpush1.bf16.msra.mxu0 %v1288
  %1979 = vmatprep.subr.bf16.mxu0 0
  %1980 = vmatpush1.bf16.msra.mxu0 %v1289
  %1981 = vmatprep.subr.bf16.mxu0 0
  %1982 = vmatpush1.bf16.msra.mxu0 %v1290
  %1983 = vmatprep.subr.bf16.mxu0 0
  %1984 = vmatpush1.bf16.msra.mxu0 %v1291
  %1985 = vmatprep.subr.bf16.mxu0 0
  %1986 = vmatpush1.bf16.msra.mxu0 %v1292
  %1987 = vmatprep.subr.bf16.mxu0 0
  %1988 = vmatpush1.bf16.msra.mxu0 %v1293
  %1989 = vmatprep.subr.bf16.mxu0 0
  %1990 = vmatpush1.bf16.msra.mxu0 %v1294
  %1991 = vmatprep.subr.bf16.mxu0 0
  %1992 = vmatpush1.bf16.msra.mxu0 0
  %1993 = vmatprep.subr.bf16.mxu0 0
  %1994 = vmatpush1.bf16.msra.mxu0 0
  %1995 = vmatprep.subr.bf16.mxu0 0
  %1996 = vmatpush1.bf16.msra.mxu0 0
  %1997 = vmatprep.subr.bf16.mxu0 0
  %1998 = vmatpush1.bf16.msra.mxu0 0
  %1999 = vmatprep.subr.bf16.mxu0 0
  %2000 = vmatpush1.bf16.msra.mxu0 0
  %2001 = vmatprep.mubr.bf16.mxu0 %v1761
  %2002 = vmatmul.mubr.bf16.gmra.mrb[0].mxu0 %v1649
  %v2003 = vpop.f32.mrb[0].mxu0
  %v2004 = vadd.f32 %v1843, %v2003
  %v2005 = vpop.f32.mrb[0].mxu0
  %v2006 = vpop.f32.mrb[0].mxu0
  %v2007 = vadd.f32 %v1846, %v2006
  %v2008 = vpop.f32.mrb[0].mxu0
  %2009 = vmatprep.mubr.bf16.mxu0 %v1764
  %2010 = vmatmul.mubr.bf16.gmra.mrb[0].mxu0 %v1653
  %v2011 = vpop.f32.mrb[0].mxu0
  %v2012 = vadd.f32 %v1851, %v2011
  %v2013 = vpop.f32.mrb[0].mxu0
  %v2014 = vpop.f32.mrb[0].mxu0
  %v2015 = vadd.f32 %v1854, %v2014
  %v2016 = vpop.f32.mrb[0].mxu0
  %2017 = vmatprep.mubr.bf16.mxu0 %v1767
  %2018 = vmatmul.mubr.bf16.gmra.mrb[0].mxu0 %v1657
  %v2019 = vpop.f32.mrb[0].mxu0
  %v2020 = vadd.f32 %v1859, %v2019
  %v2021 = vpop.f32.mrb[0].mxu0
  %v2022 = vpop.f32.mrb[0].mxu0
  %v2023 = vadd.f32 %v1862, %v2022
  %v2024 = vpop.f32.mrb[0].mxu0
  %2025 = vmatprep.mubr.bf16.mxu0 %v1770
  %2026 = vmatmul.mubr.bf16.gmra.mrb[0].mxu0 %v1661
  %v2027 = vpop.f32.mrb[0].mxu0
  %v2028 = vadd.f32 %v1867, %v2027
  %v2029 = vpop.f32.mrb[0].mxu0
  %v2030 = vpop.f32.mrb[0].mxu0
  %v2031 = vadd.f32 %v1870, %v2030
  %v2032 = vpop.f32.mrb[0].mxu0
  %2033 = vmatprep.mubr.bf16.mxu0 %v1773
  %2034 = vmatmul.mubr.bf16.gmra.mrb[0].mxu0 %v1665
  %v2035 = vpop.f32.mrb[0].mxu0
  %v2036 = vadd.f32 %v1875, %v2035
  %v2037 = vpop.f32.mrb[0].mxu0
  %v2038 = vpop.f32.mrb[0].mxu0
  %v2039 = vadd.f32 %v1878, %v2038
  %v2040 = vpop.f32.mrb[0].mxu0
  %2041 = vmatprep.mubr.bf16.mxu0 %v1776
  %2042 = vmatmul.mubr.bf16.gmra.mrb[0].mxu0 %v1669
  %v2043 = vpop.f32.mrb[0].mxu0
  %v2044 = vadd.f32 %v1883, %v2043
  %v2045 = vpop.f32.mrb[0].mxu0
  %v2046 = vpop.f32.mrb[0].mxu0
  %v2047 = vadd.f32 %v1886, %v2046
  %v2048 = vpop.f32.mrb[0].mxu0
  %2049 = vmatprep.mubr.bf16.mxu0 %v1779
  %2050 = vmatmul.mubr.bf16.gmra.mrb[0].mxu0 %v1673
  %v2051 = vpop.f32.mrb[0].mxu0
  %v2052 = vadd.f32 %v1891, %v2051
  %v2053 = vpop.f32.mrb[0].mxu0
  %v2054 = vpop.f32.mrb[0].mxu0
  %v2055 = vadd.f32 %v1894, %v2054
  %v2056 = vpop.f32.mrb[0].mxu0
  %2057 = vmatprep.mubr.bf16.mxu0 %v1782
  %2058 = vmatmul.mubr.bf16.gmra.mrb[0].mxu0 %v1677
  %v2059 = vpop.f32.mrb[0].mxu0
  %v2060 = vadd.f32 %v1899, %v2059
  %v2061 = vpop.f32.mrb[0].mxu0
  %v2062 = vpop.f32.mrb[0].mxu0
  %v2063 = vadd.f32 %v1902, %v2062
  %v2064 = vpop.f32.mrb[0].mxu0
  %2065 = vmatprep.mubr.bf16.mxu0 %v1785
  %2066 = vmatmul.mubr.bf16.gmra.mrb[0].mxu0 %v1681
  %v2067 = vpop.f32.mrb[0].mxu0
  %v2068 = vadd.f32 %v1907, %v2067
  %v2069 = vpop.f32.mrb[0].mxu0
  %v2070 = vpop.f32.mrb[0].mxu0
  %v2071 = vadd.f32 %v1910, %v2070
  %v2072 = vpop.f32.mrb[0].mxu0
  %2073 = vmatprep.mubr.bf16.mxu0 %v1788
  %2074 = vmatmul.mubr.bf16.gmra.mrb[0].mxu0 %v1685
  %v2075 = vpop.f32.mrb[0].mxu0
  %v2076 = vadd.f32 %v1915, %v2075
  %v2077 = vpop.f32.mrb[0].mxu0
  %v2078 = vpop.f32.mrb[0].mxu0
  %v2079 = vadd.f32 %v1918, %v2078
  %v2080 = vpop.f32.mrb[0].mxu0
  %2081 = vmatprep.mubr.bf16.mxu0 %v1791
  %2082 = vmatmul.mubr.bf16.gmra.mrb[0].mxu0 %v1689
  %v2083 = vpop.f32.mrb[0].mxu0
  %v2084 = vadd.f32 %v1923, %v2083
  %v2085 = vpop.f32.mrb[0].mxu0
  %v2086 = vpop.f32.mrb[0].mxu0
  %v2087 = vadd.f32 %v1926, %v2086
  %v2088 = vpop.f32.mrb[0].mxu0
  %2089 = vmatprep.mubr.bf16.mxu0 %v1794
  %2090 = vmatmul.mubr.bf16.gmra.mrb[0].mxu0 %v1693
  %v2091 = vpop.f32.mrb[0].mxu0
  %v2092 = vadd.f32 %v1931, %v2091
  %v2093 = vpop.f32.mrb[0].mxu0
  %v2094 = vpop.f32.mrb[0].mxu0
  %v2095 = vadd.f32 %v1934, %v2094
  %v2096 = vpop.f32.mrb[0].mxu0
  %2097 = vmatprep.mubr.bf16.mxu0 %v1797
  %2098 = vmatmul.mubr.bf16.gmra.mrb[0].mxu0 %v1697
  %v2099 = vpop.f32.mrb[0].mxu0
  %v2100 = vadd.f32 %v1939, %v2099
  %v2101 = vpop.f32.mrb[0].mxu0
  %v2102 = vpop.f32.mrb[0].mxu0
  %v2103 = vadd.f32 %v1942, %v2102
  %v2104 = vpop.f32.mrb[0].mxu0
  %2105 = vmatprep.mubr.bf16.mxu0 %v1800
  %2106 = vmatmul.mubr.bf16.gmra.mrb[0].mxu0 %v1701
  %v2107 = vpop.f32.mrb[0].mxu0
  %v2108 = vadd.f32 %v1947, %v2107
  %v2109 = vpop.f32.mrb[0].mxu0
  %v2110 = vpop.f32.mrb[0].mxu0
  %v2111 = vadd.f32 %v1950, %v2110
  %v2112 = vpop.f32.mrb[0].mxu0
  %2113 = vmatprep.mubr.bf16.mxu0 %v1803
  %2114 = vmatmul.mubr.bf16.gmra.mrb[0].mxu0 %v1705
  %v2115 = vpop.f32.mrb[0].mxu0
  %v2116 = vadd.f32 %v1955, %v2115
  %v2117 = vpop.f32.mrb[0].mxu0
  %v2118 = vpop.f32.mrb[0].mxu0
  %v2119 = vadd.f32 %v1958, %v2118
  %v2120 = vpop.f32.mrb[0].mxu0
  %2121 = vmatprep.mubr.bf16.mxu0 %v1806
  %2122 = vmatmul.mubr.bf16.gmra.mrb[0].mxu0 %v1709
  %v2123 = vpop.f32.mrb[0].mxu0
  %v2124 = vadd.f32 %v1963, %v2123
  %v2125 = vpop.f32.mrb[0].mxu0
  %v2126 = vpop.f32.mrb[0].mxu0
  %v2127 = vadd.f32 %v1966, %v2126
  %v2128 = vpop.f32.mrb[0].mxu0
  %2129 = vdwg.mxu0
  %v2130 = vmax.f32 %v2004, 0.0
  %v2131 = vmax.f32 %v2007, 0.0
  %v2132 = vmax.f32 %v2012, 0.0
  %v2133 = vmax.f32 %v2015, 0.0
  %v2134 = vmax.f32 %v2020, 0.0
  %v2135 = vmax.f32 %v2023, 0.0
  %v2136 = vmax.f32 %v2028, 0.0
  %v2137 = vmax.f32 %v2031, 0.0
  %v2138 = vmax.f32 %v2036, 0.0
  %v2139 = vmax.f32 %v2039, 0.0
  %v2140 = vmax.f32 %v2044, 0.0
  %v2141 = vmax.f32 %v2047, 0.0
  %v2142 = vmax.f32 %v2052, 0.0
  %v2143 = vmax.f32 %v2055, 0.0
  %v2144 = vmax.f32 %v2060, 0.0
  %v2145 = vmax.f32 %v2063, 0.0
  %v2146 = vmax.f32 %v2068, 0.0
  %v2147 = vmax.f32 %v2071, 0.0
  %v2148 = vmax.f32 %v2076, 0.0
  %v2149 = vmax.f32 %v2079, 0.0
  %v2150 = vmax.f32 %v2084, 0.0
  %v2151 = vmax.f32 %v2087, 0.0
  %v2152 = vmax.f32 %v2092, 0.0
  %v2153 = vmax.f32 %v2095, 0.0
  %v2154 = vmax.f32 %v2100, 0.0
  %v2155 = vmax.f32 %v2103, 0.0
  %v2156 = vmax.f32 %v2108, 0.0
  %v2157 = vmax.f32 %v2111, 0.0
  %v2158 = vmax.f32 %v2116, 0.0
  %v2159 = vmax.f32 %v2119, 0.0
  %v2160 = vmax.f32 %v2124, 0.0
  %v2161 = vmax.f32 %v2127, 0.0
  %v2162 = vmax.f32 %v2130, %v2146
  %v2163 = vmax.f32 %v2131, %v2147
  %v2164 = vmax.f32 %v2132, %v2148
  %v2165 = vmax.f32 %v2133, %v2149
  %v2166 = vmax.f32 %v2134, %v2150
  %v2167 = vmax.f32 %v2135, %v2151
  %v2168 = vmax.f32 %v2136, %v2152
  %v2169 = vmax.f32 %v2137, %v2153
  %v2170 = vmax.f32 %v2138, %v2154
  %v2171 = vmax.f32 %v2139, %v2155
  %v2172 = vmax.f32 %v2140, %v2156
  %v2173 = vmax.f32 %v2141, %v2157
  %v2174 = vmax.f32 %v2142, %v2158
  %v2175 = vmax.f32 %v2143, %v2159
  %v2176 = vmax.f32 %v2144, %v2160
  %v2177 = vmax.f32 %v2145, %v2161
  %v2178 = vpack.c.bf16 %v2163, %v2162
  %v2179 = vpack.c.bf16 %v2165, %v2164
  %v2180 = vpack.c.bf16 %v2167, %v2166
  %v2181 = vpack.c.bf16 %v2169, %v2168
  %v2182 = vpack.c.bf16 %v2171, %v2170
  %v2183 = vpack.c.bf16 %v2173, %v2172
  %v2184 = vpack.c.bf16 %v2175, %v2174
  %v2185 = vpack.c.bf16 %v2177, %v2176
  %v2194 = vunpack.c.l.b16 %v1198
  %v2195 = vunpack.c.l.b16 %v1199
  %v2196 = vunpack.c.l.b16 %v1200
  %v2197 = vunpack.c.l.b16 %v1201
  %v2198 = vunpack.c.l.b16 %v1202
  %v2199 = vunpack.c.l.b16 %v1203
  %v2200 = vunpack.c.l.b16 %v1204
  %v2201 = vunpack.c.l.b16 %v1205
  %v2202 = vpack.c.b16 %v2195, %v2194
  %v2203 = vpack.c.b16 %v2197, %v2196
  %v2204 = vpack.c.b16 %v2199, %v2198
  %v2205 = vpack.c.b16 %v2201, %v2200
  %2210 = vmatprep.subr.bf16.mxu0 0
  %2211 = vmatpush1.bf16.msra.mxu0 %v2178
  %2212 = vmatprep.subr.bf16.mxu0 0
  %2213 = vmatpush1.bf16.msra.mxu0 %v2179
  %2214 = vmatprep.subr.bf16.mxu0 0
  %2215 = vmatpush1.bf16.msra.mxu0 %v2180
  %2216 = vmatprep.subr.bf16.mxu0 0
  %2217 = vmatpush1.bf16.msra.mxu0 %v2181
  %2218 = vmatprep.subr.bf16.mxu0 0
  %2219 = vmatpush1.bf16.msra.mxu0 %v2182
  %2220 = vmatprep.subr.bf16.mxu0 0
  %2221 = vmatpush1.bf16.msra.mxu0 %v2183
  %2222 = vmatprep.subr.bf16.mxu0 0
  %2223 = vmatpush1.bf16.msra.mxu0 %v2184
  %2224 = vmatprep.subr.bf16.mxu0 0
  %2225 = vmatpush1.bf16.msra.mxu0 %v2185
  %2226 = vmatprep.subr.bf16.mxu0 0
  %2227 = vmatpush1.bf16.msra.mxu0 0
  %2228 = vmatprep.subr.bf16.mxu0 0
  %2229 = vmatpush1.bf16.msra.mxu0 0
  %2230 = vmatprep.subr.bf16.mxu0 0
  %2231 = vmatpush1.bf16.msra.mxu0 0
  %2232 = vmatprep.subr.bf16.mxu0 0
  %2233 = vmatpush1.bf16.msra.mxu0 0
  %2234 = vmatprep.subr.bf16.mxu0 0
  %2235 = vmatpush1.bf16.msra.mxu0 0
  %2236 = vmatprep.subr.bf16.mxu0 0
  %2237 = vmatpush1.bf16.msra.mxu0 0
  %2238 = vmatprep.subr.bf16.mxu0 0
  %2239 = vmatpush1.bf16.msra.mxu0 0
  %2240 = vmatprep.subr.bf16.mxu0 0
  %2241 = vmatpush1.bf16.msra.mxu0 0
  %2242 = vmatprep.mubr.bf16.mxu0 0
  %2243 = vmatmul.mubr.bf16.gmra.mrb[0].mxu0 %v2202
  %v2244 = vpop.f32.mrb[0].mxu0
  %v2245 = vadd.f32 0.0, %v2244
  %v2246 = vpop.f32.mrb[0].mxu0
  %v2247 = vpop.f32.mrb[0].mxu0
  %v2248 = vadd.f32 0.0, %v2247
  %v2249 = vpop.f32.mrb[0].mxu0
  %2250 = vmatprep.mubr.bf16.mxu0 0
  %2251 = vmatmul.mubr.bf16.gmra.mrb[0].mxu0 %v2203
  %v2252 = vpop.f32.mrb[0].mxu0
  %v2253 = vadd.f32 0.0, %v2252
  %v2254 = vpop.f32.mrb[0].mxu0
  %v2255 = vpop.f32.mrb[0].mxu0
  %v2256 = vadd.f32 0.0, %v2255
  %v2257 = vpop.f32.mrb[0].mxu0
  %2258 = vmatprep.mubr.bf16.mxu0 0
  %2259 = vmatmul.mubr.bf16.gmra.mrb[0].mxu0 %v2204
  %v2260 = vpop.f32.mrb[0].mxu0
  %v2261 = vadd.f32 0.0, %v2260
  %v2262 = vpop.f32.mrb[0].mxu0
  %v2263 = vpop.f32.mrb[0].mxu0
  %v2264 = vadd.f32 0.0, %v2263
  %v2265 = vpop.f32.mrb[0].mxu0
  %2266 = vmatprep.mubr.bf16.mxu0 0
  %2267 = vmatmul.mubr.bf16.gmra.mrb[0].mxu0 %v2205
  %v2268 = vpop.f32.mrb[0].mxu0
  %v2269 = vadd.f32 0.0, %v2268
  %v2270 = vpop.f32.mrb[0].mxu0
  %v2271 = vpop.f32.mrb[0].mxu0
  %v2272 = vadd.f32 0.0, %v2271
  %v2273 = vpop.f32.mrb[0].mxu0
  %2274 = vdwg.mxu0
  %v2283 = vunpack.c.l.b16 %v1206
  %v2284 = vunpack.c.l.b16 %v1207
  %v2285 = vunpack.c.l.b16 %v1208
  %v2286 = vunpack.c.l.b16 %v1209
  %v2287 = vunpack.c.l.b16 %v1210
  %v2288 = vunpack.c.l.b16 %v1211
  %v2289 = vunpack.c.l.b16 %v1212
  %v2290 = vunpack.c.l.b16 %v1213
  %v2291 = vpack.c.b16 %v2284, %v2283
  %v2292 = vpack.c.b16 %v2286, %v2285
  %v2293 = vpack.c.b16 %v2288, %v2287
  %v2294 = vpack.c.b16 %v2290, %v2289
  %2299 = vmatprep.subr.bf16.mxu0 0
  %2300 = vmatpush1.bf16.msra.mxu0 %v2178
  %2301 = vmatprep.subr.bf16.mxu0 0
  %2302 = vmatpush1.bf16.msra.mxu0 %v2179
  %2303 = vmatprep.subr.bf16.mxu0 0
  %2304 = vmatpush1.bf16.msra.mxu0 %v2180
  %2305 = vmatprep.subr.bf16.mxu0 0
  %2306 = vmatpush1.bf16.msra.mxu0 %v2181
  %2307 = vmatprep.subr.bf16.mxu0 0
  %2308 = vmatpush1.bf16.msra.mxu0 %v2182
  %2309 = vmatprep.subr.bf16.mxu0 0
  %2310 = vmatpush1.bf16.msra.mxu0 %v2183
  %2311 = vmatprep.subr.bf16.mxu0 0
  %2312 = vmatpush1.bf16.msra.mxu0 %v2184
  %2313 = vmatprep.subr.bf16.mxu0 0
  %2314 = vmatpush1.bf16.msra.mxu0 %v2185
  %2315 = vmatprep.subr.bf16.mxu0 0
  %2316 = vmatpush1.bf16.msra.mxu0 0
  %2317 = vmatprep.subr.bf16.mxu0 0
  %2318 = vmatpush1.bf16.msra.mxu0 0
  %2319 = vmatprep.subr.bf16.mxu0 0
  %2320 = vmatpush1.bf16.msra.mxu0 0
  %2321 = vmatprep.subr.bf16.mxu0 0
  %2322 = vmatpush1.bf16.msra.mxu0 0
  %2323 = vmatprep.subr.bf16.mxu0 0
  %2324 = vmatpush1.bf16.msra.mxu0 0
  %2325 = vmatprep.subr.bf16.mxu0 0
  %2326 = vmatpush1.bf16.msra.mxu0 0
  %2327 = vmatprep.subr.bf16.mxu0 0
  %2328 = vmatpush1.bf16.msra.mxu0 0
  %2329 = vmatprep.subr.bf16.mxu0 0
  %2330 = vmatpush1.bf16.msra.mxu0 0
  %2331 = vmatprep.mubr.bf16.mxu0 0
  %2332 = vmatmul.mubr.bf16.gmra.mrb[0].mxu0 %v2291
  %v2333 = vpop.f32.mrb[0].mxu0
  %v2334 = vadd.f32 0.0, %v2333
  %v2335 = vpop.f32.mrb[0].mxu0
  %v2336 = vpop.f32.mrb[0].mxu0
  %v2337 = vadd.f32 0.0, %v2336
  %v2338 = vpop.f32.mrb[0].mxu0
  %2339 = vmatprep.mubr.bf16.mxu0 0
  %2340 = vmatmul.mubr.bf16.gmra.mrb[0].mxu0 %v2292
  %v2341 = vpop.f32.mrb[0].mxu0
  %v2342 = vadd.f32 0.0, %v2341
  %v2343 = vpop.f32.mrb[0].mxu0
  %v2344 = vpop.f32.mrb[0].mxu0
  %v2345 = vadd.f32 0.0, %v2344
  %v2346 = vpop.f32.mrb[0].mxu0
  %2347 = vmatprep.mubr.bf16.mxu0 0
  %2348 = vmatmul.mubr.bf16.gmra.mrb[0].mxu0 %v2293
  %v2349 = vpop.f32.mrb[0].mxu0
  %v2350 = vadd.f32 0.0, %v2349
  %v2351 = vpop.f32.mrb[0].mxu0
  %v2352 = vpop.f32.mrb[0].mxu0
  %v2353 = vadd.f32 0.0, %v2352
  %v2354 = vpop.f32.mrb[0].mxu0
  %2355 = vmatprep.mubr.bf16.mxu0 0
  %2356 = vmatmul.mubr.bf16.gmra.mrb[0].mxu0 %v2294
  %v2357 = vpop.f32.mrb[0].mxu0
  %v2358 = vadd.f32 0.0, %v2357
  %v2359 = vpop.f32.mrb[0].mxu0
  %v2360 = vpop.f32.mrb[0].mxu0
  %v2361 = vadd.f32 0.0, %v2360
  %v2362 = vpop.f32.mrb[0].mxu0
  %2363 = vdwg.mxu0
  %v2364 = vmax.f32 %v2245, %v2334
  %v2365 = vmax.f32 %v2248, %v2337
  %v2366 = vmax.f32 %v2253, %v2342
  %v2367 = vmax.f32 %v2256, %v2345
  %v2368 = vmax.f32 %v2261, %v2350
  %v2369 = vmax.f32 %v2264, %v2353
  %v2370 = vmax.f32 %v2269, %v2358
  %v2371 = vmax.f32 %v2272, %v2361
  %vm2372 = vcmask 15360
  %2373 = vst.msk [vmem:[#allocation3] sm:$0xff] %vm2372, %v2364
  %2374 = vst.msk [vmem:[#allocation3 + $0x8] sm:$0xff] %vm2372, %v2365
  %2375 = vst.msk [vmem:[#allocation3 + $0x10] sm:$0xff] %vm2372, %v2366
  %2376 = vst.msk [vmem:[#allocation3 + $0x18] sm:$0xff] %vm2372, %v2367
  %2377 = vst.msk [vmem:[#allocation3 + $0x20] sm:$0xff] %vm2372, %v2368
  %2378 = vst.msk [vmem:[#allocation3 + $0x28] sm:$0xff] %vm2372, %v2369
  %2379 = vst.msk [vmem:[#allocation3 + $0x30] sm:$0xff] %vm2372, %v2370
  %2380 = vst.msk [vmem:[#allocation3 + $0x38] sm:$0xff] %vm2372, %v2371
  %v2381 = vld [vmem:[#allocation2 + $0x90] sm:$0xff]
  %v2382 = vld [vmem:[#allocation2 + $0x98] sm:$0xff]
  %v2383 = vld [vmem:[#allocation2 + $0xa0] sm:$0xff]
  %v2384 = vld [vmem:[#allocation2 + $0xa8] sm:$0xff]
  %v2385 = vld [vmem:[#allocation2 + $0xb0] sm:$0xff]
  %v2386 = vld [vmem:[#allocation2 + $0xb8] sm:$0xff]
  %v2387 = vld [vmem:[#allocation2 + $0xc0] sm:$0xff]
  %v2388 = vld [vmem:[#allocation2 + $0xc8] sm:$0xff]
  %v2389 = vld [vmem:[#allocation2 + $0xd0] sm:$0xff]
  %v2390 = vld [vmem:[#allocation2 + $0xd8] sm:$0xff]
  %v2391 = vld [vmem:[#allocation2 + $0xe0] sm:$0xff]
  %v2392 = vld [vmem:[#allocation2 + $0xe8] sm:$0xff]
  %v2393 = vld [vmem:[#allocation2 + $0xf0] sm:$0xff]
  %v2394 = vld [vmem:[#allocation2 + $0xf8] sm:$0xff]
  %v2395 = vld [vmem:[#allocation2 + $0x100] sm:$0xff]
  %v2396 = vld [vmem:[#allocation2 + $0x108] sm:$0xff]
  %v2397 = vld [vmem:[#allocation2 + $0x110] sm:$0xff]
  %v2398 = vld [vmem:[#allocation2 + $0x118] sm:$0xff]
  %v2399 = vld [vmem:[#allocation2 + $0x120] sm:$0xff]
  %v2400 = vld [vmem:[#allocation2 + $0x128] sm:$0xff]
  %v2401 = vld [vmem:[#allocation2 + $0x130] sm:$0xff]
  %v2402 = vld [vmem:[#allocation2 + $0x138] sm:$0xff]
  %v2403 = vld [vmem:[#allocation2 + $0x140] sm:$0xff]
  %v2404 = vld [vmem:[#allocation2 + $0x148] sm:$0xff]
  %v2405 = vld [vmem:[#allocation2 + $0x150] sm:$0xff]
  %v2406 = vld [vmem:[#allocation2 + $0x158] sm:$0xff]
  %v2407 = vld [vmem:[#allocation2 + $0x160] sm:$0xff]
  %v2408 = vld [vmem:[#allocation2 + $0x168] sm:$0xff]
  %v2409 = vld [vmem:[#allocation2 + $0x170] sm:$0xff]
  %v2410 = vld [vmem:[#allocation2 + $0x178] sm:$0xff]
  %v2411 = vld [vmem:[#allocation2 + $0x180] sm:$0xff]
  %v2412 = vld [vmem:[#allocation2 + $0x188] sm:$0xff]
  %v2413 = vld [vmem:[#allocation2 + $0x190] sm:$0xff]
  %v2414 = vld [vmem:[#allocation2 + $0x198] sm:$0xff]
  %v2415 = vld [vmem:[#allocation2 + $0x1a0] sm:$0xff]
  %v2416 = vld [vmem:[#allocation2 + $0x1a8] sm:$0xff]
  %v2417 = vld [vmem:[#allocation2 + $0x1b0] sm:$0xff]
  %v2418 = vld [vmem:[#allocation2 + $0x1b8] sm:$0xff]
  %v2419 = vld [vmem:[#allocation2 + $0x1c0] sm:$0xff]
  %v2420 = vld [vmem:[#allocation2 + $0x1c8] sm:$0xff]
  %v2421 = vld [vmem:[#allocation2 + $0x1d0] sm:$0xff]
  %v2422 = vld [vmem:[#allocation2 + $0x1d8] sm:$0xff]
  %v2423 = vld [vmem:[#allocation2 + $0x1e0] sm:$0xff]
  %v2424 = vld [vmem:[#allocation2 + $0x1e8] sm:$0xff]
  %v2425 = vld [vmem:[#allocation2 + $0x1f0] sm:$0xff]
  %v2426 = vld [vmem:[#allocation2 + $0x1f8] sm:$0xff]
  %v2427 = vld [vmem:[#allocation2 + $0x200] sm:$0xff]
  %v2428 = vld [vmem:[#allocation2 + $0x208] sm:$0xff]
  %v2429 = vld [vmem:[#allocation2 + $0x210] sm:$0xff]
  %v2430 = vld [vmem:[#allocation2 + $0x218] sm:$0xff]
  %v2431 = vld [vmem:[#allocation2 + $0x220] sm:$0xff]
  %v2432 = vld [vmem:[#allocation2 + $0x228] sm:$0xff]
  %v2433 = vld [vmem:[#allocation2 + $0x230] sm:$0xff]
  %v2434 = vld [vmem:[#allocation2 + $0x238] sm:$0xff]
  %v2435 = vpack.c.bf16 %v2382, %v2381
  %v2436 = vpack.c.bf16 %v2384, %v2383
  %v2437 = vpack.c.bf16 %v2386, %v2385
  %v2438 = vpack.c.bf16 %v2388, %v2387
  %v2439 = vpack.c.bf16 %v2390, %v2389
  %v2440 = vpack.c.bf16 %v2392, %v2391
  %v2441 = vpack.c.bf16 %v2394, %v2393
  %v2442 = vpack.c.bf16 %v2396, %v2395
  %v2443 = vpack.c.bf16 %v2398, %v2397
  %v2444 = vpack.c.bf16 %v2400, %v2399
  %v2445 = vpack.c.bf16 %v2402, %v2401
  %v2446 = vpack.c.bf16 %v2404, %v2403
  %v2447 = vpack.c.bf16 %v2406, %v2405
  %v2448 = vpack.c.bf16 %v2408, %v2407
  %v2449 = vpack.c.bf16 %v2410, %v2409
  %v2450 = vpack.c.bf16 %v2412, %v2411
  %v2451 = vpack.c.bf16 %v2414, %v2413
  %v2452 = vpack.c.bf16 %v2416, %v2415
  %v2453 = vpack.c.bf16 %v2418, %v2417
  %v2454 = vpack.c.bf16 %v2420, %v2419
  %v2455 = vpack.c.bf16 %v2422, %v2421
  %v2456 = vpack.c.bf16 %v2424, %v2423
  %v2457 = vpack.c.bf16 %v2426, %v2425
  %v2458 = vpack.c.bf16 %v2428, %v2427
  %v2459 = vpack.c.bf16 %v2430, %v2429
  %v2460 = vpack.c.bf16 %v2432, %v2431
  %v2461 = vpack.c.bf16 %v2434, %v2433
  %2462 = vmatprep.subr.bf16.mxu0 0
  %2463 = vmatpush1.bf16.msra.mxu0 %v2435
  %2464 = vmatprep.subr.bf16.mxu0 0
  %2465 = vmatpush1.bf16.msra.mxu0 %v2436
  %2466 = vmatprep.subr.bf16.mxu0 0
  %2467 = vmatpush1.bf16.msra.mxu0 %v2437
  %2468 = vmatprep.subr.bf16.mxu0 0
  %2469 = vmatpush1.bf16.msra.mxu0 %v2438
  %2470 = vmatprep.subr.bf16.mxu0 0
  %2471 = vmatpush1.bf16.msra.mxu0 %v2439
  %2472 = vmatprep.subr.bf16.mxu0 0
  %2473 = vmatpush1.bf16.msra.mxu0 %v2440
  %2474 = vmatprep.subr.bf16.mxu0 0
  %2475 = vmatpush1.bf16.msra.mxu0 %v2441
  %2476 = vmatprep.subr.bf16.mxu0 0
  %2477 = vmatpush1.bf16.msra.mxu0 %v2442
  %2478 = vmatprep.subr.bf16.mxu0 0
  %2479 = vmatpush1.bf16.msra.mxu0 %v2443
  %2480 = vmatprep.subr.bf16.mxu0 0
  %2481 = vmatpush1.bf16.msra.mxu0 %v2444
  %2482 = vmatprep.subr.bf16.mxu0 0
  %2483 = vmatpush1.bf16.msra.mxu0 %v2445
  %2484 = vmatprep.subr.bf16.mxu0 0
  %2485 = vmatpush1.bf16.msra.mxu0 %v2446
  %2486 = vmatprep.subr.bf16.mxu0 0
  %2487 = vmatpush1.bf16.msra.mxu0 %v2447
  %2488 = vmatprep.subr.bf16.mxu0 0
  %2489 = vmatpush1.bf16.msra.mxu0 %v2448
  %2490 = vmatprep.subr.bf16.mxu0 0
  %2491 = vmatpush1.bf16.msra.mxu0 %v2449
  %2492 = vmatprep.subr.bf16.mxu0 0
  %2493 = vmatpush1.bf16.msra.mxu0 %v2450
  %2494 = vmatprep.mubr.bf16.mxu0 %v1648
  %2495 = vmatmul.mubr.bf16.gmra.mrb[0].mxu0 %v1647
  %v2496 = vpop.f32.mrb[0].mxu0
  %v2497 = vadd.f32 %v1298, %v2496
  %v2498 = vpop.f32.mrb[0].mxu0
  %v2499 = vpop.f32.mrb[0].mxu0
  %v2500 = vadd.f32 %v1303, %v2499
  %v2501 = vpop.f32.mrb[0].mxu0
  %2502 = vmatprep.mubr.bf16.mxu0 %v1652
  %2503 = vmatmul.mubr.bf16.gmra.mrb[0].mxu0 %v1651
  %v2504 = vpop.f32.mrb[0].mxu0
  %v2505 = vadd.f32 %v1308, %v2504
  %v2506 = vpop.f32.mrb[0].mxu0
  %v2507 = vpop.f32.mrb[0].mxu0
  %v2508 = vadd.f32 %v1313, %v2507
  %v2509 = vpop.f32.mrb[0].mxu0
  %2510 = vmatprep.mubr.bf16.mxu0 %v1656
  %2511 = vmatmul.mubr.bf16.gmra.mrb[0].mxu0 %v1655
  %v2512 = vpop.f32.mrb[0].mxu0
  %v2513 = vadd.f32 %v1318, %v2512
  %v2514 = vpop.f32.mrb[0].mxu0
  %v2515 = vpop.f32.mrb[0].mxu0
  %v2516 = vadd.f32 %v1323, %v2515
  %v2517 = vpop.f32.mrb[0].mxu0
  %2518 = vmatprep.mubr.bf16.mxu0 %v1660
  %2519 = vmatmul.mubr.bf16.gmra.mrb[0].mxu0 %v1659
  %v2520 = vpop.f32.mrb[0].mxu0
  %v2521 = vadd.f32 %v1328, %v2520
  %v2522 = vpop.f32.mrb[0].mxu0
  %v2523 = vpop.f32.mrb[0].mxu0
  %v2524 = vadd.f32 %v1333, %v2523
  %v2525 = vpop.f32.mrb[0].mxu0
  %2526 = vmatprep.mubr.bf16.mxu0 %v1664
  %2527 = vmatmul.mubr.bf16.gmra.mrb[0].mxu0 %v1663
  %v2528 = vpop.f32.mrb[0].mxu0
  %v2529 = vadd.f32 %v1338, %v2528
  %v2530 = vpop.f32.mrb[0].mxu0
  %v2531 = vpop.f32.mrb[0].mxu0
  %v2532 = vadd.f32 %v1343, %v2531
  %v2533 = vpop.f32.mrb[0].mxu0
  %2534 = vmatprep.mubr.bf16.mxu0 %v1668
  %2535 = vmatmul.mubr.bf16.gmra.mrb[0].mxu0 %v1667
  %v2536 = vpop.f32.mrb[0].mxu0
  %v2537 = vadd.f32 %v1348, %v2536
  %v2538 = vpop.f32.mrb[0].mxu0
  %v2539 = vpop.f32.mrb[0].mxu0
  %v2540 = vadd.f32 %v1353, %v2539
  %v2541 = vpop.f32.mrb[0].mxu0
  %2542 = vmatprep.mubr.bf16.mxu0 %v1672
  %2543 = vmatmul.mubr.bf16.gmra.mrb[0].mxu0 %v1671
  %v2544 = vpop.f32.mrb[0].mxu0
  %v2545 = vadd.f32 %v1358, %v2544
  %v2546 = vpop.f32.mrb[0].mxu0
  %v2547 = vpop.f32.mrb[0].mxu0
  %v2548 = vadd.f32 %v1363, %v2547
  %v2549 = vpop.f32.mrb[0].mxu0
  %2550 = vmatprep.mubr.bf16.mxu0 %v1676
  %2551 = vmatmul.mubr.bf16.gmra.mrb[0].mxu0 %v1675
  %v2552 = vpop.f32.mrb[0].mxu0
  %v2553 = vadd.f32 %v1368, %v2552
  %v2554 = vpop.f32.mrb[0].mxu0
  %v2555 = vpop.f32.mrb[0].mxu0
  %v2556 = vadd.f32 %v1373, %v2555
  %v2557 = vpop.f32.mrb[0].mxu0
  %2558 = vmatprep.mubr.bf16.mxu0 %v1680
  %2559 = vmatmul.mubr.bf16.gmra.mrb[0].mxu0 %v1679
  %v2560 = vpop.f32.mrb[0].mxu0
  %v2561 = vadd.f32 %v1378, %v2560
  %v2562 = vpop.f32.mrb[0].mxu0
  %v2563 = vpop.f32.mrb[0].mxu0
  %v2564 = vadd.f32 %v1383, %v2563
  %v2565 = vpop.f32.mrb[0].mxu0
  %2566 = vmatprep.mubr.bf16.mxu0 %v1684
  %2567 = vmatmul.mubr.bf16.gmra.mrb[0].mxu0 %v1683
  %v2568 = vpop.f32.mrb[0].mxu0
  %v2569 = vadd.f32 %v1388, %v2568
  %v2570 = vpop.f32.mrb[0].mxu0
  %v2571 = vpop.f32.mrb[0].mxu0
  %v2572 = vadd.f32 %v1393, %v2571
  %v2573 = vpop.f32.mrb[0].mxu0
  %2574 = vmatprep.mubr.bf16.mxu0 %v1688
  %2575 = vmatmul.mubr.bf16.gmra.mrb[0].mxu0 %v1687
  %v2576 = vpop.f32.mrb[0].mxu0
  %v2577 = vadd.f32 %v1398, %v2576
  %v2578 = vpop.f32.mrb[0].mxu0
  %v2579 = vpop.f32.mrb[0].mxu0
  %v2580 = vadd.f32 %v1403, %v2579
  %v2581 = vpop.f32.mrb[0].mxu0
  %2582 = vmatprep.mubr.bf16.mxu0 %v1692
  %2583 = vmatmul.mubr.bf16.gmra.mrb[0].mxu0 %v1691
  %v2584 = vpop.f32.mrb[0].mxu0
  %v2585 = vadd.f32 %v1408, %v2584
  %v2586 = vpop.f32.mrb[0].mxu0
  %v2587 = vpop.f32.mrb[0].mxu0
  %v2588 = vadd.f32 %v1413, %v2587
  %v2589 = vpop.f32.mrb[0].mxu0
  %2590 = vmatprep.mubr.bf16.mxu0 %v1696
  %2591 = vmatmul.mubr.bf16.gmra.mrb[0].mxu0 %v1695
  %v2592 = vpop.f32.mrb[0].mxu0
  %v2593 = vadd.f32 %v1418, %v2592
  %v2594 = vpop.f32.mrb[0].mxu0
  %v2595 = vpop.f32.mrb[0].mxu0
  %v2596 = vadd.f32 %v1423, %v2595
  %v2597 = vpop.f32.mrb[0].mxu0
  %2598 = vmatprep.mubr.bf16.mxu0 %v1700
  %2599 = vmatmul.mubr.bf16.gmra.mrb[0].mxu0 %v1699
  %v2600 = vpop.f32.mrb[0].mxu0
  %v2601 = vadd.f32 %v1428, %v2600
  %v2602 = vpop.f32.mrb[0].mxu0
  %v2603 = vpop.f32.mrb[0].mxu0
  %v2604 = vadd.f32 %v1433, %v2603
  %v2605 = vpop.f32.mrb[0].mxu0
  %2606 = vmatprep.mubr.bf16.mxu0 %v1704
  %2607 = vmatmul.mubr.bf16.gmra.mrb[0].mxu0 %v1703
  %v2608 = vpop.f32.mrb[0].mxu0
  %v2609 = vadd.f32 %v1438, %v2608
  %v2610 = vpop.f32.mrb[0].mxu0
  %v2611 = vpop.f32.mrb[0].mxu0
  %v2612 = vadd.f32 %v1443, %v2611
  %v2613 = vpop.f32.mrb[0].mxu0
  %2614 = vmatprep.mubr.bf16.mxu0 %v1708
  %2615 = vmatmul.mubr.bf16.gmra.mrb[0].mxu0 %v1707
  %v2616 = vpop.f32.mrb[0].mxu0
  %v2617 = vadd.f32 %v1448, %v2616
  %v2618 = vpop.f32.mrb[0].mxu0
  %v2619 = vpop.f32.mrb[0].mxu0
  %v2620 = vadd.f32 %v1453, %v2619
  %v2621 = vpop.f32.mrb[0].mxu0
  %2622 = vdwg.mxu0
  %2623 = vmatprep.subr.bf16.mxu0 0
  %2624 = vmatpush1.bf16.msra.mxu0 %v2451
  %2625 = vmatprep.subr.bf16.mxu0 0
  %2626 = vmatpush1.bf16.msra.mxu0 %v2452
  %2627 = vmatprep.subr.bf16.mxu0 0
  %2628 = vmatpush1.bf16.msra.mxu0 %v2453
  %2629 = vmatprep.subr.bf16.mxu0 0
  %2630 = vmatpush1.bf16.msra.mxu0 %v2454
  %2631 = vmatprep.subr.bf16.mxu0 0
  %2632 = vmatpush1.bf16.msra.mxu0 %v2455
  %2633 = vmatprep.subr.bf16.mxu0 0
  %2634 = vmatpush1.bf16.msra.mxu0 %v2456
  %2635 = vmatprep.subr.bf16.mxu0 0
  %2636 = vmatpush1.bf16.msra.mxu0 %v2457
  %2637 = vmatprep.subr.bf16.mxu0 0
  %2638 = vmatpush1.bf16.msra.mxu0 %v2458
  %2639 = vmatprep.subr.bf16.mxu0 0
  %2640 = vmatpush1.bf16.msra.mxu0 %v2459
  %2641 = vmatprep.subr.bf16.mxu0 0
  %2642 = vmatpush1.bf16.msra.mxu0 %v2460
  %2643 = vmatprep.subr.bf16.mxu0 0
  %2644 = vmatpush1.bf16.msra.mxu0 %v2461
  %2645 = vmatprep.subr.bf16.mxu0 0
  %2646 = vmatpush1.bf16.msra.mxu0 0
  %2647 = vmatprep.subr.bf16.mxu0 0
  %2648 = vmatpush1.bf16.msra.mxu0 0
  %2649 = vmatprep.subr.bf16.mxu0 0
  %2650 = vmatpush1.bf16.msra.mxu0 0
  %2651 = vmatprep.subr.bf16.mxu0 0
  %2652 = vmatpush1.bf16.msra.mxu0 0
  %2653 = vmatprep.subr.bf16.mxu0 0
  %2654 = vmatpush1.bf16.msra.mxu0 0
  %2655 = vmatprep.mubr.bf16.mxu0 %v1761
  %2656 = vmatmul.mubr.bf16.gmra.mrb[0].mxu0 %v1649
  %v2657 = vpop.f32.mrb[0].mxu0
  %v2658 = vadd.f32 %v2497, %v2657
  %v2659 = vpop.f32.mrb[0].mxu0
  %v2660 = vpop.f32.mrb[0].mxu0
  %v2661 = vadd.f32 %v2500, %v2660
  %v2662 = vpop.f32.mrb[0].mxu0
  %2663 = vmatprep.mubr.bf16.mxu0 %v1764
  %2664 = vmatmul.mubr.bf16.gmra.mrb[0].mxu0 %v1653
  %v2665 = vpop.f32.mrb[0].mxu0
  %v2666 = vadd.f32 %v2505, %v2665
  %v2667 = vpop.f32.mrb[0].mxu0
  %v2668 = vpop.f32.mrb[0].mxu0
  %v2669 = vadd.f32 %v2508, %v2668
  %v2670 = vpop.f32.mrb[0].mxu0
  %2671 = vmatprep.mubr.bf16.mxu0 %v1767
  %2672 = vmatmul.mubr.bf16.gmra.mrb[0].mxu0 %v1657
  %v2673 = vpop.f32.mrb[0].mxu0
  %v2674 = vadd.f32 %v2513, %v2673
  %v2675 = vpop.f32.mrb[0].mxu0
  %v2676 = vpop.f32.mrb[0].mxu0
  %v2677 = vadd.f32 %v2516, %v2676
  %v2678 = vpop.f32.mrb[0].mxu0
  %2679 = vmatprep.mubr.bf16.mxu0 %v1770
  %2680 = vmatmul.mubr.bf16.gmra.mrb[0].mxu0 %v1661
  %v2681 = vpop.f32.mrb[0].mxu0
  %v2682 = vadd.f32 %v2521, %v2681
  %v2683 = vpop.f32.mrb[0].mxu0
  %v2684 = vpop.f32.mrb[0].mxu0
  %v2685 = vadd.f32 %v2524, %v2684
  %v2686 = vpop.f32.mrb[0].mxu0
  %2687 = vmatprep.mubr.bf16.mxu0 %v1773
  %2688 = vmatmul.mubr.bf16.gmra.mrb[0].mxu0 %v1665
  %v2689 = vpop.f32.mrb[0].mxu0
  %v2690 = vadd.f32 %v2529, %v2689
  %v2691 = vpop.f32.mrb[0].mxu0
  %v2692 = vpop.f32.mrb[0].mxu0
  %v2693 = vadd.f32 %v2532, %v2692
  %v2694 = vpop.f32.mrb[0].mxu0
  %2695 = vmatprep.mubr.bf16.mxu0 %v1776
  %2696 = vmatmul.mubr.bf16.gmra.mrb[0].mxu0 %v1669
  %v2697 = vpop.f32.mrb[0].mxu0
  %v2698 = vadd.f32 %v2537, %v2697
  %v2699 = vpop.f32.mrb[0].mxu0
  %v2700 = vpop.f32.mrb[0].mxu0
  %v2701 = vadd.f32 %v2540, %v2700
  %v2702 = vpop.f32.mrb[0].mxu0
  %2703 = vmatprep.mubr.bf16.mxu0 %v1779
  %2704 = vmatmul.mubr.bf16.gmra.mrb[0].mxu0 %v1673
  %v2705 = vpop.f32.mrb[0].mxu0
  %v2706 = vadd.f32 %v2545, %v2705
  %v2707 = vpop.f32.mrb[0].mxu0
  %v2708 = vpop.f32.mrb[0].mxu0
  %v2709 = vadd.f32 %v2548, %v2708
  %v2710 = vpop.f32.mrb[0].mxu0
  %2711 = vmatprep.mubr.bf16.mxu0 %v1782
  %2712 = vmatmul.mubr.bf16.gmra.mrb[0].mxu0 %v1677
  %v2713 = vpop.f32.mrb[0].mxu0
  %v2714 = vadd.f32 %v2553, %v2713
  %v2715 = vpop.f32.mrb[0].mxu0
  %v2716 = vpop.f32.mrb[0].mxu0
  %v2717 = vadd.f32 %v2556, %v2716
  %v2718 = vpop.f32.mrb[0].mxu0
  %2719 = vmatprep.mubr.bf16.mxu0 %v1785
  %2720 = vmatmul.mubr.bf16.gmra.mrb[0].mxu0 %v1681
  %v2721 = vpop.f32.mrb[0].mxu0
  %v2722 = vadd.f32 %v2561, %v2721
  %v2723 = vpop.f32.mrb[0].mxu0
  %v2724 = vpop.f32.mrb[0].mxu0
  %v2725 = vadd.f32 %v2564, %v2724
  %v2726 = vpop.f32.mrb[0].mxu0
  %2727 = vmatprep.mubr.bf16.mxu0 %v1788
  %2728 = vmatmul.mubr.bf16.gmra.mrb[0].mxu0 %v1685
  %v2729 = vpop.f32.mrb[0].mxu0
  %v2730 = vadd.f32 %v2569, %v2729
  %v2731 = vpop.f32.mrb[0].mxu0
  %v2732 = vpop.f32.mrb[0].mxu0
  %v2733 = vadd.f32 %v2572, %v2732
  %v2734 = vpop.f32.mrb[0].mxu0
  %2735 = vmatprep.mubr.bf16.mxu0 %v1791
  %2736 = vmatmul.mubr.bf16.gmra.mrb[0].mxu0 %v1689
  %v2737 = vpop.f32.mrb[0].mxu0
  %v2738 = vadd.f32 %v2577, %v2737
  %v2739 = vpop.f32.mrb[0].mxu0
  %v2740 = vpop.f32.mrb[0].mxu0
  %v2741 = vadd.f32 %v2580, %v2740
  %v2742 = vpop.f32.mrb[0].mxu0
  %2743 = vmatprep.mubr.bf16.mxu0 %v1794
  %2744 = vmatmul.mubr.bf16.gmra.mrb[0].mxu0 %v1693
  %v2745 = vpop.f32.mrb[0].mxu0
  %v2746 = vadd.f32 %v2585, %v2745
  %v2747 = vpop.f32.mrb[0].mxu0
  %v2748 = vpop.f32.mrb[0].mxu0
  %v2749 = vadd.f32 %v2588, %v2748
  %v2750 = vpop.f32.mrb[0].mxu0
  %2751 = vmatprep.mubr.bf16.mxu0 %v1797
  %2752 = vmatmul.mubr.bf16.gmra.mrb[0].mxu0 %v1697
  %v2753 = vpop.f32.mrb[0].mxu0
  %v2754 = vadd.f32 %v2593, %v2753
  %v2755 = vpop.f32.mrb[0].mxu0
  %v2756 = vpop.f32.mrb[0].mxu0
  %v2757 = vadd.f32 %v2596, %v2756
  %v2758 = vpop.f32.mrb[0].mxu0
  %2759 = vmatprep.mubr.bf16.mxu0 %v1800
  %2760 = vmatmul.mubr.bf16.gmra.mrb[0].mxu0 %v1701
  %v2761 = vpop.f32.mrb[0].mxu0
  %v2762 = vadd.f32 %v2601, %v2761
  %v2763 = vpop.f32.mrb[0].mxu0
  %v2764 = vpop.f32.mrb[0].mxu0
  %v2765 = vadd.f32 %v2604, %v2764
  %v2766 = vpop.f32.mrb[0].mxu0
  %2767 = vmatprep.mubr.bf16.mxu0 %v1803
  %2768 = vmatmul.mubr.bf16.gmra.mrb[0].mxu0 %v1705
  %v2769 = vpop.f32.mrb[0].mxu0
  %v2770 = vadd.f32 %v2609, %v2769
  %v2771 = vpop.f32.mrb[0].mxu0
  %v2772 = vpop.f32.mrb[0].mxu0
  %v2773 = vadd.f32 %v2612, %v2772
  %v2774 = vpop.f32.mrb[0].mxu0
  %2775 = vmatprep.mubr.bf16.mxu0 %v1806
  %2776 = vmatmul.mubr.bf16.gmra.mrb[0].mxu0 %v1709
  %v2777 = vpop.f32.mrb[0].mxu0
  %v2778 = vadd.f32 %v2617, %v2777
  %v2779 = vpop.f32.mrb[0].mxu0
  %v2780 = vpop.f32.mrb[0].mxu0
  %v2781 = vadd.f32 %v2620, %v2780
  %v2782 = vpop.f32.mrb[0].mxu0
  %2783 = vdwg.mxu0
  %v2784 = vmax.f32 %v2658, 0.0
  %v2785 = vmax.f32 %v2661, 0.0
  %v2786 = vmax.f32 %v2666, 0.0
  %v2787 = vmax.f32 %v2669, 0.0
  %v2788 = vmax.f32 %v2674, 0.0
  %v2789 = vmax.f32 %v2677, 0.0
  %v2790 = vmax.f32 %v2682, 0.0
  %v2791 = vmax.f32 %v2685, 0.0
  %v2792 = vmax.f32 %v2690, 0.0
  %v2793 = vmax.f32 %v2693, 0.0
  %v2794 = vmax.f32 %v2698, 0.0
  %v2795 = vmax.f32 %v2701, 0.0
  %v2796 = vmax.f32 %v2706, 0.0
  %v2797 = vmax.f32 %v2709, 0.0
  %v2798 = vmax.f32 %v2714, 0.0
  %v2799 = vmax.f32 %v2717, 0.0
  %v2800 = vmax.f32 %v2722, 0.0
  %v2801 = vmax.f32 %v2725, 0.0
  %v2802 = vmax.f32 %v2730, 0.0
  %v2803 = vmax.f32 %v2733, 0.0
  %v2804 = vmax.f32 %v2738, 0.0
  %v2805 = vmax.f32 %v2741, 0.0
  %v2806 = vmax.f32 %v2746, 0.0
  %v2807 = vmax.f32 %v2749, 0.0
  %v2808 = vmax.f32 %v2754, 0.0
  %v2809 = vmax.f32 %v2757, 0.0
  %v2810 = vmax.f32 %v2762, 0.0
  %v2811 = vmax.f32 %v2765, 0.0
  %v2812 = vmax.f32 %v2770, 0.0
  %v2813 = vmax.f32 %v2773, 0.0
  %v2814 = vmax.f32 %v2778, 0.0
  %v2815 = vmax.f32 %v2781, 0.0
  %v2816 = vmax.f32 %v2784, %v2800
  %v2817 = vmax.f32 %v2785, %v2801
  %v2818 = vmax.f32 %v2786, %v2802
  %v2819 = vmax.f32 %v2787, %v2803
  %v2820 = vmax.f32 %v2788, %v2804
  %v2821 = vmax.f32 %v2789, %v2805
  %v2822 = vmax.f32 %v2790, %v2806
  %v2823 = vmax.f32 %v2791, %v2807
  %v2824 = vmax.f32 %v2792, %v2808
  %v2825 = vmax.f32 %v2793, %v2809
  %v2826 = vmax.f32 %v2794, %v2810
  %v2827 = vmax.f32 %v2795, %v2811
  %v2828 = vmax.f32 %v2796, %v2812
  %v2829 = vmax.f32 %v2797, %v2813
  %v2830 = vmax.f32 %v2798, %v2814
  %v2831 = vmax.f32 %v2799, %v2815
  %v2832 = vpack.c.bf16 %v2817, %v2816
  %v2833 = vpack.c.bf16 %v2819, %v2818
  %v2834 = vpack.c.bf16 %v2821, %v2820
  %v2835 = vpack.c.bf16 %v2823, %v2822
  %v2836 = vpack.c.bf16 %v2825, %v2824
  %v2837 = vpack.c.bf16 %v2827, %v2826
  %v2838 = vpack.c.bf16 %v2829, %v2828
  %v2839 = vpack.c.bf16 %v2831, %v2830
  %2840 = vmatprep.subr.bf16.mxu0 0
  %2841 = vmatpush1.bf16.msra.mxu0 %v2832
  %2842 = vmatprep.subr.bf16.mxu0 0
  %2843 = vmatpush1.bf16.msra.mxu0 %v2833
  %2844 = vmatprep.subr.bf16.mxu0 0
  %2845 = vmatpush1.bf16.msra.mxu0 %v2834
  %2846 = vmatprep.subr.bf16.mxu0 0
  %2847 = vmatpush1.bf16.msra.mxu0 %v2835
  %2848 = vmatprep.subr.bf16.mxu0 0
  %2849 = vmatpush1.bf16.msra.mxu0 %v2836
  %2850 = vmatprep.subr.bf16.mxu0 0
  %2851 = vmatpush1.bf16.msra.mxu0 %v2837
  %2852 = vmatprep.subr.bf16.mxu0 0
  %2853 = vmatpush1.bf16.msra.mxu0 %v2838
  %2854 = vmatprep.subr.bf16.mxu0 0
  %2855 = vmatpush1.bf16.msra.mxu0 %v2839
  %2856 = vmatprep.subr.bf16.mxu0 0
  %2857 = vmatpush1.bf16.msra.mxu0 0
  %2858 = vmatprep.subr.bf16.mxu0 0
  %2859 = vmatpush1.bf16.msra.mxu0 0
  %2860 = vmatprep.subr.bf16.mxu0 0
  %2861 = vmatpush1.bf16.msra.mxu0 0
  %2862 = vmatprep.subr.bf16.mxu0 0
  %2863 = vmatpush1.bf16.msra.mxu0 0
  %2864 = vmatprep.subr.bf16.mxu0 0
  %2865 = vmatpush1.bf16.msra.mxu0 0
  %2866 = vmatprep.subr.bf16.mxu0 0
  %2867 = vmatpush1.bf16.msra.mxu0 0
  %2868 = vmatprep.subr.bf16.mxu0 0
  %2869 = vmatpush1.bf16.msra.mxu0 0
  %2870 = vmatprep.subr.bf16.mxu0 0
  %2871 = vmatpush1.bf16.msra.mxu0 0
  %2872 = vmatprep.mubr.bf16.mxu0 0
  %2873 = vmatmul.mubr.bf16.gmra.mrb[0].mxu0 %v2202
  %v2874 = vpop.f32.mrb[0].mxu0
  %v2875 = vadd.f32 0.0, %v2874
  %v2876 = vpop.f32.mrb[0].mxu0
  %v2877 = vpop.f32.mrb[0].mxu0
  %v2878 = vadd.f32 0.0, %v2877
  %v2879 = vpop.f32.mrb[0].mxu0
  %2880 = vmatprep.mubr.bf16.mxu0 0
  %2881 = vmatmul.mubr.bf16.gmra.mrb[0].mxu0 %v2203
  %v2882 = vpop.f32.mrb[0].mxu0
  %v2883 = vadd.f32 0.0, %v2882
  %v2884 = vpop.f32.mrb[0].mxu0
  %v2885 = vpop.f32.mrb[0].mxu0
  %v2886 = vadd.f32 0.0, %v2885
  %v2887 = vpop.f32.mrb[0].mxu0
  %2888 = vmatprep.mubr.bf16.mxu0 0
  %2889 = vmatmul.mubr.bf16.gmra.mrb[0].mxu0 %v2204
  %v2890 = vpop.f32.mrb[0].mxu0
  %v2891 = vadd.f32 0.0, %v2890
  %v2892 = vpop.f32.mrb[0].mxu0
  %v2893 = vpop.f32.mrb[0].mxu0
  %v2894 = vadd.f32 0.0, %v2893
  %v2895 = vpop.f32.mrb[0].mxu0
  %2896 = vmatprep.mubr.bf16.mxu0 0
  %2897 = vmatmul.mubr.bf16.gmra.mrb[0].mxu0 %v2205
  %v2898 = vpop.f32.mrb[0].mxu0
  %v2899 = vadd.f32 0.0, %v2898
  %v2900 = vpop.f32.mrb[0].mxu0
  %v2901 = vpop.f32.mrb[0].mxu0
  %v2902 = vadd.f32 0.0, %v2901
  %v2903 = vpop.f32.mrb[0].mxu0
  %2904 = vdwg.mxu0
  %2905 = vmatprep.subr.bf16.mxu0 0
  %2906 = vmatpush1.bf16.msra.mxu0 %v2832
  %2907 = vmatprep.subr.bf16.mxu0 0
  %2908 = vmatpush1.bf16.msra.mxu0 %v2833
  %2909 = vmatprep.subr.bf16.mxu0 0
  %2910 = vmatpush1.bf16.msra.mxu0 %v2834
  %2911 = vmatprep.subr.bf16.mxu0 0
  %2912 = vmatpush1.bf16.msra.mxu0 %v2835
  %2913 = vmatprep.subr.bf16.mxu0 0
  %2914 = vmatpush1.bf16.msra.mxu0 %v2836
  %2915 = vmatprep.subr.bf16.mxu0 0
  %2916 = vmatpush1.bf16.msra.mxu0 %v2837
  %2917 = vmatprep.subr.bf16.mxu0 0
  %2918 = vmatpush1.bf16.msra.mxu0 %v2838
  %2919 = vmatprep.subr.bf16.mxu0 0
  %2920 = vmatpush1.bf16.msra.mxu0 %v2839
  %2921 = vmatprep.subr.bf16.mxu0 0
  %2922 = vmatpush1.bf16.msra.mxu0 0
  %2923 = vmatprep.subr.bf16.mxu0 0
  %2924 = vmatpush1.bf16.msra.mxu0 0
  %2925 = vmatprep.subr.bf16.mxu0 0
  %2926 = vmatpush1.bf16.msra.mxu0 0
  %2927 = vmatprep.subr.bf16.mxu0 0
  %2928 = vmatpush1.bf16.msra.mxu0 0
  %2929 = vmatprep.subr.bf16.mxu0 0
  %2930 = vmatpush1.bf16.msra.mxu0 0
  %2931 = vmatprep.subr.bf16.mxu0 0
  %2932 = vmatpush1.bf16.msra.mxu0 0
  %2933 = vmatprep.subr.bf16.mxu0 0
  %2934 = vmatpush1.bf16.msra.mxu0 0
  %2935 = vmatprep.subr.bf16.mxu0 0
  %2936 = vmatpush1.bf16.msra.mxu0 0
  %2937 = vmatprep.mubr.bf16.mxu0 0
  %2938 = vmatmul.mubr.bf16.gmra.mrb[0].mxu0 %v2291
  %v2939 = vpop.f32.mrb[0].mxu0
  %v2940 = vadd.f32 0.0, %v2939
  %v2941 = vpop.f32.mrb[0].mxu0
  %v2942 = vpop.f32.mrb[0].mxu0
  %v2943 = vadd.f32 0.0, %v2942
  %v2944 = vpop.f32.mrb[0].mxu0
  %2945 = vmatprep.mubr.bf16.mxu0 0
  %2946 = vmatmul.mubr.bf16.gmra.mrb[0].mxu0 %v2292
  %v2947 = vpop.f32.mrb[0].mxu0
  %v2948 = vadd.f32 0.0, %v2947
  %v2949 = vpop.f32.mrb[0].mxu0
  %v2950 = vpop.f32.mrb[0].mxu0
  %v2951 = vadd.f32 0.0, %v2950
  %v2952 = vpop.f32.mrb[0].mxu0
  %2953 = vmatprep.mubr.bf16.mxu0 0
  %2954 = vmatmul.mubr.bf16.gmra.mrb[0].mxu0 %v2293
  %v2955 = vpop.f32.mrb[0].mxu0
  %v2956 = vadd.f32 0.0, %v2955
  %v2957 = vpop.f32.mrb[0].mxu0
  %v2958 = vpop.f32.mrb[0].mxu0
  %v2959 = vadd.f32 0.0, %v2958
  %v2960 = vpop.f32.mrb[0].mxu0
  %2961 = vmatprep.mubr.bf16.mxu0 0
  %2962 = vmatmul.mubr.bf16.gmra.mrb[0].mxu0 %v2294
  %v2963 = vpop.f32.mrb[0].mxu0
  %v2964 = vadd.f32 0.0, %v2963
  %v2965 = vpop.f32.mrb[0].mxu0
  %v2966 = vpop.f32.mrb[0].mxu0
  %v2967 = vadd.f32 0.0, %v2966
  %v2968 = vpop.f32.mrb[0].mxu0
  %2969 = vdwg.mxu0
  %v2970 = vmax.f32 %v2875, %v2940
  %v2971 = vmax.f32 %v2878, %v2943
  %v2972 = vmax.f32 %v2883, %v2948
  %v2973 = vmax.f32 %v2886, %v2951
  %v2974 = vmax.f32 %v2891, %v2956
  %v2975 = vmax.f32 %v2894, %v2959
  %v2976 = vmax.f32 %v2899, %v2964
  %v2977 = vmax.f32 %v2902, %v2967
  %2978 = vst.msk [vmem:[#allocation3 + $0x40] sm:$0xff] %vm2372, %v2970
  %2979 = vst.msk [vmem:[#allocation3 + $0x48] sm:$0xff] %vm2372, %v2971
  %2980 = vst.msk [vmem:[#allocation3 + $0x50] sm:$0xff] %vm2372, %v2972
  %2981 = vst.msk [vmem:[#allocation3 + $0x58] sm:$0xff] %vm2372, %v2973
  %2982 = vst.msk [vmem:[#allocation3 + $0x60] sm:$0xff] %vm2372, %v2974
  %2983 = vst.msk [vmem:[#allocation3 + $0x68] sm:$0xff] %vm2372, %v2975
  %2984 = vst.msk [vmem:[#allocation3 + $0x70] sm:$0xff] %vm2372, %v2976
  %2985 = vst.msk [vmem:[#allocation3 + $0x78] sm:$0xff] %vm2372, %v2977
  %v2986 = vld [vmem:[#allocation2 + $0x120] sm:$0xff]
  %v2987 = vld [vmem:[#allocation2 + $0x128] sm:$0xff]
  %v2988 = vld [vmem:[#allocation2 + $0x130] sm:$0xff]
  %v2989 = vld [vmem:[#allocation2 + $0x138] sm:$0xff]
  %v2990 = vld [vmem:[#allocation2 + $0x140] sm:$0xff]
  %v2991 = vld [vmem:[#allocation2 + $0x148] sm:$0xff]
  %v2992 = vld [vmem:[#allocation2 + $0x150] sm:$0xff]
  %v2993 = vld [vmem:[#allocation2 + $0x158] sm:$0xff]
  %v2994 = vld [vmem:[#allocation2 + $0x160] sm:$0xff]
  %v2995 = vld [vmem:[#allocation2 + $0x168] sm:$0xff]
  %v2996 = vld [vmem:[#allocation2 + $0x170] sm:$0xff]
  %v2997 = vld [vmem:[#allocation2 + $0x178] sm:$0xff]
  %v2998 = vld [vmem:[#allocation2 + $0x180] sm:$0xff]
  %v2999 = vld [vmem:[#allocation2 + $0x188] sm:$0xff]
  %v3000 = vld [vmem:[#allocation2 + $0x190] sm:$0xff]
  %v3001 = vld [vmem:[#allocation2 + $0x198] sm:$0xff]
  %v3002 = vld [vmem:[#allocation2 + $0x1a0] sm:$0xff]
  %v3003 = vld [vmem:[#allocation2 + $0x1a8] sm:$0xff]
  %v3004 = vld [vmem:[#allocation2 + $0x1b0] sm:$0xff]
  %v3005 = vld [vmem:[#allocation2 + $0x1b8] sm:$0xff]
  %v3006 = vld [vmem:[#allocation2 + $0x1c0] sm:$0xff]
  %v3007 = vld [vmem:[#allocation2 + $0x1c8] sm:$0xff]
  %v3008 = vld [vmem:[#allocation2 + $0x1d0] sm:$0xff]
  %v3009 = vld [vmem:[#allocation2 + $0x1d8] sm:$0xff]
  %v3010 = vld [vmem:[#allocation2 + $0x1e0] sm:$0xff]
  %v3011 = vld [vmem:[#allocation2 + $0x1e8] sm:$0xff]
  %v3012 = vld [vmem:[#allocation2 + $0x1f0] sm:$0xff]
  %v3013 = vld [vmem:[#allocation2 + $0x1f8] sm:$0xff]
  %v3014 = vld [vmem:[#allocation2 + $0x200] sm:$0xff]
  %v3015 = vld [vmem:[#allocation2 + $0x208] sm:$0xff]
  %v3016 = vld [vmem:[#allocation2 + $0x210] sm:$0xff]
  %v3017 = vld [vmem:[#allocation2 + $0x218] sm:$0xff]
  %v3018 = vld [vmem:[#allocation2 + $0x220] sm:$0xff]
  %v3019 = vld [vmem:[#allocation2 + $0x228] sm:$0xff]
  %v3020 = vld [vmem:[#allocation2 + $0x230] sm:$0xff]
  %v3021 = vld [vmem:[#allocation2 + $0x238] sm:$0xff]
  %v3022 = vld [vmem:[#allocation2 + $0x240] sm:$0xff]
  %v3023 = vld [vmem:[#allocation2 + $0x248] sm:$0xff]
  %v3024 = vld [vmem:[#allocation2 + $0x250] sm:$0xff]
  %v3025 = vld [vmem:[#allocation2 + $0x258] sm:$0xff]
  %v3026 = vld [vmem:[#allocation2 + $0x260] sm:$0xff]
  %v3027 = vld [vmem:[#allocation2 + $0x268] sm:$0xff]
  %v3028 = vld [vmem:[#allocation2 + $0x270] sm:$0xff]
  %v3029 = vld [vmem:[#allocation2 + $0x278] sm:$0xff]
  %v3030 = vld [vmem:[#allocation2 + $0x280] sm:$0xff]
  %v3031 = vld [vmem:[#allocation2 + $0x288] sm:$0xff]
  %v3032 = vld [vmem:[#allocation2 + $0x290] sm:$0xff]
  %v3033 = vld [vmem:[#allocation2 + $0x298] sm:$0xff]
  %v3034 = vld [vmem:[#allocation2 + $0x2a0] sm:$0xff]
  %v3035 = vld [vmem:[#allocation2 + $0x2a8] sm:$0xff]
  %v3036 = vld [vmem:[#allocation2 + $0x2b0] sm:$0xff]
  %v3037 = vld [vmem:[#allocation2 + $0x2b8] sm:$0xff]
  %v3038 = vld [vmem:[#allocation2 + $0x2c0] sm:$0xff]
  %v3039 = vld [vmem:[#allocation2 + $0x2c8] sm:$0xff]
  %v3040 = vpack.c.bf16 %v2987, %v2986
  %v3041 = vpack.c.bf16 %v2989, %v2988
  %v3042 = vpack.c.bf16 %v2991, %v2990
  %v3043 = vpack.c.bf16 %v2993, %v2992
  %v3044 = vpack.c.bf16 %v2995, %v2994
  %v3045 = vpack.c.bf16 %v2997, %v2996
  %v3046 = vpack.c.bf16 %v2999, %v2998
  %v3047 = vpack.c.bf16 %v3001, %v3000
  %v3048 = vpack.c.bf16 %v3003, %v3002
  %v3049 = vpack.c.bf16 %v3005, %v3004
  %v3050 = vpack.c.bf16 %v3007, %v3006
  %v3051 = vpack.c.bf16 %v3009, %v3008
  %v3052 = vpack.c.bf16 %v3011, %v3010
  %v3053 = vpack.c.bf16 %v3013, %v3012
  %v3054 = vpack.c.bf16 %v3015, %v3014
  %v3055 = vpack.c.bf16 %v3017, %v3016
  %v3056 = vpack.c.bf16 %v3019, %v3018
  %v3057 = vpack.c.bf16 %v3021, %v3020
  %v3058 = vpack.c.bf16 %v3023, %v3022
  %v3059 = vpack.c.bf16 %v3025, %v3024
  %v3060 = vpack.c.bf16 %v3027, %v3026
  %v3061 = vpack.c.bf16 %v3029, %v3028
  %v3062 = vpack.c.bf16 %v3031, %v3030
  %v3063 = vpack.c.bf16 %v3033, %v3032
  %v3064 = vpack.c.bf16 %v3035, %v3034
  %v3065 = vpack.c.bf16 %v3037, %v3036
  %v3066 = vpack.c.bf16 %v3039, %v3038
  %3067 = vmatprep.subr.bf16.mxu0 0
  %3068 = vmatpush1.bf16.msra.mxu0 %v3040
  %3069 = vmatprep.subr.bf16.mxu0 0
  %3070 = vmatpush1.bf16.msra.mxu0 %v3041
  %3071 = vmatprep.subr.bf16.mxu0 0
  %3072 = vmatpush1.bf16.msra.mxu0 %v3042
  %3073 = vmatprep.subr.bf16.mxu0 0
  %3074 = vmatpush1.bf16.msra.mxu0 %v3043
  %3075 = vmatprep.subr.bf16.mxu0 0
  %3076 = vmatpush1.bf16.msra.mxu0 %v3044
  %3077 = vmatprep.subr.bf16.mxu0 0
  %3078 = vmatpush1.bf16.msra.mxu0 %v3045
  %3079 = vmatprep.subr.bf16.mxu0 0
  %3080 = vmatpush1.bf16.msra.mxu0 %v3046
  %3081 = vmatprep.subr.bf16.mxu0 0
  %3082 = vmatpush1.bf16.msra.mxu0 %v3047
  %3083 = vmatprep.subr.bf16.mxu0 0
  %3084 = vmatpush1.bf16.msra.mxu0 %v3048
  %3085 = vmatprep.subr.bf16.mxu0 0
  %3086 = vmatpush1.bf16.msra.mxu0 %v3049
  %3087 = vmatprep.subr.bf16.mxu0 0
  %3088 = vmatpush1.bf16.msra.mxu0 %v3050
  %3089 = vmatprep.subr.bf16.mxu0 0
  %3090 = vmatpush1.bf16.msra.mxu0 %v3051
  %3091 = vmatprep.subr.bf16.mxu0 0
  %3092 = vmatpush1.bf16.msra.mxu0 %v3052
  %3093 = vmatprep.subr.bf16.mxu0 0
  %3094 = vmatpush1.bf16.msra.mxu0 %v3053
  %3095 = vmatprep.subr.bf16.mxu0 0
  %3096 = vmatpush1.bf16.msra.mxu0 %v3054
  %3097 = vmatprep.subr.bf16.mxu0 0
  %3098 = vmatpush1.bf16.msra.mxu0 %v3055
  %3099 = vmatprep.mubr.bf16.mxu0 %v1648
  %3100 = vmatmul.mubr.bf16.gmra.mrb[0].mxu0 %v1647
  %v3101 = vpop.f32.mrb[0].mxu0
  %v3102 = vadd.f32 %v1298, %v3101
  %v3103 = vpop.f32.mrb[0].mxu0
  %v3104 = vpop.f32.mrb[0].mxu0
  %v3105 = vadd.f32 %v1303, %v3104
  %v3106 = vpop.f32.mrb[0].mxu0
  %3107 = vmatprep.mubr.bf16.mxu0 %v1652
  %3108 = vmatmul.mubr.bf16.gmra.mrb[0].mxu0 %v1651
  %v3109 = vpop.f32.mrb[0].mxu0
  %v3110 = vadd.f32 %v1308, %v3109
  %v3111 = vpop.f32.mrb[0].mxu0
  %v3112 = vpop.f32.mrb[0].mxu0
  %v3113 = vadd.f32 %v1313, %v3112
  %v3114 = vpop.f32.mrb[0].mxu0
  %3115 = vmatprep.mubr.bf16.mxu0 %v1656
  %3116 = vmatmul.mubr.bf16.gmra.mrb[0].mxu0 %v1655
  %v3117 = vpop.f32.mrb[0].mxu0
  %v3118 = vadd.f32 %v1318, %v3117
  %v3119 = vpop.f32.mrb[0].mxu0
  %v3120 = vpop.f32.mrb[0].mxu0
  %v3121 = vadd.f32 %v1323, %v3120
  %v3122 = vpop.f32.mrb[0].mxu0
  %3123 = vmatprep.mubr.bf16.mxu0 %v1660
  %3124 = vmatmul.mubr.bf16.gmra.mrb[0].mxu0 %v1659
  %v3125 = vpop.f32.mrb[0].mxu0
  %v3126 = vadd.f32 %v1328, %v3125
  %v3127 = vpop.f32.mrb[0].mxu0
  %v3128 = vpop.f32.mrb[0].mxu0
  %v3129 = vadd.f32 %v1333, %v3128
  %v3130 = vpop.f32.mrb[0].mxu0
  %3131 = vmatprep.mubr.bf16.mxu0 %v1664
  %3132 = vmatmul.mubr.bf16.gmra.mrb[0].mxu0 %v1663
  %v3133 = vpop.f32.mrb[0].mxu0
  %v3134 = vadd.f32 %v1338, %v3133
  %v3135 = vpop.f32.mrb[0].mxu0
  %v3136 = vpop.f32.mrb[0].mxu0
  %v3137 = vadd.f32 %v1343, %v3136
  %v3138 = vpop.f32.mrb[0].mxu0
  %3139 = vmatprep.mubr.bf16.mxu0 %v1668
  %3140 = vmatmul.mubr.bf16.gmra.mrb[0].mxu0 %v1667
  %v3141 = vpop.f32.mrb[0].mxu0
  %v3142 = vadd.f32 %v1348, %v3141
  %v3143 = vpop.f32.mrb[0].mxu0
  %v3144 = vpop.f32.mrb[0].mxu0
  %v3145 = vadd.f32 %v1353, %v3144
  %v3146 = vpop.f32.mrb[0].mxu0
  %3147 = vmatprep.mubr.bf16.mxu0 %v1672
  %3148 = vmatmul.mubr.bf16.gmra.mrb[0].mxu0 %v1671
  %v3149 = vpop.f32.mrb[0].mxu0
  %v3150 = vadd.f32 %v1358, %v3149
  %v3151 = vpop.f32.mrb[0].mxu0
  %v3152 = vpop.f32.mrb[0].mxu0
  %v3153 = vadd.f32 %v1363, %v3152
  %v3154 = vpop.f32.mrb[0].mxu0
  %3155 = vmatprep.mubr.bf16.mxu0 %v1676
  %3156 = vmatmul.mubr.bf16.gmra.mrb[0].mxu0 %v1675
  %v3157 = vpop.f32.mrb[0].mxu0
  %v3158 = vadd.f32 %v1368, %v3157
  %v3159 = vpop.f32.mrb[0].mxu0
  %v3160 = vpop.f32.mrb[0].mxu0
  %v3161 = vadd.f32 %v1373, %v3160
  %v3162 = vpop.f32.mrb[0].mxu0
  %3163 = vmatprep.mubr.bf16.mxu0 %v1680
  %3164 = vmatmul.mubr.bf16.gmra.mrb[0].mxu0 %v1679
  %v3165 = vpop.f32.mrb[0].mxu0
  %v3166 = vadd.f32 %v1378, %v3165
  %v3167 = vpop.f32.mrb[0].mxu0
  %v3168 = vpop.f32.mrb[0].mxu0
  %v3169 = vadd.f32 %v1383, %v3168
  %v3170 = vpop.f32.mrb[0].mxu0
  %3171 = vmatprep.mubr.bf16.mxu0 %v1684
  %3172 = vmatmul.mubr.bf16.gmra.mrb[0].mxu0 %v1683
  %v3173 = vpop.f32.mrb[0].mxu0
  %v3174 = vadd.f32 %v1388, %v3173
  %v3175 = vpop.f32.mrb[0].mxu0
  %v3176 = vpop.f32.mrb[0].mxu0
  %v3177 = vadd.f32 %v1393, %v3176
  %v3178 = vpop.f32.mrb[0].mxu0
  %3179 = vmatprep.mubr.bf16.mxu0 %v1688
  %3180 = vmatmul.mubr.bf16.gmra.mrb[0].mxu0 %v1687
  %v3181 = vpop.f32.mrb[0].mxu0
  %v3182 = vadd.f32 %v1398, %v3181
  %v3183 = vpop.f32.mrb[0].mxu0
  %v3184 = vpop.f32.mrb[0].mxu0
  %v3185 = vadd.f32 %v1403, %v3184
  %v3186 = vpop.f32.mrb[0].mxu0
  %3187 = vmatprep.mubr.bf16.mxu0 %v1692
  %3188 = vmatmul.mubr.bf16.gmra.mrb[0].mxu0 %v1691
  %v3189 = vpop.f32.mrb[0].mxu0
  %v3190 = vadd.f32 %v1408, %v3189
  %v3191 = vpop.f32.mrb[0].mxu0
  %v3192 = vpop.f32.mrb[0].mxu0
  %v3193 = vadd.f32 %v1413, %v3192
  %v3194 = vpop.f32.mrb[0].mxu0
  %3195 = vmatprep.mubr.bf16.mxu0 %v1696
  %3196 = vmatmul.mubr.bf16.gmra.mrb[0].mxu0 %v1695
  %v3197 = vpop.f32.mrb[0].mxu0
  %v3198 = vadd.f32 %v1418, %v3197
  %v3199 = vpop.f32.mrb[0].mxu0
  %v3200 = vpop.f32.mrb[0].mxu0
  %v3201 = vadd.f32 %v1423, %v3200
  %v3202 = vpop.f32.mrb[0].mxu0
  %3203 = vmatprep.mubr.bf16.mxu0 %v1700
  %3204 = vmatmul.mubr.bf16.gmra.mrb[0].mxu0 %v1699
  %v3205 = vpop.f32.mrb[0].mxu0
  %v3206 = vadd.f32 %v1428, %v3205
  %v3207 = vpop.f32.mrb[0].mxu0
  %v3208 = vpop.f32.mrb[0].mxu0
  %v3209 = vadd.f32 %v1433, %v3208
  %v3210 = vpop.f32.mrb[0].mxu0
  %3211 = vmatprep.mubr.bf16.mxu0 %v1704
  %3212 = vmatmul.mubr.bf16.gmra.mrb[0].mxu0 %v1703
  %v3213 = vpop.f32.mrb[0].mxu0
  %v3214 = vadd.f32 %v1438, %v3213
  %v3215 = vpop.f32.mrb[0].mxu0
  %v3216 = vpop.f32.mrb[0].mxu0
  %v3217 = vadd.f32 %v1443, %v3216
  %v3218 = vpop.f32.mrb[0].mxu0
  %3219 = vmatprep.mubr.bf16.mxu0 %v1708
  %3220 = vmatmul.mubr.bf16.gmra.mrb[0].mxu0 %v1707
  %v3221 = vpop.f32.mrb[0].mxu0
  %v3222 = vadd.f32 %v1448, %v3221
  %v3223 = vpop.f32.mrb[0].mxu0
  %v3224 = vpop.f32.mrb[0].mxu0
  %v3225 = vadd.f32 %v1453, %v3224
  %v3226 = vpop.f32.mrb[0].mxu0
  %3227 = vdwg.mxu0
  %3228 = vmatprep.subr.bf16.mxu0 0
  %3229 = vmatpush1.bf16.msra.mxu0 %v3056
  %3230 = vmatprep.subr.bf16.mxu0 0
  %3231 = vmatpush1.bf16.msra.mxu0 %v3057
  %3232 = vmatprep.subr.bf16.mxu0 0
  %3233 = vmatpush1.bf16.msra.mxu0 %v3058
  %3234 = vmatprep.subr.bf16.mxu0 0
  %3235 = vmatpush1.bf16.msra.mxu0 %v3059
  %3236 = vmatprep.subr.bf16.mxu0 0
  %3237 = vmatpush1.bf16.msra.mxu0 %v3060
  %3238 = vmatprep.subr.bf16.mxu0 0
  %3239 = vmatpush1.bf16.msra.mxu0 %v3061
  %3240 = vmatprep.subr.bf16.mxu0 0
  %3241 = vmatpush1.bf16.msra.mxu0 %v3062
  %3242 = vmatprep.subr.bf16.mxu0 0
  %3243 = vmatpush1.bf16.msra.mxu0 %v3063
  %3244 = vmatprep.subr.bf16.mxu0 0
  %3245 = vmatpush1.bf16.msra.mxu0 %v3064
  %3246 = vmatprep.subr.bf16.mxu0 0
  %3247 = vmatpush1.bf16.msra.mxu0 %v3065
  %3248 = vmatprep.subr.bf16.mxu0 0
  %3249 = vmatpush1.bf16.msra.mxu0 %v3066
  %3250 = vmatprep.subr.bf16.mxu0 0
  %3251 = vmatpush1.bf16.msra.mxu0 0
  %3252 = vmatprep.subr.bf16.mxu0 0
  %3253 = vmatpush1.bf16.msra.mxu0 0
  %3254 = vmatprep.subr.bf16.mxu0 0
  %3255 = vmatpush1.bf16.msra.mxu0 0
  %3256 = vmatprep.subr.bf16.mxu0 0
  %3257 = vmatpush1.bf16.msra.mxu0 0
  %3258 = vmatprep.subr.bf16.mxu0 0
  %3259 = vmatpush1.bf16.msra.mxu0 0
  %3260 = vmatprep.mubr.bf16.mxu0 %v1761
  %3261 = vmatmul.mubr.bf16.gmra.mrb[0].mxu0 %v1649
  %v3262 = vpop.f32.mrb[0].mxu0
  %v3263 = vadd.f32 %v3102, %v3262
  %v3264 = vpop.f32.mrb[0].mxu0
  %v3265 = vpop.f32.mrb[0].mxu0
  %v3266 = vadd.f32 %v3105, %v3265
  %v3267 = vpop.f32.mrb[0].mxu0
  %3268 = vmatprep.mubr.bf16.mxu0 %v1764
  %3269 = vmatmul.mubr.bf16.gmra.mrb[0].mxu0 %v1653
  %v3270 = vpop.f32.mrb[0].mxu0
  %v3271 = vadd.f32 %v3110, %v3270
  %v3272 = vpop.f32.mrb[0].mxu0
  %v3273 = vpop.f32.mrb[0].mxu0
  %v3274 = vadd.f32 %v3113, %v3273
  %v3275 = vpop.f32.mrb[0].mxu0
  %3276 = vmatprep.mubr.bf16.mxu0 %v1767
  %3277 = vmatmul.mubr.bf16.gmra.mrb[0].mxu0 %v1657
  %v3278 = vpop.f32.mrb[0].mxu0
  %v3279 = vadd.f32 %v3118, %v3278
  %v3280 = vpop.f32.mrb[0].mxu0
  %v3281 = vpop.f32.mrb[0].mxu0
  %v3282 = vadd.f32 %v3121, %v3281
  %v3283 = vpop.f32.mrb[0].mxu0
  %3284 = vmatprep.mubr.bf16.mxu0 %v1770
  %3285 = vmatmul.mubr.bf16.gmra.mrb[0].mxu0 %v1661
  %v3286 = vpop.f32.mrb[0].mxu0
  %v3287 = vadd.f32 %v3126, %v3286
  %v3288 = vpop.f32.mrb[0].mxu0
  %v3289 = vpop.f32.mrb[0].mxu0
  %v3290 = vadd.f32 %v3129, %v3289
  %v3291 = vpop.f32.mrb[0].mxu0
  %3292 = vmatprep.mubr.bf16.mxu0 %v1773
  %3293 = vmatmul.mubr.bf16.gmra.mrb[0].mxu0 %v1665
  %v3294 = vpop.f32.mrb[0].mxu0
  %v3295 = vadd.f32 %v3134, %v3294
  %v3296 = vpop.f32.mrb[0].mxu0
  %v3297 = vpop.f32.mrb[0].mxu0
  %v3298 = vadd.f32 %v3137, %v3297
  %v3299 = vpop.f32.mrb[0].mxu0
  %3300 = vmatprep.mubr.bf16.mxu0 %v1776
  %3301 = vmatmul.mubr.bf16.gmra.mrb[0].mxu0 %v1669
  %v3302 = vpop.f32.mrb[0].mxu0
  %v3303 = vadd.f32 %v3142, %v3302
  %v3304 = vpop.f32.mrb[0].mxu0
  %v3305 = vpop.f32.mrb[0].mxu0
  %v3306 = vadd.f32 %v3145, %v3305
  %v3307 = vpop.f32.mrb[0].mxu0
  %3308 = vmatprep.mubr.bf16.mxu0 %v1779
  %3309 = vmatmul.mubr.bf16.gmra.mrb[0].mxu0 %v1673
  %v3310 = vpop.f32.mrb[0].mxu0
  %v3311 = vadd.f32 %v3150, %v3310
  %v3312 = vpop.f32.mrb[0].mxu0
  %v3313 = vpop.f32.mrb[0].mxu0
  %v3314 = vadd.f32 %v3153, %v3313
  %v3315 = vpop.f32.mrb[0].mxu0
  %3316 = vmatprep.mubr.bf16.mxu0 %v1782
  %3317 = vmatmul.mubr.bf16.gmra.mrb[0].mxu0 %v1677
  %v3318 = vpop.f32.mrb[0].mxu0
  %v3319 = vadd.f32 %v3158, %v3318
  %v3320 = vpop.f32.mrb[0].mxu0
  %v3321 = vpop.f32.mrb[0].mxu0
  %v3322 = vadd.f32 %v3161, %v3321
  %v3323 = vpop.f32.mrb[0].mxu0
  %3324 = vmatprep.mubr.bf16.mxu0 %v1785
  %3325 = vmatmul.mubr.bf16.gmra.mrb[0].mxu0 %v1681
  %v3326 = vpop.f32.mrb[0].mxu0
  %v3327 = vadd.f32 %v3166, %v3326
  %v3328 = vpop.f32.mrb[0].mxu0
  %v3329 = vpop.f32.mrb[0].mxu0
  %v3330 = vadd.f32 %v3169, %v3329
  %v3331 = vpop.f32.mrb[0].mxu0
  %3332 = vmatprep.mubr.bf16.mxu0 %v1788
  %3333 = vmatmul.mubr.bf16.gmra.mrb[0].mxu0 %v1685
  %v3334 = vpop.f32.mrb[0].mxu0
  %v3335 = vadd.f32 %v3174, %v3334
  %v3336 = vpop.f32.mrb[0].mxu0
  %v3337 = vpop.f32.mrb[0].mxu0
  %v3338 = vadd.f32 %v3177, %v3337
  %v3339 = vpop.f32.mrb[0].mxu0
  %3340 = vmatprep.mubr.bf16.mxu0 %v1791
  %3341 = vmatmul.mubr.bf16.gmra.mrb[0].mxu0 %v1689
  %v3342 = vpop.f32.mrb[0].mxu0
  %v3343 = vadd.f32 %v3182, %v3342
  %v3344 = vpop.f32.mrb[0].mxu0
  %v3345 = vpop.f32.mrb[0].mxu0
  %v3346 = vadd.f32 %v3185, %v3345
  %v3347 = vpop.f32.mrb[0].mxu0
  %3348 = vmatprep.mubr.bf16.mxu0 %v1794
  %3349 = vmatmul.mubr.bf16.gmra.mrb[0].mxu0 %v1693
  %v3350 = vpop.f32.mrb[0].mxu0
  %v3351 = vadd.f32 %v3190, %v3350
  %v3352 = vpop.f32.mrb[0].mxu0
  %v3353 = vpop.f32.mrb[0].mxu0
  %v3354 = vadd.f32 %v3193, %v3353
  %v3355 = vpop.f32.mrb[0].mxu0
  %3356 = vmatprep.mubr.bf16.mxu0 %v1797
  %3357 = vmatmul.mubr.bf16.gmra.mrb[0].mxu0 %v1697
  %v3358 = vpop.f32.mrb[0].mxu0
  %v3359 = vadd.f32 %v3198, %v3358
  %v3360 = vpop.f32.mrb[0].mxu0
  %v3361 = vpop.f32.mrb[0].mxu0
  %v3362 = vadd.f32 %v3201, %v3361
  %v3363 = vpop.f32.mrb[0].mxu0
  %3364 = vmatprep.mubr.bf16.mxu0 %v1800
  %3365 = vmatmul.mubr.bf16.gmra.mrb[0].mxu0 %v1701
  %v3366 = vpop.f32.mrb[0].mxu0
  %v3367 = vadd.f32 %v3206, %v3366
  %v3368 = vpop.f32.mrb[0].mxu0
  %v3369 = vpop.f32.mrb[0].mxu0
  %v3370 = vadd.f32 %v3209, %v3369
  %v3371 = vpop.f32.mrb[0].mxu0
  %3372 = vmatprep.mubr.bf16.mxu0 %v1803
  %3373 = vmatmul.mubr.bf16.gmra.mrb[0].mxu0 %v1705
  %v3374 = vpop.f32.mrb[0].mxu0
  %v3375 = vadd.f32 %v3214, %v3374
  %v3376 = vpop.f32.mrb[0].mxu0
  %v3377 = vpop.f32.mrb[0].mxu0
  %v3378 = vadd.f32 %v3217, %v3377
  %v3379 = vpop.f32.mrb[0].mxu0
  %3380 = vmatprep.mubr.bf16.mxu0 %v1806
  %3381 = vmatmul.mubr.bf16.gmra.mrb[0].mxu0 %v1709
  %v3382 = vpop.f32.mrb[0].mxu0
  %v3383 = vadd.f32 %v3222, %v3382
  %v3384 = vpop.f32.mrb[0].mxu0
  %v3385 = vpop.f32.mrb[0].mxu0
  %v3386 = vadd.f32 %v3225, %v3385
  %v3387 = vpop.f32.mrb[0].mxu0
  %3388 = vdwg.mxu0
  %v3389 = vmax.f32 %v3263, 0.0
  %v3390 = vmax.f32 %v3266, 0.0
  %v3391 = vmax.f32 %v3271, 0.0
  %v3392 = vmax.f32 %v3274, 0.0
  %v3393 = vmax.f32 %v3279, 0.0
  %v3394 = vmax.f32 %v3282, 0.0
  %v3395 = vmax.f32 %v3287, 0.0
  %v3396 = vmax.f32 %v3290, 0.0
  %v3397 = vmax.f32 %v3295, 0.0
  %v3398 = vmax.f32 %v3298, 0.0
  %v3399 = vmax.f32 %v3303, 0.0
  %v3400 = vmax.f32 %v3306, 0.0
  %v3401 = vmax.f32 %v3311, 0.0
  %v3402 = vmax.f32 %v3314, 0.0
  %v3403 = vmax.f32 %v3319, 0.0
  %v3404 = vmax.f32 %v3322, 0.0
  %v3405 = vmax.f32 %v3327, 0.0
  %v3406 = vmax.f32 %v3330, 0.0
  %v3407 = vmax.f32 %v3335, 0.0
  %v3408 = vmax.f32 %v3338, 0.0
  %v3409 = vmax.f32 %v3343, 0.0
  %v3410 = vmax.f32 %v3346, 0.0
  %v3411 = vmax.f32 %v3351, 0.0
  %v3412 = vmax.f32 %v3354, 0.0
  %v3413 = vmax.f32 %v3359, 0.0
  %v3414 = vmax.f32 %v3362, 0.0
  %v3415 = vmax.f32 %v3367, 0.0
  %v3416 = vmax.f32 %v3370, 0.0
  %v3417 = vmax.f32 %v3375, 0.0
  %v3418 = vmax.f32 %v3378, 0.0
  %v3419 = vmax.f32 %v3383, 0.0
  %v3420 = vmax.f32 %v3386, 0.0
  %v3421 = vmax.f32 %v3389, %v3405
  %v3422 = vmax.f32 %v3390, %v3406
  %v3423 = vmax.f32 %v3391, %v3407
  %v3424 = vmax.f32 %v3392, %v3408
  %v3425 = vmax.f32 %v3393, %v3409
  %v3426 = vmax.f32 %v3394, %v3410
  %v3427 = vmax.f32 %v3395, %v3411
  %v3428 = vmax.f32 %v3396, %v3412
  %v3429 = vmax.f32 %v3397, %v3413
  %v3430 = vmax.f32 %v3398, %v3414
  %v3431 = vmax.f32 %v3399, %v3415
  %v3432 = vmax.f32 %v3400, %v3416
  %v3433 = vmax.f32 %v3401, %v3417
  %v3434 = vmax.f32 %v3402, %v3418
  %v3435 = vmax.f32 %v3403, %v3419
  %v3436 = vmax.f32 %v3404, %v3420
  %v3437 = vpack.c.bf16 %v3422, %v3421
  %v3438 = vpack.c.bf16 %v3424, %v3423
  %v3439 = vpack.c.bf16 %v3426, %v3425
  %v3440 = vpack.c.bf16 %v3428, %v3427
  %v3441 = vpack.c.bf16 %v3430, %v3429
  %v3442 = vpack.c.bf16 %v3432, %v3431
  %v3443 = vpack.c.bf16 %v3434, %v3433
  %v3444 = vpack.c.bf16 %v3436, %v3435
  %3445 = vmatprep.subr.bf16.mxu0 0
  %3446 = vmatpush1.bf16.msra.mxu0 %v3437
  %3447 = vmatprep.subr.bf16.mxu0 0
  %3448 = vmatpush1.bf16.msra.mxu0 %v3438
  %3449 = vmatprep.subr.bf16.mxu0 0
  %3450 = vmatpush1.bf16.msra.mxu0 %v3439
  %3451 = vmatprep.subr.bf16.mxu0 0
  %3452 = vmatpush1.bf16.msra.mxu0 %v3440
  %3453 = vmatprep.subr.bf16.mxu0 0
  %3454 = vmatpush1.bf16.msra.mxu0 %v3441
  %3455 = vmatprep.subr.bf16.mxu0 0
  %3456 = vmatpush1.bf16.msra.mxu0 %v3442
  %3457 = vmatprep.subr.bf16.mxu0 0
  %3458 = vmatpush1.bf16.msra.mxu0 %v3443
  %3459 = vmatprep.subr.bf16.mxu0 0
  %3460 = vmatpush1.bf16.msra.mxu0 %v3444
  %3461 = vmatprep.subr.bf16.mxu0 0
  %3462 = vmatpush1.bf16.msra.mxu0 0
  %3463 = vmatprep.subr.bf16.mxu0 0
  %3464 = vmatpush1.bf16.msra.mxu0 0
  %3465 = vmatprep.subr.bf16.mxu0 0
  %3466 = vmatpush1.bf16.msra.mxu0 0
  %3467 = vmatprep.subr.bf16.mxu0 0
  %3468 = vmatpush1.bf16.msra.mxu0 0
  %3469 = vmatprep.subr.bf16.mxu0 0
  %3470 = vmatpush1.bf16.msra.mxu0 0
  %3471 = vmatprep.subr.bf16.mxu0 0
  %3472 = vmatpush1.bf16.msra.mxu0 0
  %3473 = vmatprep.subr.bf16.mxu0 0
  %3474 = vmatpush1.bf16.msra.mxu0 0
  %3475 = vmatprep.subr.bf16.mxu0 0
  %3476 = vmatpush1.bf16.msra.mxu0 0
  %3477 = vmatprep.mubr.bf16.mxu0 0
  %3478 = vmatmul.mubr.bf16.gmra.mrb[0].mxu0 %v2202
  %v3479 = vpop.f32.mrb[0].mxu0
  %v3480 = vadd.f32 0.0, %v3479
  %v3481 = vpop.f32.mrb[0].mxu0
  %v3482 = vpop.f32.mrb[0].mxu0
  %v3483 = vadd.f32 0.0, %v3482
  %v3484 = vpop.f32.mrb[0].mxu0
  %3485 = vmatprep.mubr.bf16.mxu0 0
  %3486 = vmatmul.mubr.bf16.gmra.mrb[0].mxu0 %v2203
  %v3487 = vpop.f32.mrb[0].mxu0
  %v3488 = vadd.f32 0.0, %v3487
  %v3489 = vpop.f32.mrb[0].mxu0
  %v3490 = vpop.f32.mrb[0].mxu0
  %v3491 = vadd.f32 0.0, %v3490
  %v3492 = vpop.f32.mrb[0].mxu0
  %3493 = vmatprep.mubr.bf16.mxu0 0
  %3494 = vmatmul.mubr.bf16.gmra.mrb[0].mxu0 %v2204
  %v3495 = vpop.f32.mrb[0].mxu0
  %v3496 = vadd.f32 0.0, %v3495
  %v3497 = vpop.f32.mrb[0].mxu0
  %v3498 = vpop.f32.mrb[0].mxu0
  %v3499 = vadd.f32 0.0, %v3498
  %v3500 = vpop.f32.mrb[0].mxu0
  %3501 = vmatprep.mubr.bf16.mxu0 0
  %3502 = vmatmul.mubr.bf16.gmra.mrb[0].mxu0 %v2205
  %v3503 = vpop.f32.mrb[0].mxu0
  %v3504 = vadd.f32 0.0, %v3503
  %v3505 = vpop.f32.mrb[0].mxu0
  %v3506 = vpop.f32.mrb[0].mxu0
  %v3507 = vadd.f32 0.0, %v3506
  %v3508 = vpop.f32.mrb[0].mxu0
  %3509 = vdwg.mxu0
  %3510 = vmatprep.subr.bf16.mxu0 0
  %3511 = vmatpush1.bf16.msra.mxu0 %v3437
  %3512 = vmatprep.subr.bf16.mxu0 0
  %3513 = vmatpush1.bf16.msra.mxu0 %v3438
  %3514 = vmatprep.subr.bf16.mxu0 0
  %3515 = vmatpush1.bf16.msra.mxu0 %v3439
  %3516 = vmatprep.subr.bf16.mxu0 0
  %3517 = vmatpush1.bf16.msra.mxu0 %v3440
  %3518 = vmatprep.subr.bf16.mxu0 0
  %3519 = vmatpush1.bf16.msra.mxu0 %v3441
  %3520 = vmatprep.subr.bf16.mxu0 0
  %3521 = vmatpush1.bf16.msra.mxu0 %v3442
  %3522 = vmatprep.subr.bf16.mxu0 0
  %3523 = vmatpush1.bf16.msra.mxu0 %v3443
  %3524 = vmatprep.subr.bf16.mxu0 0
  %3525 = vmatpush1.bf16.msra.mxu0 %v3444
  %3526 = vmatprep.subr.bf16.mxu0 0
  %3527 = vmatpush1.bf16.msra.mxu0 0
  %3528 = vmatprep.subr.bf16.mxu0 0
  %3529 = vmatpush1.bf16.msra.mxu0 0
  %3530 = vmatprep.subr.bf16.mxu0 0
  %3531 = vmatpush1.bf16.msra.mxu0 0
  %3532 = vmatprep.subr.bf16.mxu0 0
  %3533 = vmatpush1.bf16.msra.mxu0 0
  %3534 = vmatprep.subr.bf16.mxu0 0
  %3535 = vmatpush1.bf16.msra.mxu0 0
  %3536 = vmatprep.subr.bf16.mxu0 0
  %3537 = vmatpush1.bf16.msra.mxu0 0
  %3538 = vmatprep.subr.bf16.mxu0 0
  %3539 = vmatpush1.bf16.msra.mxu0 0
  %3540 = vmatprep.subr.bf16.mxu0 0
  %3541 = vmatpush1.bf16.msra.mxu0 0
  %3542 = vmatprep.mubr.bf16.mxu0 0
  %3543 = vmatmul.mubr.bf16.gmra.mrb[0].mxu0 %v2291
  %v3544 = vpop.f32.mrb[0].mxu0
  %v3545 = vadd.f32 0.0, %v3544
  %v3546 = vpop.f32.mrb[0].mxu0
  %v3547 = vpop.f32.mrb[0].mxu0
  %v3548 = vadd.f32 0.0, %v3547
  %v3549 = vpop.f32.mrb[0].mxu0
  %3550 = vmatprep.mubr.bf16.mxu0 0
  %3551 = vmatmul.mubr.bf16.gmra.mrb[0].mxu0 %v2292
  %v3552 = vpop.f32.mrb[0].mxu0
  %v3553 = vadd.f32 0.0, %v3552
  %v3554 = vpop.f32.mrb[0].mxu0
  %v3555 = vpop.f32.mrb[0].mxu0
  %v3556 = vadd.f32 0.0, %v3555
  %v3557 = vpop.f32.mrb[0].mxu0
  %3558 = vmatprep.mubr.bf16.mxu0 0
  %3559 = vmatmul.mubr.bf16.gmra.mrb[0].mxu0 %v2293
  %v3560 = vpop.f32.mrb[0].mxu0
  %v3561 = vadd.f32 0.0, %v3560
  %v3562 = vpop.f32.mrb[0].mxu0
  %v3563 = vpop.f32.mrb[0].mxu0
  %v3564 = vadd.f32 0.0, %v3563
  %v3565 = vpop.f32.mrb[0].mxu0
  %3566 = vmatprep.mubr.bf16.mxu0 0
  %3567 = vmatmul.mubr.bf16.gmra.mrb[0].mxu0 %v2294
  %v3568 = vpop.f32.mrb[0].mxu0
  %v3569 = vadd.f32 0.0, %v3568
  %v3570 = vpop.f32.mrb[0].mxu0
  %v3571 = vpop.f32.mrb[0].mxu0
  %v3572 = vadd.f32 0.0, %v3571
  %v3573 = vpop.f32.mrb[0].mxu0
  %3574 = vdwg.mxu0
  %v3575 = vmax.f32 %v3480, %v3545
  %v3576 = vmax.f32 %v3483, %v3548
  %v3577 = vmax.f32 %v3488, %v3553
  %v3578 = vmax.f32 %v3491, %v3556
  %v3579 = vmax.f32 %v3496, %v3561
  %v3580 = vmax.f32 %v3499, %v3564
  %v3581 = vmax.f32 %v3504, %v3569
  %v3582 = vmax.f32 %v3507, %v3572
  %3583 = vst.msk [vmem:[#allocation3 + $0x80] sm:$0xff] %vm2372, %v3575
  %3584 = vst.msk [vmem:[#allocation3 + $0x88] sm:$0xff] %vm2372, %v3576
  %3585 = vst.msk [vmem:[#allocation3 + $0x90] sm:$0xff] %vm2372, %v3577
  %3586 = vst.msk [vmem:[#allocation3 + $0x98] sm:$0xff] %vm2372, %v3578
  %3587 = vst.msk [vmem:[#allocation3 + $0xa0] sm:$0xff] %vm2372, %v3579
  %3588 = vst.msk [vmem:[#allocation3 + $0xa8] sm:$0xff] %vm2372, %v3580
  %3589 = vst.msk [vmem:[#allocation3 + $0xb0] sm:$0xff] %vm2372, %v3581
  %3590 = vst.msk [vmem:[#allocation3 + $0xb8] sm:$0xff] %vm2372, %v3582
  %v3591 = vld [vmem:[#allocation2 + $0x1b0] sm:$0xff]
  %v3592 = vld [vmem:[#allocation2 + $0x1b8] sm:$0xff]
  %v3593 = vld [vmem:[#allocation2 + $0x1c0] sm:$0xff]
  %v3594 = vld [vmem:[#allocation2 + $0x1c8] sm:$0xff]
  %v3595 = vld [vmem:[#allocation2 + $0x1d0] sm:$0xff]
  %v3596 = vld [vmem:[#allocation2 + $0x1d8] sm:$0xff]
  %v3597 = vld [vmem:[#allocation2 + $0x1e0] sm:$0xff]
  %v3598 = vld [vmem:[#allocation2 + $0x1e8] sm:$0xff]
  %v3599 = vld [vmem:[#allocation2 + $0x1f0] sm:$0xff]
  %v3600 = vld [vmem:[#allocation2 + $0x1f8] sm:$0xff]
  %v3601 = vld [vmem:[#allocation2 + $0x200] sm:$0xff]
  %v3602 = vld [vmem:[#allocation2 + $0x208] sm:$0xff]
  %v3603 = vld [vmem:[#allocation2 + $0x210] sm:$0xff]
  %v3604 = vld [vmem:[#allocation2 + $0x218] sm:$0xff]
  %v3605 = vld [vmem:[#allocation2 + $0x220] sm:$0xff]
  %v3606 = vld [vmem:[#allocation2 + $0x228] sm:$0xff]
  %v3607 = vld [vmem:[#allocation2 + $0x230] sm:$0xff]
  %v3608 = vld [vmem:[#allocation2 + $0x238] sm:$0xff]
  %v3609 = vld [vmem:[#allocation2 + $0x240] sm:$0xff]
  %v3610 = vld [vmem:[#allocation2 + $0x248] sm:$0xff]
  %v3611 = vld [vmem:[#allocation2 + $0x250] sm:$0xff]
  %v3612 = vld [vmem:[#allocation2 + $0x258] sm:$0xff]
  %v3613 = vld [vmem:[#allocation2 + $0x260] sm:$0xff]
  %v3614 = vld [vmem:[#allocation2 + $0x268] sm:$0xff]
  %v3615 = vld [vmem:[#allocation2 + $0x270] sm:$0xff]
  %v3616 = vld [vmem:[#allocation2 + $0x278] sm:$0xff]
  %v3617 = vld [vmem:[#allocation2 + $0x280] sm:$0xff]
  %v3618 = vld [vmem:[#allocation2 + $0x288] sm:$0xff]
  %v3619 = vld [vmem:[#allocation2 + $0x290] sm:$0xff]
  %v3620 = vld [vmem:[#allocation2 + $0x298] sm:$0xff]
  %v3621 = vld [vmem:[#allocation2 + $0x2a0] sm:$0xff]
  %v3622 = vld [vmem:[#allocation2 + $0x2a8] sm:$0xff]
  %v3623 = vld [vmem:[#allocation2 + $0x2b0] sm:$0xff]
  %v3624 = vld [vmem:[#allocation2 + $0x2b8] sm:$0xff]
  %v3625 = vld [vmem:[#allocation2 + $0x2c0] sm:$0xff]
  %v3626 = vld [vmem:[#allocation2 + $0x2c8] sm:$0xff]
  %v3627 = vld [vmem:[#allocation2 + $0x2d0] sm:$0xff]
  %v3628 = vld [vmem:[#allocation2 + $0x2d8] sm:$0xff]
  %v3629 = vld [vmem:[#allocation2 + $0x2e0] sm:$0xff]
  %v3630 = vld [vmem:[#allocation2 + $0x2e8] sm:$0xff]
  %v3631 = vld [vmem:[#allocation2 + $0x2f0] sm:$0xff]
  %v3632 = vld [vmem:[#allocation2 + $0x2f8] sm:$0xff]
  %v3633 = vld [vmem:[#allocation2 + $0x300] sm:$0xff]
  %v3634 = vld [vmem:[#allocation2 + $0x308] sm:$0xff]
  %v3635 = vld [vmem:[#allocation2 + $0x310] sm:$0xff]
  %v3636 = vld [vmem:[#allocation2 + $0x318] sm:$0xff]
  %v3637 = vld [vmem:[#allocation2 + $0x320] sm:$0xff]
  %v3638 = vld [vmem:[#allocation2 + $0x328] sm:$0xff]
  %v3639 = vld [vmem:[#allocation2 + $0x330] sm:$0xff]
  %v3640 = vld [vmem:[#allocation2 + $0x338] sm:$0xff]
  %v3641 = vld [vmem:[#allocation2 + $0x340] sm:$0xff]
  %v3642 = vld [vmem:[#allocation2 + $0x348] sm:$0xff]
  %v3643 = vld [vmem:[#allocation2 + $0x350] sm:$0xff]
  %v3644 = vld [vmem:[#allocation2 + $0x358] sm:$0xff]
  %v3645 = vpack.c.bf16 %v3592, %v3591
  %v3646 = vpack.c.bf16 %v3594, %v3593
  %v3647 = vpack.c.bf16 %v3596, %v3595
  %v3648 = vpack.c.bf16 %v3598, %v3597
  %v3649 = vpack.c.bf16 %v3600, %v3599
  %v3650 = vpack.c.bf16 %v3602, %v3601
  %v3651 = vpack.c.bf16 %v3604, %v3603
  %v3652 = vpack.c.bf16 %v3606, %v3605
  %v3653 = vpack.c.bf16 %v3608, %v3607
  %v3654 = vpack.c.bf16 %v3610, %v3609
  %v3655 = vpack.c.bf16 %v3612, %v3611
  %v3656 = vpack.c.bf16 %v3614, %v3613
  %v3657 = vpack.c.bf16 %v3616, %v3615
  %v3658 = vpack.c.bf16 %v3618, %v3617
  %v3659 = vpack.c.bf16 %v3620, %v3619
  %v3660 = vpack.c.bf16 %v3622, %v3621
  %v3661 = vpack.c.bf16 %v3624, %v3623
  %v3662 = vpack.c.bf16 %v3626, %v3625
  %v3663 = vpack.c.bf16 %v3628, %v3627
  %v3664 = vpack.c.bf16 %v3630, %v3629
  %v3665 = vpack.c.bf16 %v3632, %v3631
  %v3666 = vpack.c.bf16 %v3634, %v3633
  %v3667 = vpack.c.bf16 %v3636, %v3635
  %v3668 = vpack.c.bf16 %v3638, %v3637
  %v3669 = vpack.c.bf16 %v3640, %v3639
  %v3670 = vpack.c.bf16 %v3642, %v3641
  %v3671 = vpack.c.bf16 %v3644, %v3643
  %3672 = vmatprep.subr.bf16.mxu0 0
  %3673 = vmatpush1.bf16.msra.mxu0 %v3645
  %3674 = vmatprep.subr.bf16.mxu0 0
  %3675 = vmatpush1.bf16.msra.mxu0 %v3646
  %3676 = vmatprep.subr.bf16.mxu0 0
  %3677 = vmatpush1.bf16.msra.mxu0 %v3647
  %3678 = vmatprep.subr.bf16.mxu0 0
  %3679 = vmatpush1.bf16.msra.mxu0 %v3648
  %3680 = vmatprep.subr.bf16.mxu0 0
  %3681 = vmatpush1.bf16.msra.mxu0 %v3649
  %3682 = vmatprep.subr.bf16.mxu0 0
  %3683 = vmatpush1.bf16.msra.mxu0 %v3650
  %3684 = vmatprep.subr.bf16.mxu0 0
  %3685 = vmatpush1.bf16.msra.mxu0 %v3651
  %3686 = vmatprep.subr.bf16.mxu0 0
  %3687 = vmatpush1.bf16.msra.mxu0 %v3652
  %3688 = vmatprep.subr.bf16.mxu0 0
  %3689 = vmatpush1.bf16.msra.mxu0 %v3653
  %3690 = vmatprep.subr.bf16.mxu0 0
  %3691 = vmatpush1.bf16.msra.mxu0 %v3654
  %3692 = vmatprep.subr.bf16.mxu0 0
  %3693 = vmatpush1.bf16.msra.mxu0 %v3655
  %3694 = vmatprep.subr.bf16.mxu0 0
  %3695 = vmatpush1.bf16.msra.mxu0 %v3656
  %3696 = vmatprep.subr.bf16.mxu0 0
  %3697 = vmatpush1.bf16.msra.mxu0 %v3657
  %3698 = vmatprep.subr.bf16.mxu0 0
  %3699 = vmatpush1.bf16.msra.mxu0 %v3658
  %3700 = vmatprep.subr.bf16.mxu0 0
  %3701 = vmatpush1.bf16.msra.mxu0 %v3659
  %3702 = vmatprep.subr.bf16.mxu0 0
  %3703 = vmatpush1.bf16.msra.mxu0 %v3660
  %3704 = vmatprep.mubr.bf16.mxu0 %v1648
  %3705 = vmatmul.mubr.bf16.gmra.mrb[0].mxu0 %v1647
  %v3706 = vpop.f32.mrb[0].mxu0
  %v3707 = vadd.f32 %v1298, %v3706
  %v3708 = vpop.f32.mrb[0].mxu0
  %v3709 = vpop.f32.mrb[0].mxu0
  %v3710 = vadd.f32 %v1303, %v3709
  %v3711 = vpop.f32.mrb[0].mxu0
  %3712 = vmatprep.mubr.bf16.mxu0 %v1652
  %3713 = vmatmul.mubr.bf16.gmra.mrb[0].mxu0 %v1651
  %v3714 = vpop.f32.mrb[0].mxu0
  %v3715 = vadd.f32 %v1308, %v3714
  %v3716 = vpop.f32.mrb[0].mxu0
  %v3717 = vpop.f32.mrb[0].mxu0
  %v3718 = vadd.f32 %v1313, %v3717
  %v3719 = vpop.f32.mrb[0].mxu0
  %3720 = vmatprep.mubr.bf16.mxu0 %v1656
  %3721 = vmatmul.mubr.bf16.gmra.mrb[0].mxu0 %v1655
  %v3722 = vpop.f32.mrb[0].mxu0
  %v3723 = vadd.f32 %v1318, %v3722
  %v3724 = vpop.f32.mrb[0].mxu0
  %v3725 = vpop.f32.mrb[0].mxu0
  %v3726 = vadd.f32 %v1323, %v3725
  %v3727 = vpop.f32.mrb[0].mxu0
  %3728 = vmatprep.mubr.bf16.mxu0 %v1660
  %3729 = vmatmul.mubr.bf16.gmra.mrb[0].mxu0 %v1659
  %v3730 = vpop.f32.mrb[0].mxu0
  %v3731 = vadd.f32 %v1328, %v3730
  %v3732 = vpop.f32.mrb[0].mxu0
  %v3733 = vpop.f32.mrb[0].mxu0
  %v3734 = vadd.f32 %v1333, %v3733
  %v3735 = vpop.f32.mrb[0].mxu0
  %3736 = vmatprep.mubr.bf16.mxu0 %v1664
  %3737 = vmatmul.mubr.bf16.gmra.mrb[0].mxu0 %v1663
  %v3738 = vpop.f32.mrb[0].mxu0
  %v3739 = vadd.f32 %v1338, %v3738
  %v3740 = vpop.f32.mrb[0].mxu0
  %v3741 = vpop.f32.mrb[0].mxu0
  %v3742 = vadd.f32 %v1343, %v3741
  %v3743 = vpop.f32.mrb[0].mxu0
  %3744 = vmatprep.mubr.bf16.mxu0 %v1668
  %3745 = vmatmul.mubr.bf16.gmra.mrb[0].mxu0 %v1667
  %v3746 = vpop.f32.mrb[0].mxu0
  %v3747 = vadd.f32 %v1348, %v3746
  %v3748 = vpop.f32.mrb[0].mxu0
  %v3749 = vpop.f32.mrb[0].mxu0
  %v3750 = vadd.f32 %v1353, %v3749
  %v3751 = vpop.f32.mrb[0].mxu0
  %3752 = vmatprep.mubr.bf16.mxu0 %v1672
  %3753 = vmatmul.mubr.bf16.gmra.mrb[0].mxu0 %v1671
  %v3754 = vpop.f32.mrb[0].mxu0
  %v3755 = vadd.f32 %v1358, %v3754
  %v3756 = vpop.f32.mrb[0].mxu0
  %v3757 = vpop.f32.mrb[0].mxu0
  %v3758 = vadd.f32 %v1363, %v3757
  %v3759 = vpop.f32.mrb[0].mxu0
  %3760 = vmatprep.mubr.bf16.mxu0 %v1676
  %3761 = vmatmul.mubr.bf16.gmra.mrb[0].mxu0 %v1675
  %v3762 = vpop.f32.mrb[0].mxu0
  %v3763 = vadd.f32 %v1368, %v3762
  %v3764 = vpop.f32.mrb[0].mxu0
  %v3765 = vpop.f32.mrb[0].mxu0
  %v3766 = vadd.f32 %v1373, %v3765
  %v3767 = vpop.f32.mrb[0].mxu0
  %3768 = vmatprep.mubr.bf16.mxu0 %v1680
  %3769 = vmatmul.mubr.bf16.gmra.mrb[0].mxu0 %v1679
  %v3770 = vpop.f32.mrb[0].mxu0
  %v3771 = vadd.f32 %v1378, %v3770
  %v3772 = vpop.f32.mrb[0].mxu0
  %v3773 = vpop.f32.mrb[0].mxu0
  %v3774 = vadd.f32 %v1383, %v3773
  %v3775 = vpop.f32.mrb[0].mxu0
  %3776 = vmatprep.mubr.bf16.mxu0 %v1684
  %3777 = vmatmul.mubr.bf16.gmra.mrb[0].mxu0 %v1683
  %v3778 = vpop.f32.mrb[0].mxu0
  %v3779 = vadd.f32 %v1388, %v3778
  %v3780 = vpop.f32.mrb[0].mxu0
  %v3781 = vpop.f32.mrb[0].mxu0
  %v3782 = vadd.f32 %v1393, %v3781
  %v3783 = vpop.f32.mrb[0].mxu0
  %3784 = vmatprep.mubr.bf16.mxu0 %v1688
  %3785 = vmatmul.mubr.bf16.gmra.mrb[0].mxu0 %v1687
  %v3786 = vpop.f32.mrb[0].mxu0
  %v3787 = vadd.f32 %v1398, %v3786
  %v3788 = vpop.f32.mrb[0].mxu0
  %v3789 = vpop.f32.mrb[0].mxu0
  %v3790 = vadd.f32 %v1403, %v3789
  %v3791 = vpop.f32.mrb[0].mxu0
  %3792 = vmatprep.mubr.bf16.mxu0 %v1692
  %3793 = vmatmul.mubr.bf16.gmra.mrb[0].mxu0 %v1691
  %v3794 = vpop.f32.mrb[0].mxu0
  %v3795 = vadd.f32 %v1408, %v3794
  %v3796 = vpop.f32.mrb[0].mxu0
  %v3797 = vpop.f32.mrb[0].mxu0
  %v3798 = vadd.f32 %v1413, %v3797
  %v3799 = vpop.f32.mrb[0].mxu0
  %3800 = vmatprep.mubr.bf16.mxu0 %v1696
  %3801 = vmatmul.mubr.bf16.gmra.mrb[0].mxu0 %v1695
  %v3802 = vpop.f32.mrb[0].mxu0
  %v3803 = vadd.f32 %v1418, %v3802
  %v3804 = vpop.f32.mrb[0].mxu0
  %v3805 = vpop.f32.mrb[0].mxu0
  %v3806 = vadd.f32 %v1423, %v3805
  %v3807 = vpop.f32.mrb[0].mxu0
  %3808 = vmatprep.mubr.bf16.mxu0 %v1700
  %3809 = vmatmul.mubr.bf16.gmra.mrb[0].mxu0 %v1699
  %v3810 = vpop.f32.mrb[0].mxu0
  %v3811 = vadd.f32 %v1428, %v3810
  %v3812 = vpop.f32.mrb[0].mxu0
  %v3813 = vpop.f32.mrb[0].mxu0
  %v3814 = vadd.f32 %v1433, %v3813
  %v3815 = vpop.f32.mrb[0].mxu0
  %3816 = vmatprep.mubr.bf16.mxu0 %v1704
  %3817 = vmatmul.mubr.bf16.gmra.mrb[0].mxu0 %v1703
  %v3818 = vpop.f32.mrb[0].mxu0
  %v3819 = vadd.f32 %v1438, %v3818
  %v3820 = vpop.f32.mrb[0].mxu0
  %v3821 = vpop.f32.mrb[0].mxu0
  %v3822 = vadd.f32 %v1443, %v3821
  %v3823 = vpop.f32.mrb[0].mxu0
  %3824 = vmatprep.mubr.bf16.mxu0 %v1708
  %3825 = vmatmul.mubr.bf16.gmra.mrb[0].mxu0 %v1707
  %v3826 = vpop.f32.mrb[0].mxu0
  %v3827 = vadd.f32 %v1448, %v3826
  %v3828 = vpop.f32.mrb[0].mxu0
  %v3829 = vpop.f32.mrb[0].mxu0
  %v3830 = vadd.f32 %v1453, %v3829
  %v3831 = vpop.f32.mrb[0].mxu0
  %3832 = vdwg.mxu0
  %3833 = vmatprep.subr.bf16.mxu0 0
  %3834 = vmatpush1.bf16.msra.mxu0 %v3661
  %3835 = vmatprep.subr.bf16.mxu0 0
  %3836 = vmatpush1.bf16.msra.mxu0 %v3662
  %3837 = vmatprep.subr.bf16.mxu0 0
  %3838 = vmatpush1.bf16.msra.mxu0 %v3663
  %3839 = vmatprep.subr.bf16.mxu0 0
  %3840 = vmatpush1.bf16.msra.mxu0 %v3664
  %3841 = vmatprep.subr.bf16.mxu0 0
  %3842 = vmatpush1.bf16.msra.mxu0 %v3665
  %3843 = vmatprep.subr.bf16.mxu0 0
  %3844 = vmatpush1.bf16.msra.mxu0 %v3666
  %3845 = vmatprep.subr.bf16.mxu0 0
  %3846 = vmatpush1.bf16.msra.mxu0 %v3667
  %3847 = vmatprep.subr.bf16.mxu0 0
  %3848 = vmatpush1.bf16.msra.mxu0 %v3668
  %3849 = vmatprep.subr.bf16.mxu0 0
  %3850 = vmatpush1.bf16.msra.mxu0 %v3669
  %3851 = vmatprep.subr.bf16.mxu0 0
  %3852 = vmatpush1.bf16.msra.mxu0 %v3670
  %3853 = vmatprep.subr.bf16.mxu0 0
  %3854 = vmatpush1.bf16.msra.mxu0 %v3671
  %3855 = vmatprep.subr.bf16.mxu0 0
  %3856 = vmatpush1.bf16.msra.mxu0 0
  %3857 = vmatprep.subr.bf16.mxu0 0
  %3858 = vmatpush1.bf16.msra.mxu0 0
  %3859 = vmatprep.subr.bf16.mxu0 0
  %3860 = vmatpush1.bf16.msra.mxu0 0
  %3861 = vmatprep.subr.bf16.mxu0 0
  %3862 = vmatpush1.bf16.msra.mxu0 0
  %3863 = vmatprep.subr.bf16.mxu0 0
  %3864 = vmatpush1.bf16.msra.mxu0 0
  %3865 = vmatprep.mubr.bf16.mxu0 %v1761
  %3866 = vmatmul.mubr.bf16.gmra.mrb[0].mxu0 %v1649
  %v3867 = vpop.f32.mrb[0].mxu0
  %v3868 = vadd.f32 %v3707, %v3867
  %v3869 = vpop.f32.mrb[0].mxu0
  %v3870 = vpop.f32.mrb[0].mxu0
  %v3871 = vadd.f32 %v3710, %v3870
  %v3872 = vpop.f32.mrb[0].mxu0
  %3873 = vmatprep.mubr.bf16.mxu0 %v1764
  %3874 = vmatmul.mubr.bf16.gmra.mrb[0].mxu0 %v1653
  %v3875 = vpop.f32.mrb[0].mxu0
  %v3876 = vadd.f32 %v3715, %v3875
  %v3877 = vpop.f32.mrb[0].mxu0
  %v3878 = vpop.f32.mrb[0].mxu0
  %v3879 = vadd.f32 %v3718, %v3878
  %v3880 = vpop.f32.mrb[0].mxu0
  %3881 = vmatprep.mubr.bf16.mxu0 %v1767
  %3882 = vmatmul.mubr.bf16.gmra.mrb[0].mxu0 %v1657
  %v3883 = vpop.f32.mrb[0].mxu0
  %v3884 = vadd.f32 %v3723, %v3883
  %v3885 = vpop.f32.mrb[0].mxu0
  %v3886 = vpop.f32.mrb[0].mxu0
  %v3887 = vadd.f32 %v3726, %v3886
  %v3888 = vpop.f32.mrb[0].mxu0
  %3889 = vmatprep.mubr.bf16.mxu0 %v1770
  %3890 = vmatmul.mubr.bf16.gmra.mrb[0].mxu0 %v1661
  %v3891 = vpop.f32.mrb[0].mxu0
  %v3892 = vadd.f32 %v3731, %v3891
  %v3893 = vpop.f32.mrb[0].mxu0
  %v3894 = vpop.f32.mrb[0].mxu0
  %v3895 = vadd.f32 %v3734, %v3894
  %v3896 = vpop.f32.mrb[0].mxu0
  %3897 = vmatprep.mubr.bf16.mxu0 %v1773
  %3898 = vmatmul.mubr.bf16.gmra.mrb[0].mxu0 %v1665
  %v3899 = vpop.f32.mrb[0].mxu0
  %v3900 = vadd.f32 %v3739, %v3899
  %v3901 = vpop.f32.mrb[0].mxu0
  %v3902 = vpop.f32.mrb[0].mxu0
  %v3903 = vadd.f32 %v3742, %v3902
  %v3904 = vpop.f32.mrb[0].mxu0
  %3905 = vmatprep.mubr.bf16.mxu0 %v1776
  %3906 = vmatmul.mubr.bf16.gmra.mrb[0].mxu0 %v1669
  %v3907 = vpop.f32.mrb[0].mxu0
  %v3908 = vadd.f32 %v3747, %v3907
  %v3909 = vpop.f32.mrb[0].mxu0
  %v3910 = vpop.f32.mrb[0].mxu0
  %v3911 = vadd.f32 %v3750, %v3910
  %v3912 = vpop.f32.mrb[0].mxu0
  %3913 = vmatprep.mubr.bf16.mxu0 %v1779
  %3914 = vmatmul.mubr.bf16.gmra.mrb[0].mxu0 %v1673
  %v3915 = vpop.f32.mrb[0].mxu0
  %v3916 = vadd.f32 %v3755, %v3915
  %v3917 = vpop.f32.mrb[0].mxu0
  %v3918 = vpop.f32.mrb[0].mxu0
  %v3919 = vadd.f32 %v3758, %v3918
  %v3920 = vpop.f32.mrb[0].mxu0
  %3921 = vmatprep.mubr.bf16.mxu0 %v1782
  %3922 = vmatmul.mubr.bf16.gmra.mrb[0].mxu0 %v1677
  %v3923 = vpop.f32.mrb[0].mxu0
  %v3924 = vadd.f32 %v3763, %v3923
  %v3925 = vpop.f32.mrb[0].mxu0
  %v3926 = vpop.f32.mrb[0].mxu0
  %v3927 = vadd.f32 %v3766, %v3926
  %v3928 = vpop.f32.mrb[0].mxu0
  %3929 = vmatprep.mubr.bf16.mxu0 %v1785
  %3930 = vmatmul.mubr.bf16.gmra.mrb[0].mxu0 %v1681
  %v3931 = vpop.f32.mrb[0].mxu0
  %v3932 = vadd.f32 %v3771, %v3931
  %v3933 = vpop.f32.mrb[0].mxu0
  %v3934 = vpop.f32.mrb[0].mxu0
  %v3935 = vadd.f32 %v3774, %v3934
  %v3936 = vpop.f32.mrb[0].mxu0
  %3937 = vmatprep.mubr.bf16.mxu0 %v1788
  %3938 = vmatmul.mubr.bf16.gmra.mrb[0].mxu0 %v1685
  %v3939 = vpop.f32.mrb[0].mxu0
  %v3940 = vadd.f32 %v3779, %v3939
  %v3941 = vpop.f32.mrb[0].mxu0
  %v3942 = vpop.f32.mrb[0].mxu0
  %v3943 = vadd.f32 %v3782, %v3942
  %v3944 = vpop.f32.mrb[0].mxu0
  %3945 = vmatprep.mubr.bf16.mxu0 %v1791
  %3946 = vmatmul.mubr.bf16.gmra.mrb[0].mxu0 %v1689
  %v3947 = vpop.f32.mrb[0].mxu0
  %v3948 = vadd.f32 %v3787, %v3947
  %v3949 = vpop.f32.mrb[0].mxu0
  %v3950 = vpop.f32.mrb[0].mxu0
  %v3951 = vadd.f32 %v3790, %v3950
  %v3952 = vpop.f32.mrb[0].mxu0
  %3953 = vmatprep.mubr.bf16.mxu0 %v1794
  %3954 = vmatmul.mubr.bf16.gmra.mrb[0].mxu0 %v1693
  %v3955 = vpop.f32.mrb[0].mxu0
  %v3956 = vadd.f32 %v3795, %v3955
  %v3957 = vpop.f32.mrb[0].mxu0
  %v3958 = vpop.f32.mrb[0].mxu0
  %v3959 = vadd.f32 %v3798, %v3958
  %v3960 = vpop.f32.mrb[0].mxu0
  %3961 = vmatprep.mubr.bf16.mxu0 %v1797
  %3962 = vmatmul.mubr.bf16.gmra.mrb[0].mxu0 %v1697
  %v3963 = vpop.f32.mrb[0].mxu0
  %v3964 = vadd.f32 %v3803, %v3963
  %v3965 = vpop.f32.mrb[0].mxu0
  %v3966 = vpop.f32.mrb[0].mxu0
  %v3967 = vadd.f32 %v3806, %v3966
  %v3968 = vpop.f32.mrb[0].mxu0
  %3969 = vmatprep.mubr.bf16.mxu0 %v1800
  %3970 = vmatmul.mubr.bf16.gmra.mrb[0].mxu0 %v1701
  %v3971 = vpop.f32.mrb[0].mxu0
  %v3972 = vadd.f32 %v3811, %v3971
  %v3973 = vpop.f32.mrb[0].mxu0
  %v3974 = vpop.f32.mrb[0].mxu0
  %v3975 = vadd.f32 %v3814, %v3974
  %v3976 = vpop.f32.mrb[0].mxu0
  %3977 = vmatprep.mubr.bf16.mxu0 %v1803
  %3978 = vmatmul.mubr.bf16.gmra.mrb[0].mxu0 %v1705
  %v3979 = vpop.f32.mrb[0].mxu0
  %v3980 = vadd.f32 %v3819, %v3979
  %v3981 = vpop.f32.mrb[0].mxu0
  %v3982 = vpop.f32.mrb[0].mxu0
  %v3983 = vadd.f32 %v3822, %v3982
  %v3984 = vpop.f32.mrb[0].mxu0
  %3985 = vmatprep.mubr.bf16.mxu0 %v1806
  %3986 = vmatmul.mubr.bf16.gmra.mrb[0].mxu0 %v1709
  %v3987 = vpop.f32.mrb[0].mxu0
  %v3988 = vadd.f32 %v3827, %v3987
  %v3989 = vpop.f32.mrb[0].mxu0
  %v3990 = vpop.f32.mrb[0].mxu0
  %v3991 = vadd.f32 %v3830, %v3990
  %v3992 = vpop.f32.mrb[0].mxu0
  %3993 = vdwg.mxu0
  %v3994 = vmax.f32 %v3868, 0.0
  %v3995 = vmax.f32 %v3871, 0.0
  %v3996 = vmax.f32 %v3876, 0.0
  %v3997 = vmax.f32 %v3879, 0.0
  %v3998 = vmax.f32 %v3884, 0.0
  %v3999 = vmax.f32 %v3887, 0.0
  %v4000 = vmax.f32 %v3892, 0.0
  %v4001 = vmax.f32 %v3895, 0.0
  %v4002 = vmax.f32 %v3900, 0.0
  %v4003 = vmax.f32 %v3903, 0.0
  %v4004 = vmax.f32 %v3908, 0.0
  %v4005 = vmax.f32 %v3911, 0.0
  %v4006 = vmax.f32 %v3916, 0.0
  %v4007 = vmax.f32 %v3919, 0.0
  %v4008 = vmax.f32 %v3924, 0.0
  %v4009 = vmax.f32 %v3927, 0.0
  %v4010 = vmax.f32 %v3932, 0.0
  %v4011 = vmax.f32 %v3935, 0.0
  %v4012 = vmax.f32 %v3940, 0.0
  %v4013 = vmax.f32 %v3943, 0.0
  %v4014 = vmax.f32 %v3948, 0.0
  %v4015 = vmax.f32 %v3951, 0.0
  %v4016 = vmax.f32 %v3956, 0.0
  %v4017 = vmax.f32 %v3959, 0.0
  %v4018 = vmax.f32 %v3964, 0.0
  %v4019 = vmax.f32 %v3967, 0.0
  %v4020 = vmax.f32 %v3972, 0.0
  %v4021 = vmax.f32 %v3975, 0.0
  %v4022 = vmax.f32 %v3980, 0.0
  %v4023 = vmax.f32 %v3983, 0.0
  %v4024 = vmax.f32 %v3988, 0.0
  %v4025 = vmax.f32 %v3991, 0.0
  %v4026 = vmax.f32 %v3994, %v4010
  %v4027 = vmax.f32 %v3995, %v4011
  %v4028 = vmax.f32 %v3996, %v4012
  %v4029 = vmax.f32 %v3997, %v4013
  %v4030 = vmax.f32 %v3998, %v4014
  %v4031 = vmax.f32 %v3999, %v4015
  %v4032 = vmax.f32 %v4000, %v4016
  %v4033 = vmax.f32 %v4001, %v4017
  %v4034 = vmax.f32 %v4002, %v4018
  %v4035 = vmax.f32 %v4003, %v4019
  %v4036 = vmax.f32 %v4004, %v4020
  %v4037 = vmax.f32 %v4005, %v4021
  %v4038 = vmax.f32 %v4006, %v4022
  %v4039 = vmax.f32 %v4007, %v4023
  %v4040 = vmax.f32 %v4008, %v4024
  %v4041 = vmax.f32 %v4009, %v4025
  %v4042 = vpack.c.bf16 %v4027, %v4026
  %v4043 = vpack.c.bf16 %v4029, %v4028
  %v4044 = vpack.c.bf16 %v4031, %v4030
  %v4045 = vpack.c.bf16 %v4033, %v4032
  %v4046 = vpack.c.bf16 %v4035, %v4034
  %v4047 = vpack.c.bf16 %v4037, %v4036
  %v4048 = vpack.c.bf16 %v4039, %v4038
  %v4049 = vpack.c.bf16 %v4041, %v4040
  %4050 = vmatprep.subr.bf16.mxu0 0
  %4051 = vmatpush1.bf16.msra.mxu0 %v4042
  %4052 = vmatprep.subr.bf16.mxu0 0
  %4053 = vmatpush1.bf16.msra.mxu0 %v4043
  %4054 = vmatprep.subr.bf16.mxu0 0
  %4055 = vmatpush1.bf16.msra.mxu0 %v4044
  %4056 = vmatprep.subr.bf16.mxu0 0
  %4057 = vmatpush1.bf16.msra.mxu0 %v4045
  %4058 = vmatprep.subr.bf16.mxu0 0
  %4059 = vmatpush1.bf16.msra.mxu0 %v4046
  %4060 = vmatprep.subr.bf16.mxu0 0
  %4061 = vmatpush1.bf16.msra.mxu0 %v4047
  %4062 = vmatprep.subr.bf16.mxu0 0
  %4063 = vmatpush1.bf16.msra.mxu0 %v4048
  %4064 = vmatprep.subr.bf16.mxu0 0
  %4065 = vmatpush1.bf16.msra.mxu0 %v4049
  %4066 = vmatprep.subr.bf16.mxu0 0
  %4067 = vmatpush1.bf16.msra.mxu0 0
  %4068 = vmatprep.subr.bf16.mxu0 0
  %4069 = vmatpush1.bf16.msra.mxu0 0
  %4070 = vmatprep.subr.bf16.mxu0 0
  %4071 = vmatpush1.bf16.msra.mxu0 0
  %4072 = vmatprep.subr.bf16.mxu0 0
  %4073 = vmatpush1.bf16.msra.mxu0 0
  %4074 = vmatprep.subr.bf16.mxu0 0
  %4075 = vmatpush1.bf16.msra.mxu0 0
  %4076 = vmatprep.subr.bf16.mxu0 0
  %4077 = vmatpush1.bf16.msra.mxu0 0
  %4078 = vmatprep.subr.bf16.mxu0 0
  %4079 = vmatpush1.bf16.msra.mxu0 0
  %4080 = vmatprep.subr.bf16.mxu0 0
  %4081 = vmatpush1.bf16.msra.mxu0 0
  %4082 = vmatprep.mubr.bf16.mxu0 0
  %4083 = vmatmul.mubr.bf16.gmra.mrb[0].mxu0 %v2202
  %v4084 = vpop.f32.mrb[0].mxu0
  %v4085 = vadd.f32 0.0, %v4084
  %v4086 = vpop.f32.mrb[0].mxu0
  %v4087 = vpop.f32.mrb[0].mxu0
  %v4088 = vadd.f32 0.0, %v4087
  %v4089 = vpop.f32.mrb[0].mxu0
  %4090 = vmatprep.mubr.bf16.mxu0 0
  %4091 = vmatmul.mubr.bf16.gmra.mrb[0].mxu0 %v2203
  %v4092 = vpop.f32.mrb[0].mxu0
  %v4093 = vadd.f32 0.0, %v4092
  %v4094 = vpop.f32.mrb[0].mxu0
  %v4095 = vpop.f32.mrb[0].mxu0
  %v4096 = vadd.f32 0.0, %v4095
  %v4097 = vpop.f32.mrb[0].mxu0
  %4098 = vmatprep.mubr.bf16.mxu0 0
  %4099 = vmatmul.mubr.bf16.gmra.mrb[0].mxu0 %v2204
  %v4100 = vpop.f32.mrb[0].mxu0
  %v4101 = vadd.f32 0.0, %v4100
  %v4102 = vpop.f32.mrb[0].mxu0
  %v4103 = vpop.f32.mrb[0].mxu0
  %v4104 = vadd.f32 0.0, %v4103
  %v4105 = vpop.f32.mrb[0].mxu0
  %4106 = vmatprep.mubr.bf16.mxu0 0
  %4107 = vmatmul.mubr.bf16.gmra.mrb[0].mxu0 %v2205
  %v4108 = vpop.f32.mrb[0].mxu0
  %v4109 = vadd.f32 0.0, %v4108
  %v4110 = vpop.f32.mrb[0].mxu0
  %v4111 = vpop.f32.mrb[0].mxu0
  %v4112 = vadd.f32 0.0, %v4111
  %v4113 = vpop.f32.mrb[0].mxu0
  %4114 = vdwg.mxu0
  %4115 = vmatprep.subr.bf16.mxu0 0
  %4116 = vmatpush1.bf16.msra.mxu0 %v4042
  %4117 = vmatprep.subr.bf16.mxu0 0
  %4118 = vmatpush1.bf16.msra.mxu0 %v4043
  %4119 = vmatprep.subr.bf16.mxu0 0
  %4120 = vmatpush1.bf16.msra.mxu0 %v4044
  %4121 = vmatprep.subr.bf16.mxu0 0
  %4122 = vmatpush1.bf16.msra.mxu0 %v4045
  %4123 = vmatprep.subr.bf16.mxu0 0
  %4124 = vmatpush1.bf16.msra.mxu0 %v4046
  %4125 = vmatprep.subr.bf16.mxu0 0
  %4126 = vmatpush1.bf16.msra.mxu0 %v4047
  %4127 = vmatprep.subr.bf16.mxu0 0
  %4128 = vmatpush1.bf16.msra.mxu0 %v4048
  %4129 = vmatprep.subr.bf16.mxu0 0
  %4130 = vmatpush1.bf16.msra.mxu0 %v4049
  %4131 = vmatprep.subr.bf16.mxu0 0
  %4132 = vmatpush1.bf16.msra.mxu0 0
  %4133 = vmatprep.subr.bf16.mxu0 0
  %4134 = vmatpush1.bf16.msra.mxu0 0
  %4135 = vmatprep.subr.bf16.mxu0 0
  %4136 = vmatpush1.bf16.msra.mxu0 0
  %4137 = vmatprep.subr.bf16.mxu0 0
  %4138 = vmatpush1.bf16.msra.mxu0 0
  %4139 = vmatprep.subr.bf16.mxu0 0
  %4140 = vmatpush1.bf16.msra.mxu0 0
  %4141 = vmatprep.subr.bf16.mxu0 0
  %4142 = vmatpush1.bf16.msra.mxu0 0
  %4143 = vmatprep.subr.bf16.mxu0 0
  %4144 = vmatpush1.bf16.msra.mxu0 0
  %4145 = vmatprep.subr.bf16.mxu0 0
  %4146 = vmatpush1.bf16.msra.mxu0 0
  %4147 = vmatprep.mubr.bf16.mxu0 0
  %4148 = vmatmul.mubr.bf16.gmra.mrb[0].mxu0 %v2291
  %v4149 = vpop.f32.mrb[0].mxu0
  %v4150 = vadd.f32 0.0, %v4149
  %v4151 = vpop.f32.mrb[0].mxu0
  %v4152 = vpop.f32.mrb[0].mxu0
  %v4153 = vadd.f32 0.0, %v4152
  %v4154 = vpop.f32.mrb[0].mxu0
  %4155 = vmatprep.mubr.bf16.mxu0 0
  %4156 = vmatmul.mubr.bf16.gmra.mrb[0].mxu0 %v2292
  %v4157 = vpop.f32.mrb[0].mxu0
  %v4158 = vadd.f32 0.0, %v4157
  %v4159 = vpop.f32.mrb[0].mxu0
  %v4160 = vpop.f32.mrb[0].mxu0
  %v4161 = vadd.f32 0.0, %v4160
  %v4162 = vpop.f32.mrb[0].mxu0
  %4163 = vmatprep.mubr.bf16.mxu0 0
  %4164 = vmatmul.mubr.bf16.gmra.mrb[0].mxu0 %v2293
  %v4165 = vpop.f32.mrb[0].mxu0
  %v4166 = vadd.f32 0.0, %v4165
  %v4167 = vpop.f32.mrb[0].mxu0
  %v4168 = vpop.f32.mrb[0].mxu0
  %v4169 = vadd.f32 0.0, %v4168
  %v4170 = vpop.f32.mrb[0].mxu0
  %4171 = vmatprep.mubr.bf16.mxu0 0
  %4172 = vmatmul.mubr.bf16.gmra.mrb[0].mxu0 %v2294
  %v4173 = vpop.f32.mrb[0].mxu0
  %v4174 = vadd.f32 0.0, %v4173
  %v4175 = vpop.f32.mrb[0].mxu0
  %v4176 = vpop.f32.mrb[0].mxu0
  %v4177 = vadd.f32 0.0, %v4176
  %v4178 = vpop.f32.mrb[0].mxu0
  %4179 = vdwg.mxu0
  %v4180 = vmax.f32 %v4085, %v4150
  %v4181 = vmax.f32 %v4088, %v4153
  %v4182 = vmax.f32 %v4093, %v4158
  %v4183 = vmax.f32 %v4096, %v4161
  %v4184 = vmax.f32 %v4101, %v4166
  %v4185 = vmax.f32 %v4104, %v4169
  %v4186 = vmax.f32 %v4109, %v4174
  %v4187 = vmax.f32 %v4112, %v4177
  %4188 = vst.msk [vmem:[#allocation3 + $0xc0] sm:$0xff] %vm2372, %v4180
  %4189 = vst.msk [vmem:[#allocation3 + $0xc8] sm:$0xff] %vm2372, %v4181
  %4190 = vst.msk [vmem:[#allocation3 + $0xd0] sm:$0xff] %vm2372, %v4182
  %4191 = vst.msk [vmem:[#allocation3 + $0xd8] sm:$0xff] %vm2372, %v4183
  %4192 = vst.msk [vmem:[#allocation3 + $0xe0] sm:$0xff] %vm2372, %v4184
  %4193 = vst.msk [vmem:[#allocation3 + $0xe8] sm:$0xff] %vm2372, %v4185
  %4194 = vst.msk [vmem:[#allocation3 + $0xf0] sm:$0xff] %vm2372, %v4186
  %4195 = vst.msk [vmem:[#allocation3 + $0xf8] sm:$0xff] %vm2372, %v4187
  %v4196 = vld [vmem:[#allocation3] sm:$0xff]
  %v4197 = vld [vmem:[#allocation3 + $0x8] sm:$0xff]
  %v4198 = vld [vmem:[#allocation3 + $0x10] sm:$0xff]
  %v4199 = vld [vmem:[#allocation3 + $0x18] sm:$0xff]
  %v4200 = vld [vmem:[#allocation3 + $0x20] sm:$0xff]
  %v4201 = vld [vmem:[#allocation3 + $0x28] sm:$0xff]
  %v4202 = vld [vmem:[#allocation3 + $0x30] sm:$0xff]
  %v4203 = vld [vmem:[#allocation3 + $0x38] sm:$0xff]
  %v4204 = vld [vmem:[#allocation3 + $0x40] sm:$0xff]
  %v4205 = vld [vmem:[#allocation3 + $0x48] sm:$0xff]
  %v4206 = vld [vmem:[#allocation3 + $0x50] sm:$0xff]
  %v4207 = vld [vmem:[#allocation3 + $0x58] sm:$0xff]
  %v4208 = vld [vmem:[#allocation3 + $0x60] sm:$0xff]
  %v4209 = vld [vmem:[#allocation3 + $0x68] sm:$0xff]
  %v4210 = vld [vmem:[#allocation3 + $0x70] sm:$0xff]
  %v4211 = vld [vmem:[#allocation3 + $0x78] sm:$0xff]
  %v4212 = vld [vmem:[#allocation3 + $0x80] sm:$0xff]
  %v4213 = vld [vmem:[#allocation3 + $0x88] sm:$0xff]
  %v4214 = vld [vmem:[#allocation3 + $0x90] sm:$0xff]
  %v4215 = vld [vmem:[#allocation3 + $0x98] sm:$0xff]
  %v4216 = vld [vmem:[#allocation3 + $0xa0] sm:$0xff]
  %v4217 = vld [vmem:[#allocation3 + $0xa8] sm:$0xff]
  %v4218 = vld [vmem:[#allocation3 + $0xb0] sm:$0xff]
  %v4219 = vld [vmem:[#allocation3 + $0xb8] sm:$0xff]
  %v4220 = vld [vmem:[#allocation3 + $0xc0] sm:$0xff]
  %v4221 = vld [vmem:[#allocation3 + $0xc8] sm:$0xff]
  %v4222 = vld [vmem:[#allocation3 + $0xd0] sm:$0xff]
  %v4223 = vld [vmem:[#allocation3 + $0xd8] sm:$0xff]
  %v4224 = vld [vmem:[#allocation3 + $0xe0] sm:$0xff]
  %v4225 = vld [vmem:[#allocation3 + $0xe8] sm:$0xff]
  %v4226 = vld [vmem:[#allocation3 + $0xf0] sm:$0xff]
  %v4227 = vld [vmem:[#allocation3 + $0xf8] sm:$0xff]
  %v4228 = vpack.c.bf16 %v4197, %v4196
  %v4229 = vpack.c.bf16 %v4199, %v4198
  %v4230 = vpack.c.bf16 %v4201, %v4200
  %v4231 = vpack.c.bf16 %v4203, %v4202
  %v4232 = vpack.c.bf16 %v4205, %v4204
  %v4233 = vpack.c.bf16 %v4207, %v4206
  %v4234 = vpack.c.bf16 %v4209, %v4208
  %v4235 = vpack.c.bf16 %v4211, %v4210
  %v4236 = vpack.c.bf16 %v4213, %v4212
  %v4237 = vpack.c.bf16 %v4215, %v4214
  %v4238 = vpack.c.bf16 %v4217, %v4216
  %v4239 = vpack.c.bf16 %v4219, %v4218
  %v4240 = vpack.c.bf16 %v4221, %v4220
  %v4241 = vpack.c.bf16 %v4223, %v4222
  %v4242 = vpack.c.bf16 %v4225, %v4224
  %v4243 = vpack.c.bf16 %v4227, %v4226
  %v4244 = vld [vmem:[%s9] sm:$0xff]
  %v4245 = vld [vmem:[%s9 + $0x8] sm:$0xff]
  %v4246 = vld [vmem:[%s9 + $0x10] sm:$0xff]
  %v4247 = vld [vmem:[%s9 + $0x18] sm:$0xff]
  %v4248 = vld [vmem:[%s9 + $0x20] sm:$0xff]
  %v4249 = vld [vmem:[%s9 + $0x28] sm:$0xff]
  %v4250 = vld [vmem:[%s9 + $0x30] sm:$0xff]
  %v4251 = vld [vmem:[%s9 + $0x38] sm:$0xff]
  %v4252 = vld [vmem:[%s9 + $0x40] sm:$0xff]
  %v4253 = vld [vmem:[%s9 + $0x48] sm:$0xff]
  %v4254 = vld [vmem:[%s9 + $0x50] sm:$0xff]
  %v4255 = vld [vmem:[%s9 + $0x58] sm:$0xff]
  %v4256 = vld [vmem:[%s9 + $0x60] sm:$0xff]
  %v4257 = vld [vmem:[%s9 + $0x68] sm:$0xff]
  %v4258 = vld [vmem:[%s9 + $0x70] sm:$0xff]
  %v4259 = vld [vmem:[%s10] sm:$0xff]
  %v4260 = vld [vmem:[%s10 + $0x8] sm:$0xff]
  %v4261 = vld [vmem:[%s10 + $0x10] sm:$0xff]
  %v4262 = vld [vmem:[%s10 + $0x18] sm:$0xff]
  %v4263 = vld [vmem:[%s10 + $0x20] sm:$0xff]
  %v4264 = vld [vmem:[%s10 + $0x28] sm:$0xff]
  %v4265 = vld [vmem:[%s10 + $0x30] sm:$0xff]
  %v4266 = vld [vmem:[%s10 + $0x38] sm:$0xff]
  %v4267 = vld [vmem:[%s10 + $0x40] sm:$0xff]
  %v4268 = vld [vmem:[%s10 + $0x48] sm:$0xff]
  %v4269 = vld [vmem:[%s10 + $0x50] sm:$0xff]
  %v4270 = vld [vmem:[%s10 + $0x58] sm:$0xff]
  %v4271 = vld [vmem:[%s10 + $0x60] sm:$0xff]
  %v4272 = vld [vmem:[%s10 + $0x68] sm:$0xff]
  %v4273 = vld [vmem:[%s10 + $0x70] sm:$0xff]
  %4275 = vset.pattern.permute.xlu0 0
  %4276 = vperm.xlu0 %4275, %v4259
  %v4277 = vpop.permute.xlu0 %4276
  %4280 = vset.pattern.permute.xlu0 0
  %4281 = vperm.xlu0 %4280, %v4260
  %v4282 = vpop.permute.xlu0 %4281
  %4285 = vset.pattern.permute.xlu0 0
  %4286 = vperm.xlu0 %4285, %v4261
  %v4287 = vpop.permute.xlu0 %4286
  %4290 = vset.pattern.permute.xlu0 0
  %4291 = vperm.xlu0 %4290, %v4262
  %v4292 = vpop.permute.xlu0 %4291
  %4295 = vset.pattern.permute.xlu0 0
  %4296 = vperm.xlu0 %4295, %v4263
  %v4297 = vpop.permute.xlu0 %4296
  %4300 = vset.pattern.permute.xlu0 0
  %4301 = vperm.xlu0 %4300, %v4264
  %v4302 = vpop.permute.xlu0 %4301
  %4305 = vset.pattern.permute.xlu0 0
  %4306 = vperm.xlu0 %4305, %v4265
  %v4307 = vpop.permute.xlu0 %4306
  %4310 = vset.pattern.permute.xlu0 0
  %4311 = vperm.xlu0 %4310, %v4266
  %v4312 = vpop.permute.xlu0 %4311
  %4315 = vset.pattern.permute.xlu0 0
  %4316 = vperm.xlu0 %4315, %v4267
  %v4317 = vpop.permute.xlu0 %4316
  %4320 = vset.pattern.permute.xlu0 0
  %4321 = vperm.xlu0 %4320, %v4268
  %v4322 = vpop.permute.xlu0 %4321
  %4325 = vset.pattern.permute.xlu0 0
  %4326 = vperm.xlu0 %4325, %v4269
  %v4327 = vpop.permute.xlu0 %4326
  %4330 = vset.pattern.permute.xlu0 0
  %4331 = vperm.xlu0 %4330, %v4270
  %v4332 = vpop.permute.xlu0 %4331
  %4335 = vset.pattern.permute.xlu0 0
  %4336 = vperm.xlu0 %4335, %v4271
  %v4337 = vpop.permute.xlu0 %4336
  %4340 = vset.pattern.permute.xlu0 0
  %4341 = vperm.xlu0 %4340, %v4272
  %v4342 = vpop.permute.xlu0 %4341
  %4345 = vset.pattern.permute.xlu0 0
  %4346 = vperm.xlu0 %4345, %v4273
  %v4347 = vpop.permute.xlu0 %4346
  %v4364 = vunpack.c.l.b16 %v4244
  %v4365 = vunpack.c.h.b16 %v4244
  %v4366 = vunpack.c.l.b16 %v4245
  %v4367 = vunpack.c.h.b16 %v4245
  %v4368 = vunpack.c.l.b16 %v4246
  %v4369 = vunpack.c.h.b16 %v4246
  %v4370 = vunpack.c.l.b16 %v4247
  %v4371 = vunpack.c.h.b16 %v4247
  %v4372 = vunpack.c.l.b16 %v4248
  %v4373 = vunpack.c.h.b16 %v4248
  %v4374 = vunpack.c.l.b16 %v4249
  %v4375 = vunpack.c.h.b16 %v4249
  %v4376 = vunpack.c.l.b16 %v4250
  %v4377 = vunpack.c.h.b16 %v4250
  %v4378 = vunpack.c.l.b16 %v4251
  %v4379 = vunpack.c.h.b16 %v4251
  %v4380 = vunpack.c.l.b16 %v4252
  %v4381 = vunpack.c.h.b16 %v4252
  %v4382 = vunpack.c.l.b16 %v4253
  %v4383 = vunpack.c.h.b16 %v4253
  %v4384 = vunpack.c.l.b16 %v4254
  %v4385 = vunpack.c.h.b16 %v4254
  %v4386 = vunpack.c.l.b16 %v4255
  %v4387 = vunpack.c.h.b16 %v4255
  %v4388 = vunpack.c.l.b16 %v4256
  %v4389 = vunpack.c.h.b16 %v4256
  %v4390 = vunpack.c.l.b16 %v4257
  %v4391 = vunpack.c.h.b16 %v4257
  %v4392 = vunpack.c.l.b16 %v4258
  %v4393 = vunpack.c.h.b16 %v4258
  %v4394 = vpack.c.b16 %v4366, %v4364
  %v4395 = vpack.c.b16 %v4367, %v4365
  %v4396 = vpack.c.b16 %v4370, %v4368
  %v4397 = vpack.c.b16 %v4371, %v4369
  %v4398 = vpack.c.b16 %v4374, %v4372
  %v4399 = vpack.c.b16 %v4375, %v4373
  %v4400 = vpack.c.b16 %v4378, %v4376
  %v4401 = vpack.c.b16 %v4379, %v4377
  %v4402 = vpack.c.b16 %v4382, %v4380
  %v4403 = vpack.c.b16 %v4383, %v4381
  %v4404 = vpack.c.b16 %v4386, %v4384
  %v4405 = vpack.c.b16 %v4387, %v4385
  %v4406 = vpack.c.b16 %v4390, %v4388
  %v4407 = vpack.c.b16 %v4391, %v4389
  %v4408 = vpack.c.b16 %v4392, %v4392
  %v4409 = vpack.c.b16 %v4393, %v4393
  %4426 = vmatprep.subr.bf16.mxu0 0
  %4427 = vmatpush1.bf16.msra.mxu0 %v4228
  %4428 = vmatprep.subr.bf16.mxu0 0
  %4429 = vmatpush1.bf16.msra.mxu0 %v4229
  %4430 = vmatprep.subr.bf16.mxu0 0
  %4431 = vmatpush1.bf16.msra.mxu0 %v4230
  %4432 = vmatprep.subr.bf16.mxu0 0
  %4433 = vmatpush1.bf16.msra.mxu0 %v4231
  %4434 = vmatprep.subr.bf16.mxu0 0
  %4435 = vmatpush1.bf16.msra.mxu0 %v4232
  %4436 = vmatprep.subr.bf16.mxu0 0
  %4437 = vmatpush1.bf16.msra.mxu0 %v4233
  %4438 = vmatprep.subr.bf16.mxu0 0
  %4439 = vmatpush1.bf16.msra.mxu0 %v4234
  %4440 = vmatprep.subr.bf16.mxu0 0
  %4441 = vmatpush1.bf16.msra.mxu0 %v4235
  %4442 = vmatprep.subr.bf16.mxu0 0
  %4443 = vmatpush1.bf16.msra.mxu0 %v4236
  %4444 = vmatprep.subr.bf16.mxu0 0
  %4445 = vmatpush1.bf16.msra.mxu0 %v4237
  %4446 = vmatprep.subr.bf16.mxu0 0
  %4447 = vmatpush1.bf16.msra.mxu0 %v4238
  %4448 = vmatprep.subr.bf16.mxu0 0
  %4449 = vmatpush1.bf16.msra.mxu0 %v4239
  %4450 = vmatprep.subr.bf16.mxu0 0
  %4451 = vmatpush1.bf16.msra.mxu0 %v4240
  %4452 = vmatprep.subr.bf16.mxu0 0
  %4453 = vmatpush1.bf16.msra.mxu0 %v4241
  %4454 = vmatprep.subr.bf16.mxu0 0
  %4455 = vmatpush1.bf16.msra.mxu0 %v4242
  %4456 = vmatprep.subr.bf16.mxu0 0
  %4457 = vmatpush1.bf16.msra.mxu0 %v4243
  %4458 = vmatprep.mubr.bf16.mxu0 %v4395
  %4459 = vmatmul.mubr.bf16.gmra.mrb[0].mxu0 %v4394
  %v4460 = vpop.f32.mrb[0].mxu0
  %v4461 = vadd.f32 %v4277, %v4460
  %v4462 = vpop.f32.mrb[0].mxu0
  %v4463 = vpop.f32.mrb[0].mxu0
  %v4464 = vadd.f32 %v4282, %v4463
  %v4465 = vpop.f32.mrb[0].mxu0
  %4466 = vmatprep.mubr.bf16.mxu0 %v4397
  %4467 = vmatmul.mubr.bf16.gmra.mrb[0].mxu0 %v4396
  %v4468 = vpop.f32.mrb[0].mxu0
  %v4469 = vadd.f32 %v4287, %v4468
  %v4470 = vpop.f32.mrb[0].mxu0
  %v4471 = vpop.f32.mrb[0].mxu0
  %v4472 = vadd.f32 %v4292, %v4471
  %v4473 = vpop.f32.mrb[0].mxu0
  %4474 = vmatprep.mubr.bf16.mxu0 %v4399
  %4475 = vmatmul.mubr.bf16.gmra.mrb[0].mxu0 %v4398
  %v4476 = vpop.f32.mrb[0].mxu0
  %v4477 = vadd.f32 %v4297, %v4476
  %v4478 = vpop.f32.mrb[0].mxu0
  %v4479 = vpop.f32.mrb[0].mxu0
  %v4480 = vadd.f32 %v4302, %v4479
  %v4481 = vpop.f32.mrb[0].mxu0
  %4482 = vmatprep.mubr.bf16.mxu0 %v4401
  %4483 = vmatmul.mubr.bf16.gmra.mrb[0].mxu0 %v4400
  %v4484 = vpop.f32.mrb[0].mxu0
  %v4485 = vadd.f32 %v4307, %v4484
  %v4486 = vpop.f32.mrb[0].mxu0
  %v4487 = vpop.f32.mrb[0].mxu0
  %v4488 = vadd.f32 %v4312, %v4487
  %v4489 = vpop.f32.mrb[0].mxu0
  %4490 = vmatprep.mubr.bf16.mxu0 %v4403
  %4491 = vmatmul.mubr.bf16.gmra.mrb[0].mxu0 %v4402
  %v4492 = vpop.f32.mrb[0].mxu0
  %v4493 = vadd.f32 %v4317, %v4492
  %v4494 = vpop.f32.mrb[0].mxu0
  %v4495 = vpop.f32.mrb[0].mxu0
  %v4496 = vadd.f32 %v4322, %v4495
  %v4497 = vpop.f32.mrb[0].mxu0
  %4498 = vmatprep.mubr.bf16.mxu0 %v4405
  %4499 = vmatmul.mubr.bf16.gmra.mrb[0].mxu0 %v4404
  %v4500 = vpop.f32.mrb[0].mxu0
  %v4501 = vadd.f32 %v4327, %v4500
  %v4502 = vpop.f32.mrb[0].mxu0
  %v4503 = vpop.f32.mrb[0].mxu0
  %v4504 = vadd.f32 %v4332, %v4503
  %v4505 = vpop.f32.mrb[0].mxu0
  %4506 = vmatprep.mubr.bf16.mxu0 %v4407
  %4507 = vmatmul.mubr.bf16.gmra.mrb[0].mxu0 %v4406
  %v4508 = vpop.f32.mrb[0].mxu0
  %v4509 = vadd.f32 %v4337, %v4508
  %v4510 = vpop.f32.mrb[0].mxu0
  %v4511 = vpop.f32.mrb[0].mxu0
  %v4512 = vadd.f32 %v4342, %v4511
  %v4513 = vpop.f32.mrb[0].mxu0
  %4514 = vmatprep.mubr.bf16.mxu0 %v4409
  %4515 = vmatmul.mubr.bf16.gmra.mrb[0].mxu0 %v4408
  %v4516 = vpop.f32.mrb[0].mxu0
  %v4517 = vadd.f32 %v4347, %v4516
  %v4518 = vpop.f32.mrb[0].mxu0
  %v4519 = vpop.f32.mrb[0].mxu0
  %v4520 = vpop.f32.mrb[0].mxu0
  %4521 = vdwg.mxu0
  %v4522 = vmax.f32 %v4461, 0.0
  %v4523 = vmax.f32 %v4464, 0.0
  %v4524 = vmax.f32 %v4469, 0.0
  %v4525 = vmax.f32 %v4472, 0.0
  %v4526 = vmax.f32 %v4477, 0.0
  %v4527 = vmax.f32 %v4480, 0.0
  %v4528 = vmax.f32 %v4485, 0.0
  %v4529 = vmax.f32 %v4488, 0.0
  %v4530 = vmax.f32 %v4493, 0.0
  %v4531 = vmax.f32 %v4496, 0.0
  %v4532 = vmax.f32 %v4501, 0.0
  %v4533 = vmax.f32 %v4504, 0.0
  %v4534 = vmax.f32 %v4509, 0.0
  %v4535 = vmax.f32 %v4512, 0.0
  %v4536 = vmax.f32 %v4517, 0.0
  %v4537 = vpack.c.bf16 %v4523, %v4522
  %v4538 = vpack.c.bf16 %v4525, %v4524
  %v4539 = vpack.c.bf16 %v4527, %v4526
  %v4540 = vpack.c.bf16 %v4529, %v4528
  %v4541 = vpack.c.bf16 %v4531, %v4530
  %v4542 = vpack.c.bf16 %v4533, %v4532
  %v4543 = vpack.c.bf16 %v4535, %v4534
  %v4544 = vpack.c.bf16 %v4536, %v4536
  %v4545 = vld [vmem:[%s11] sm:$0xf]
  %v4546 = vld [vmem:[%s11 + $0x4] sm:$0xf]
  %v4547 = vld [vmem:[%s11 + $0x8] sm:$0xf]
  %v4548 = vld [vmem:[%s11 + $0xc] sm:$0xf]
  %v4549 = vld [vmem:[%s11 + $0x10] sm:$0xf]
  %v4550 = vld [vmem:[%s11 + $0x14] sm:$0xf]
  %v4551 = vld [vmem:[%s11 + $0x18] sm:$0xf]
  %v4552 = vld [vmem:[%s11 + $0x1c] sm:$0xf]
  %v4553 = vld [vmem:[%s11 + $0x20] sm:$0xf]
  %v4554 = vld [vmem:[%s11 + $0x24] sm:$0xf]
  %v4555 = vld [vmem:[%s11 + $0x28] sm:$0x3]
  %v4556 = vld [vmem:[%s12] sm:$0xff]
  %v4557 = vld [vmem:[%s12 + $0x8] sm:$0xff]
  %v4558 = vld [vmem:[%s12 + $0x10] sm:$0xff]
  %v4559 = vld [vmem:[%s12 + $0x18] sm:$0xff]
  %v4560 = vld [vmem:[%s12 + $0x20] sm:$0xff]
  %v4561 = vld [vmem:[%s12 + $0x28] sm:$0xff]
  %v4562 = vld [vmem:[%s12 + $0x30] sm:$0xff]
  %v4563 = vld [vmem:[%s12 + $0x38] sm:$0xff]
  %v4564 = vld [vmem:[%s12 + $0x40] sm:$0xff]
  %v4565 = vld [vmem:[%s12 + $0x48] sm:$0xff]
  %v4566 = vld [vmem:[%s12 + $0x50] sm:$0xf]
  %4568 = vset.pattern.permute.xlu0 0
  %4569 = vperm.xlu0 %4568, %v4556
  %v4570 = vpop.permute.xlu0 %4569
  %4573 = vset.pattern.permute.xlu0 0
  %4574 = vperm.xlu0 %4573, %v4557
  %v4575 = vpop.permute.xlu0 %4574
  %4578 = vset.pattern.permute.xlu0 0
  %4579 = vperm.xlu0 %4578, %v4558
  %v4580 = vpop.permute.xlu0 %4579
  %4583 = vset.pattern.permute.xlu0 0
  %4584 = vperm.xlu0 %4583, %v4559
  %v4585 = vpop.permute.xlu0 %4584
  %4588 = vset.pattern.permute.xlu0 0
  %4589 = vperm.xlu0 %4588, %v4560
  %v4590 = vpop.permute.xlu0 %4589
  %4593 = vset.pattern.permute.xlu0 0
  %4594 = vperm.xlu0 %4593, %v4561
  %v4595 = vpop.permute.xlu0 %4594
  %4598 = vset.pattern.permute.xlu0 0
  %4599 = vperm.xlu0 %4598, %v4562
  %v4600 = vpop.permute.xlu0 %4599
  %4603 = vset.pattern.permute.xlu0 0
  %4604 = vperm.xlu0 %4603, %v4563
  %v4605 = vpop.permute.xlu0 %4604
  %4608 = vset.pattern.permute.xlu0 0
  %4609 = vperm.xlu0 %4608, %v4564
  %v4610 = vpop.permute.xlu0 %4609
  %4613 = vset.pattern.permute.xlu0 0
  %4614 = vperm.xlu0 %4613, %v4565
  %v4615 = vpop.permute.xlu0 %4614
  %4618 = vset.pattern.permute.xlu0 0
  %4619 = vperm.xlu0 %4618, %v4566
  %v4620 = vpop.permute.xlu0 %4619
  %v4633 = vunpack.c.l.b16 %v4545
  %v4634 = vunpack.c.l.b16 %v4546
  %v4635 = vunpack.c.l.b16 %v4547
  %v4636 = vunpack.c.l.b16 %v4548
  %v4637 = vunpack.c.l.b16 %v4549
  %v4638 = vunpack.c.l.b16 %v4550
  %v4639 = vunpack.c.l.b16 %v4551
  %v4640 = vunpack.c.l.b16 %v4552
  %v4641 = vunpack.c.l.b16 %v4553
  %v4642 = vunpack.c.l.b16 %v4554
  %v4643 = vunpack.c.l.b16 %v4555
  %v4644 = vpack.c.b16 %v4634, %v4633
  %v4645 = vpack.c.b16 %v4636, %v4635
  %v4646 = vpack.c.b16 %v4638, %v4637
  %v4647 = vpack.c.b16 %v4640, %v4639
  %v4648 = vpack.c.b16 %v4642, %v4641
  %v4649 = vpack.c.b16 %v4643, %v4643
  %vm4650 = vcmask 982016
  %v4652 = vsel %vm4650, %v4644, 0
  %v4655 = vsel %vm4650, %v4645, 0
  %v4658 = vsel %vm4650, %v4646, 0
  %v4661 = vsel %vm4650, %v4647, 0
  %v4664 = vsel %vm4650, %v4648, 0
  %v4667 = vsel %vm4650, %v4649, 0
  %vm4669 = vcmask 1043456
  %v4671 = vsel %vm4669, %v4544, 0
  %4673 = vmatprep.subr.bf16.mxu0 0
  %4674 = vmatpush1.bf16.msra.mxu0 %v4537
  %4675 = vmatprep.subr.bf16.mxu0 0
  %4676 = vmatpush1.bf16.msra.mxu0 %v4538
  %4677 = vmatprep.subr.bf16.mxu0 0
  %4678 = vmatpush1.bf16.msra.mxu0 %v4539
  %4679 = vmatprep.subr.bf16.mxu0 0
  %4680 = vmatpush1.bf16.msra.mxu0 %v4540
  %4681 = vmatprep.subr.bf16.mxu0 0
  %4682 = vmatpush1.bf16.msra.mxu0 %v4541
  %4683 = vmatprep.subr.bf16.mxu0 0
  %4684 = vmatpush1.bf16.msra.mxu0 %v4542
  %4685 = vmatprep.subr.bf16.mxu0 0
  %4686 = vmatpush1.bf16.msra.mxu0 %v4543
  %4687 = vmatprep.subr.bf16.mxu0 0
  %4688 = vmatpush1.bf16.msra.mxu0 %v4671
  %4689 = vmatprep.subr.bf16.mxu0 0
  %4690 = vmatpush1.bf16.msra.mxu0 0
  %4691 = vmatprep.subr.bf16.mxu0 0
  %4692 = vmatpush1.bf16.msra.mxu0 0
  %4693 = vmatprep.subr.bf16.mxu0 0
  %4694 = vmatpush1.bf16.msra.mxu0 0
  %4695 = vmatprep.subr.bf16.mxu0 0
  %4696 = vmatpush1.bf16.msra.mxu0 0
  %4697 = vmatprep.subr.bf16.mxu0 0
  %4698 = vmatpush1.bf16.msra.mxu0 0
  %4699 = vmatprep.subr.bf16.mxu0 0
  %4700 = vmatpush1.bf16.msra.mxu0 0
  %4701 = vmatprep.subr.bf16.mxu0 0
  %4702 = vmatpush1.bf16.msra.mxu0 0
  %4703 = vmatprep.subr.bf16.mxu0 0
  %4704 = vmatpush1.bf16.msra.mxu0 0
  %4705 = vmatprep.mubr.bf16.mxu0 0
  %4706 = vmatmul.mubr.bf16.gmra.mrb[0].mxu0 %v4652
  %v4707 = vpop.f32.mrb[0].mxu0
  %v4708 = vadd.f32 %v4570, %v4707
  %v4709 = vpop.f32.mrb[0].mxu0
  %v4710 = vpop.f32.mrb[0].mxu0
  %v4711 = vadd.f32 %v4575, %v4710
  %v4712 = vpop.f32.mrb[0].mxu0
  %4713 = vmatprep.mubr.bf16.mxu0 0
  %4714 = vmatmul.mubr.bf16.gmra.mrb[0].mxu0 %v4655
  %v4715 = vpop.f32.mrb[0].mxu0
  %v4716 = vadd.f32 %v4580, %v4715
  %v4717 = vpop.f32.mrb[0].mxu0
  %v4718 = vpop.f32.mrb[0].mxu0
  %v4719 = vadd.f32 %v4585, %v4718
  %v4720 = vpop.f32.mrb[0].mxu0
  %4721 = vmatprep.mubr.bf16.mxu0 0
  %4722 = vmatmul.mubr.bf16.gmra.mrb[0].mxu0 %v4658
  %v4723 = vpop.f32.mrb[0].mxu0
  %v4724 = vadd.f32 %v4590, %v4723
  %v4725 = vpop.f32.mrb[0].mxu0
  %v4726 = vpop.f32.mrb[0].mxu0
  %v4727 = vadd.f32 %v4595, %v4726
  %v4728 = vpop.f32.mrb[0].mxu0
  %4729 = vmatprep.mubr.bf16.mxu0 0
  %4730 = vmatmul.mubr.bf16.gmra.mrb[0].mxu0 %v4661
  %v4731 = vpop.f32.mrb[0].mxu0
  %v4732 = vadd.f32 %v4600, %v4731
  %v4733 = vpop.f32.mrb[0].mxu0
  %v4734 = vpop.f32.mrb[0].mxu0
  %v4735 = vadd.f32 %v4605, %v4734
  %v4736 = vpop.f32.mrb[0].mxu0
  %4737 = vmatprep.mubr.bf16.mxu0 0
  %4738 = vmatmul.mubr.bf16.gmra.mrb[0].mxu0 %v4664
  %v4739 = vpop.f32.mrb[0].mxu0
  %v4740 = vadd.f32 %v4610, %v4739
  %v4741 = vpop.f32.mrb[0].mxu0
  %v4742 = vpop.f32.mrb[0].mxu0
  %v4743 = vadd.f32 %v4615, %v4742
  %v4744 = vpop.f32.mrb[0].mxu0
  %4745 = vmatprep.mubr.bf16.mxu0 0
  %4746 = vmatmul.mubr.bf16.gmra.mrb[0].mxu0 %v4667
  %v4747 = vpop.f32.mrb[0].mxu0
  %v4748 = vadd.f32 %v4620, %v4747
  %v4749 = vpop.f32.mrb[0].mxu0
  %v4750 = vpop.f32.mrb[0].mxu0
  %v4751 = vpop.f32.mrb[0].mxu0
  %4752 = vdwg.mxu0
  %v4753 = vmax.f32 %v4708, 0.0
  %v4754 = vmax.f32 %v4711, 0.0
  %v4755 = vmax.f32 %v4716, 0.0
  %v4756 = vmax.f32 %v4719, 0.0
  %v4757 = vmax.f32 %v4724, 0.0
  %v4758 = vmax.f32 %v4727, 0.0
  %v4759 = vmax.f32 %v4732, 0.0
  %v4760 = vmax.f32 %v4735, 0.0
  %v4761 = vmax.f32 %v4740, 0.0
  %v4762 = vmax.f32 %v4743, 0.0
  %v4763 = vmax.f32 %v4748, 0.0
  %v4764 = vpack.c.bf16 %v4754, %v4753
  %v4765 = vpack.c.bf16 %v4756, %v4755
  %v4766 = vpack.c.bf16 %v4758, %v4757
  %v4767 = vpack.c.bf16 %v4760, %v4759
  %v4768 = vpack.c.bf16 %v4762, %v4761
  %v4769 = vpack.c.bf16 %v4763, %v4763
  %v4770 = vld [vmem:[%s13] sm:$0xf]
  %v4771 = vld [vmem:[%s13 + $0x4] sm:$0x1]
  %v4772 = vld [vmem:[%s14] sm:$0xff]
  %v4773 = vld [vmem:[%s14 + $0x8] sm:$0x3]
  %4775 = vset.pattern.permute.xlu0 0
  %4776 = vperm.xlu0 %4775, %v4772
  %v4777 = vpop.permute.xlu0 %4776
  %4780 = vset.pattern.permute.xlu0 0
  %4781 = vperm.xlu0 %4780, %v4773
  %v4782 = vpop.permute.xlu0 %4781
  %v4786 = vunpack.c.l.b16 %v4770
  %v4787 = vunpack.c.l.b16 %v4771
  %v4788 = vpack.c.b16 %v4787, %v4786
  %vm4789 = vcmask 687104
  %v4791 = vsel %vm4789, %v4788, 0
  %vm4793 = vcmask 1041408
  %v4795 = vsel %vm4793, %v4769, 0
  %4797 = vmatprep.subr.bf16.mxu0 0
  %4798 = vmatpush1.bf16.msra.mxu0 %v4764
  %4799 = vmatprep.subr.bf16.mxu0 0
  %4800 = vmatpush1.bf16.msra.mxu0 %v4765
  %4801 = vmatprep.subr.bf16.mxu0 0
  %4802 = vmatpush1.bf16.msra.mxu0 %v4766
  %4803 = vmatprep.subr.bf16.mxu0 0
  %4804 = vmatpush1.bf16.msra.mxu0 %v4767
  %4805 = vmatprep.subr.bf16.mxu0 0
  %4806 = vmatpush1.bf16.msra.mxu0 %v4768
  %4807 = vmatprep.subr.bf16.mxu0 0
  %4808 = vmatpush1.bf16.msra.mxu0 %v4795
  %4809 = vmatprep.subr.bf16.mxu0 0
  %4810 = vmatpush1.bf16.msra.mxu0 0
  %4811 = vmatprep.subr.bf16.mxu0 0
  %4812 = vmatpush1.bf16.msra.mxu0 0
  %4813 = vmatprep.subr.bf16.mxu0 0
  %4814 = vmatpush1.bf16.msra.mxu0 0
  %4815 = vmatprep.subr.bf16.mxu0 0
  %4816 = vmatpush1.bf16.msra.mxu0 0
  %4817 = vmatprep.subr.bf16.mxu0 0
  %4818 = vmatpush1.bf16.msra.mxu0 0
  %4819 = vmatprep.subr.bf16.mxu0 0
  %4820 = vmatpush1.bf16.msra.mxu0 0
  %4821 = vmatprep.subr.bf16.mxu0 0
  %4822 = vmatpush1.bf16.msra.mxu0 0
  %4823 = vmatprep.subr.bf16.mxu0 0
  %4824 = vmatpush1.bf16.msra.mxu0 0
  %4825 = vmatprep.subr.bf16.mxu0 0
  %4826 = vmatpush1.bf16.msra.mxu0 0
  %4827 = vmatprep.subr.bf16.mxu0 0
  %4828 = vmatpush1.bf16.msra.mxu0 0
  %4829 = vmatprep.mubr.bf16.mxu0 0
  %4830 = vmatmul.mubr.bf16.gmra.mrb[0].mxu0 %v4791
  %v4831 = vpop.f32.mrb[0].mxu0
  %v4832 = vadd.f32 %v4777, %v4831
  %v4833 = vpop.f32.mrb[0].mxu0
  %v4834 = vpop.f32.mrb[0].mxu0
  %v4835 = vadd.f32 %v4782, %v4834
  %v4836 = vpop.f32.mrb[0].mxu0
  %4837 = vdwg.mxu0
  %4838 = vst.msk [vmem:[%s15] sm:$0xff] %vm2372, %v4832
  %vm4839 = vcmask 9216
  %4840 = vst.msk [vmem:[%s15 + $0x8] sm:$0x3] %vm4839, %v4835
  // Predicated region
  $region69: #{lenet_forward.1} parent=0 // pred_check
    _
  $region70: #{lenet_forward.1} parent=0 // pred_check_branch
    %4842 = sbr.rel (0) target = $region72
  $region71: #{lenet_forward.1} parent=0 // pred_region
    _
  $region72: #{lenet_forward.1} parent=0 // pred_fallthru
    _
  // Predicated region
  $region73: #{lenet_forward.1} parent=0 // pred_check
    _
  $region74: #{lenet_forward.1} parent=0 // pred_check_branch
    %4844 = sbr.rel (0) target = $region76
  $region75: #{lenet_forward.1} parent=0 // pred_region
    _
  $region76: #{lenet_forward.1} parent=0 // pred_fallthru
    _

</llo_original>
